<compile_context>
chip_gen: v7x
topology: tpu7x:2x2x1
jax: 0.10.0
libtpu: 0.0.40
codegen_flags: <defaults>
</compile_context>

<pallas_src>
import jax
import jax.numpy as jnp
import numpy as np
from jax.experimental import pallas as pl
from jax.experimental.pallas import tpu as pltpu

H1_RAW, H2, H3 = 786, 512, 256


def _round_up(x, m):
    return (x + m - 1) // m * m


def _default_h1_pad():
    """256-aligned hidden pad on 256x256-MXU chips (v6e/v7x), 128-aligned otherwise."""
    try:
        kind = jax.devices()[0].device_kind.lower()
    except Exception:
        kind = ""
    if "v6" in kind or "v7" in kind:
        return 1024
    return _round_up(H1_RAW, 128)  # 896


# ---------------------------------------------------------------------------
# Kernel
# ---------------------------------------------------------------------------
def encoder_kernel(alpha_ref,                      # SMEM (3,)  PReLU slopes (f32)
                   x_ref,                          # VMEM (TM, in_p)   bf16
                   w1_ref, b1_ref,                 # (in_p, h1_p) bf16, (1, h1_p) f32
                   w2_ref, b2_ref,                 # (h1_p, 512)  bf16, (1, 512)  f32
                   w3_ref, b3_ref,                 # (512, 256)   bf16, (1, 256)  f32
                   w4_ref, b4_ref,                 # (256, out_p) bf16, (1, out_p) f32
                   o_ref):                         # VMEM (TM, out_p)
    a1 = alpha_ref[0]
    a2 = alpha_ref[1]
    a3 = alpha_ref[2]
    b1 = b1_ref[...]
    b2 = b2_ref[...]
    b3 = b3_ref[...]
    b4 = b4_ref[...]

    def prelu(h, a):
        # PReLU with a single learnable slope (PyTorch default num_parameters=1)
        return jnp.where(h > 0, h, a * h)

    cd = w1_ref.dtype  # bf16 fed to the MXU; accumulation / bias / PReLU in f32

    h = jnp.dot(x_ref[...], w1_ref[...], preferred_element_type=jnp.float32) + b1
    h = prelu(h, a1).astype(cd)
    h = jnp.dot(h, w2_ref[...], preferred_element_type=jnp.float32) + b2
    h = prelu(h, a2).astype(cd)
    h = jnp.dot(h, w3_ref[...], preferred_element_type=jnp.float32) + b3
    h = prelu(h, a3).astype(cd)
    h = jnp.dot(h, w4_ref[...], preferred_element_type=jnp.float32) + b4
    o_ref[...] = h.astype(o_ref.dtype)


# ---------------------------------------------------------------------------
# One-time parameter preparation (padding + dtype cast hoisted out of forward)
# ---------------------------------------------------------------------------
def prepare_encoder_params(params, *, compute_dtype=jnp.bfloat16, h1_pad=None):
    f32 = jnp.float32
    cd = compute_dtype
    in_dim = params["w1"].shape[0]
    out_dim = params["w4"].shape[1]
    in_p = _round_up(in_dim, 128)
    h1_p = int(h1_pad) if h1_pad is not None else _default_h1_pad()
    out_p = _round_up(out_dim, 128)

    prep = {"in_dim": in_dim, "out_dim": out_dim,
            "in_p": in_p, "h1_p": h1_p, "out_p": out_p}
    prep["w1"] = jnp.zeros((in_p, h1_p), cd).at[:in_dim, :H1_RAW].set(
        params["w1"].astype(cd))
    prep["b1"] = jnp.zeros((1, h1_p), f32).at[:, :H1_RAW].set(
        params["b1"].astype(f32))
    prep["w2"] = jnp.zeros((h1_p, H2), cd).at[:H1_RAW, :].set(
        params["w2"].astype(cd))
    prep["b2"] = params["b2"].astype(f32)
    prep["w3"] = params["w3"].astype(cd)
    prep["b3"] = params["b3"].astype(f32)
    prep["w4"] = jnp.zeros((H3, out_p), cd).at[:, :out_dim].set(
        params["w4"].astype(cd))
    prep["b4"] = jnp.zeros((1, out_p), f32).at[:, :out_dim].set(
        params["b4"].astype(f32))
    prep["alphas"] = params["alphas"].astype(f32)
    return jax.tree_util.tree_map(
        lambda a: a, prep)  # keep as a plain dict (arrays already materialized)


# ---------------------------------------------------------------------------
# Forward
# ---------------------------------------------------------------------------
def _resident_spec(shape, single_buffer):
    """Constant block index -> loaded once, stays resident in VMEM."""
    idx = lambda i, _n=len(shape): (0,) * _n
    if single_buffer:
        try:
            return pl.BlockSpec(shape, idx, pipeline_mode=pl.Buffered(1))
        except Exception:
            pass
    return pl.BlockSpec(shape, idx)


def _encoder_forward_impl(x, prep, *, tm_max, out_dtype, single_buffer_weights):
    B, in_dim = x.shape
    assert in_dim == prep["in_dim"]
    in_p, h1_p, out_p = prep["in_p"], prep["h1_p"], prep["out_p"]
    out_dim = prep["out_dim"]
    cd = prep["w1"].dtype

    # Balanced batch tiles; >=2 tiles for mid-size batches so the "parallel"
    # grid axis can feed both TensorCores on v7x.
    n_tiles = int(pl.cdiv(B, tm_max))
    if n_tiles == 1 and B >= 16:
        n_tiles = 2
    tm = _round_up(int(pl.cdiv(B, n_tiles)), 8)
    b_p = n_tiles * tm

    # Only the batch input is padded per call (weights were prepared once).
    xp = jnp.zeros((b_p, in_p), cd).at[:B, :in_dim].set(x.astype(cd))

    weights = (prep["w1"], prep["b1"], prep["w2"], prep["b2"],
               prep["w3"], prep["b3"], prep["w4"], prep["b4"])

    # VMEM budget: resident weights (1 or 2 buffers) + double-buffered x/out
    # tiles + f32 intermediates, with headroom; never below the 32 MiB default.
    nbuf = 1 if single_buffer_weights else 2
    weight_bytes = sum(int(a.size) * a.dtype.itemsize for a in weights)
    out_itemsize = np.dtype(out_dtype).itemsize
    io_bytes = 2 * (tm * in_p * xp.dtype.itemsize + tm * out_p * out_itemsize)
    act_bytes = 2 * tm * (h1_p + H2 + H3 + out_p) * 4
    vmem_limit = max(int(1.5 * (nbuf * weight_bytes + io_bytes + act_bytes))
                     + (4 << 20), 32 << 20)
    vmem_limit = min(vmem_limit, 100 << 20)

    flops = 2 * b_p * (in_p * h1_p + h1_p * H2 + H2 * H3 + H3 * out_p)
    bytes_accessed = (xp.size * xp.dtype.itemsize + weight_bytes
                      + b_p * out_p * out_itemsize)

    out = pl.pallas_call(
        encoder_kernel,
        out_shape=jax.ShapeDtypeStruct((b_p, out_p), out_dtype),
        grid=(n_tiles,),
        in_specs=[
            pl.BlockSpec(memory_space=pltpu.MemorySpace.SMEM),     # alphas
            pl.BlockSpec((tm, in_p), lambda i: (i, 0)),            # x batch tile
            _resident_spec((in_p, h1_p), single_buffer_weights),   # w1
            _resident_spec((1, h1_p), single_buffer_weights),      # b1
            _resident_spec((h1_p, H2), single_buffer_weights),     # w2
            _resident_spec((1, H2), single_buffer_weights),        # b2
            _resident_spec((H2, H3), single_buffer_weights),       # w3
            _resident_spec((1, H3), single_buffer_weights),        # b3
            _resident_spec((H3, out_p), single_buffer_weights),    # w4
            _resident_spec((1, out_p), single_buffer_weights),     # b4
        ],
        out_specs=pl.BlockSpec((tm, out_p), lambda i: (i, 0)),
        compiler_params=pltpu.CompilerParams(
            dimension_semantics=("parallel",),
            vmem_limit_bytes=vmem_limit),
        cost_estimate=pl.CostEstimate(
            flops=flops, transcendentals=0, bytes_accessed=bytes_accessed),
    )(prep["alphas"], xp, *weights)

    return out[:B, :out_dim]


def encoder_forward(x, prep, *, tm_max=1024, out_dtype=jnp.float32):
    """x: (B, input_size) f32. prep: output of prepare_encoder_params()."""
    try:
        return _encoder_forward_impl(x, prep, tm_max=tm_max, out_dtype=out_dtype,
                                     single_buffer_weights=True)
    except Exception:
        # Fallback if single-buffered resident blocks are rejected by this
        # Pallas version: identical kernel with default (double) buffering.
        return _encoder_forward_impl(x, prep, tm_max=tm_max, out_dtype=out_dtype,
                                     single_buffer_weights=False)


# ---------------------------------------------------------------------------
# Init + pure-JAX reference (emulating the kernel's bf16-MXU / f32-accum numerics)
# ---------------------------------------------------------------------------
def init_params(key, input_size, output_size):
    dims = [(input_size, 786), (786, 512), (512, 256), (256, output_size)]
    params = {}
    for idx, (fan_in, fan_out) in enumerate(dims, start=1):
        key, kw, kb = jax.random.split(key, 3)
        bound = 1.0 / np.sqrt(fan_in)
        params[f"w{idx}"] = jax.random.uniform(
            kw, (fan_in, fan_out), jnp.float32, -bound, bound)
        params[f"b{idx}"] = jax.random.uniform(
            kb, (1, fan_out), jnp.float32, -bound, bound)
    params["alphas"] = jnp.full((3,), 0.25, dtype=jnp.float32)  # PReLU default
    return params


def encoder_reference(x, params, compute_dtype=jnp.bfloat16):
    def prelu(h, a):
        return jnp.where(h > 0, h, a * h)
    cd = compute_dtype
    a = params["alphas"]
    h = jnp.dot(x.astype(cd), params["w1"].astype(cd),
                preferred_element_type=jnp.float32) + params["b1"]
    h = prelu(h, a[0])
    h = jnp.dot(h.astype(cd), params["w2"].astype(cd),
                preferred_element_type=jnp.float32) + params["b2"]
    h = prelu(h, a[1])
    h = jnp.dot(h.astype(cd), params["w3"].astype(cd),
                preferred_element_type=jnp.float32) + params["b3"]
    h = prelu(h, a[2])
    h = jnp.dot(h.astype(cd), params["w4"].astype(cd),
                preferred_element_type=jnp.float32) + params["b4"]
    return h


if __name__ == "__main__":
    B, input_size, output_size = 8, 32, 16

    key = jax.random.PRNGKey(0)
    key, kx = jax.random.split(key)
    x = jax.random.normal(kx, (B, input_size), jnp.float32)

    params = init_params(key, input_size, output_size)
    prep = prepare_encoder_params(params)          # one-time padded/bf16 weights

    out = encoder_forward(x, prep)
    out = jax.block_until_ready(out)

    ref = encoder_reference(x, params)
    assert out.shape == (B, output_size)
    np.testing.assert_allclose(np.asarray(out), np.asarray(ref),
                               rtol=2e-3, atol=2e-3)
    print("KERNEL_OK")
</pallas_src>

<mosaic_0001>
module attributes {stable_mosaic.version = 11 : i64} {
  func.func @encoder_kernel(%arg0: i32, %arg1: memref<3xf32, #tpu.memory_space<smem>>, %arg2: memref<8x128xbf16, #tpu.memory_space<vmem>>, %arg3: memref<128x896xbf16, #tpu.memory_space<vmem>>, %arg4: memref<1x896xf32, #tpu.memory_space<vmem>>, %arg5: memref<896x512xbf16, #tpu.memory_space<vmem>>, %arg6: memref<1x512xf32, #tpu.memory_space<vmem>>, %arg7: memref<512x256xbf16, #tpu.memory_space<vmem>>, %arg8: memref<1x256xf32, #tpu.memory_space<vmem>>, %arg9: memref<256x128xbf16, #tpu.memory_space<vmem>>, %arg10: memref<1x128xf32, #tpu.memory_space<vmem>>, %arg11: memref<8x128xf32, #tpu.memory_space<vmem>>) attributes {dimension_semantics = [#tpu.dimension_semantics<parallel>], iteration_bounds = array<i64: 1>, scalar_prefetch = 0 : i64, scratch_operands = 0 : i64, tpu.core_type = #tpu.core_type<tc>, window_params = [{transform_indices = @transform_0, window_bounds = array<i64: 3>}, {transform_indices = @transform_1, window_bounds = array<i64: 8, 128>}, {pipeline_mode = #tpu.pipeline_mode<synchronous>, transform_indices = @transform_2, window_bounds = array<i64: 128, 896>}, {pipeline_mode = #tpu.pipeline_mode<synchronous>, transform_indices = @transform_3, window_bounds = array<i64: 1, 896>}, {pipeline_mode = #tpu.pipeline_mode<synchronous>, transform_indices = @transform_4, window_bounds = array<i64: 896, 512>}, {pipeline_mode = #tpu.pipeline_mode<synchronous>, transform_indices = @transform_5, window_bounds = array<i64: 1, 512>}, {pipeline_mode = #tpu.pipeline_mode<synchronous>, transform_indices = @transform_6, window_bounds = array<i64: 512, 256>}, {pipeline_mode = #tpu.pipeline_mode<synchronous>, transform_indices = @transform_7, window_bounds = array<i64: 1, 256>}, {pipeline_mode = #tpu.pipeline_mode<synchronous>, transform_indices = @transform_8, window_bounds = array<i64: 256, 128>}, {pipeline_mode = #tpu.pipeline_mode<synchronous>, transform_indices = @transform_9, window_bounds = array<i64: 1, 128>}, {transform_indices = @transform_10, window_bounds = array<i64: 8, 128>}]} {
    %c0 = arith.constant 0 : index
    %0 = memref.load %arg1[%c0] : memref<3xf32, #tpu.memory_space<smem>>
    %c1 = arith.constant 1 : index
    %1 = memref.load %arg1[%c1] : memref<3xf32, #tpu.memory_space<smem>>
    %c2 = arith.constant 2 : index
    %2 = memref.load %arg1[%c2] : memref<3xf32, #tpu.memory_space<smem>>
    %c0_0 = arith.constant 0 : index
    %c0_1 = arith.constant 0 : index
    %3 = vector.load %arg4[%c0_0, %c0_1] : memref<1x896xf32, #tpu.memory_space<vmem>>, vector<1x896xf32>
    %c0_2 = arith.constant 0 : index
    %c0_3 = arith.constant 0 : index
    %4 = vector.load %arg6[%c0_2, %c0_3] : memref<1x512xf32, #tpu.memory_space<vmem>>, vector<1x512xf32>
    %c0_4 = arith.constant 0 : index
    %c0_5 = arith.constant 0 : index
    %5 = vector.load %arg8[%c0_4, %c0_5] : memref<1x256xf32, #tpu.memory_space<vmem>>, vector<1x256xf32>
    %c0_6 = arith.constant 0 : index
    %c0_7 = arith.constant 0 : index
    %6 = vector.load %arg10[%c0_6, %c0_7] : memref<1x128xf32, #tpu.memory_space<vmem>>, vector<1x128xf32>
    %c0_8 = arith.constant 0 : index
    %c0_9 = arith.constant 0 : index
    %7 = vector.load %arg2[%c0_8, %c0_9] : memref<8x128xbf16, #tpu.memory_space<vmem>>, vector<8x128xbf16>
    %c0_10 = arith.constant 0 : index
    %c0_11 = arith.constant 0 : index
    %8 = vector.load %arg3[%c0_10, %c0_11] : memref<128x896xbf16, #tpu.memory_space<vmem>>, vector<128x896xbf16>
    %cst = arith.constant dense<0.000000e+00> : vector<8x896xf32>
    %9 = tpu.matmul %7, %8, %cst {dimension_numbers = #tpu.dot_dimension_numbers<[1], [0], [0], [1], [0, 0, 1, 1], [], []>} : vector<8x128xbf16>, vector<128x896xbf16>, vector<8x896xf32> -> vector<8x896xf32>
    %10 = vector.broadcast %3 : vector<1x896xf32> to vector<8x896xf32>
    %11 = arith.addf %9, %10 : vector<8x896xf32>
    %cst_12 = arith.constant 0.000000e+00 : f32
    %12 = vector.broadcast %cst_12 : f32 to vector<8x896xf32>
    %13 = arith.cmpf ogt, %11, %12 : vector<8x896xf32>
    %14 = vector.broadcast %0 : f32 to vector<8x896xf32>
    %15 = arith.mulf %14, %11 : vector<8x896xf32>
    %16 = arith.select %13, %11, %15 : vector<8x896xi1>, vector<8x896xf32>
    %17 = arith.truncf %16 : vector<8x896xf32> to vector<8x896xbf16>
    %c0_13 = arith.constant 0 : index
    %c0_14 = arith.constant 0 : index
    %18 = vector.load %arg5[%c0_13, %c0_14] : memref<896x512xbf16, #tpu.memory_space<vmem>>, vector<896x512xbf16>
    %cst_15 = arith.constant dense<0.000000e+00> : vector<8x512xf32>
    %19 = tpu.matmul %17, %18, %cst_15 {dimension_numbers = #tpu.dot_dimension_numbers<[1], [0], [0], [1], [0, 0, 1, 1], [], []>} : vector<8x896xbf16>, vector<896x512xbf16>, vector<8x512xf32> -> vector<8x512xf32>
    %20 = vector.broadcast %4 : vector<1x512xf32> to vector<8x512xf32>
    %21 = arith.addf %19, %20 : vector<8x512xf32>
    %cst_16 = arith.constant 0.000000e+00 : f32
    %22 = vector.broadcast %cst_16 : f32 to vector<8x512xf32>
    %23 = arith.cmpf ogt, %21, %22 : vector<8x512xf32>
    %24 = vector.broadcast %1 : f32 to vector<8x512xf32>
    %25 = arith.mulf %24, %21 : vector<8x512xf32>
    %26 = arith.select %23, %21, %25 : vector<8x512xi1>, vector<8x512xf32>
    %27 = arith.truncf %26 : vector<8x512xf32> to vector<8x512xbf16>
    %c0_17 = arith.constant 0 : index
    %c0_18 = arith.constant 0 : index
    %28 = vector.load %arg7[%c0_17, %c0_18] : memref<512x256xbf16, #tpu.memory_space<vmem>>, vector<512x256xbf16>
    %cst_19 = arith.constant dense<0.000000e+00> : vector<8x256xf32>
    %29 = tpu.matmul %27, %28, %cst_19 {dimension_numbers = #tpu.dot_dimension_numbers<[1], [0], [0], [1], [0, 0, 1, 1], [], []>} : vector<8x512xbf16>, vector<512x256xbf16>, vector<8x256xf32> -> vector<8x256xf32>
    %30 = vector.broadcast %5 : vector<1x256xf32> to vector<8x256xf32>
    %31 = arith.addf %29, %30 : vector<8x256xf32>
    %cst_20 = arith.constant 0.000000e+00 : f32
    %32 = vector.broadcast %cst_20 : f32 to vector<8x256xf32>
    %33 = arith.cmpf ogt, %31, %32 : vector<8x256xf32>
    %34 = vector.broadcast %2 : f32 to vector<8x256xf32>
    %35 = arith.mulf %34, %31 : vector<8x256xf32>
    %36 = arith.select %33, %31, %35 : vector<8x256xi1>, vector<8x256xf32>
    %37 = arith.truncf %36 : vector<8x256xf32> to vector<8x256xbf16>
    %c0_21 = arith.constant 0 : index
    %c0_22 = arith.constant 0 : index
    %38 = vector.load %arg9[%c0_21, %c0_22] : memref<256x128xbf16, #tpu.memory_space<vmem>>, vector<256x128xbf16>
    %cst_23 = arith.constant dense<0.000000e+00> : vector<8x128xf32>
    %39 = tpu.matmul %37, %38, %cst_23 {dimension_numbers = #tpu.dot_dimension_numbers<[1], [0], [0], [1], [0, 0, 1, 1], [], []>} : vector<8x256xbf16>, vector<256x128xbf16>, vector<8x128xf32> -> vector<8x128xf32>
    %40 = vector.broadcast %6 : vector<1x128xf32> to vector<8x128xf32>
    %41 = arith.addf %39, %40 : vector<8x128xf32>
    %c0_24 = arith.constant 0 : index
    %c0_25 = arith.constant 0 : index
    %42 = vector.load %arg11[%c0_24, %c0_25] : memref<8x128xf32, #tpu.memory_space<vmem>>, vector<8x128xf32>
    tpu.vector_store %arg11[%c0_24, %c0_25], %41 {strides = array<i32>} : memref<8x128xf32, #tpu.memory_space<vmem>>, vector<8x128xf32>,
    return
  }
  func.func @transform_0(%arg0: i32) -> i32 {
    %c0_i32 = arith.constant 0 : i32
    %c0_i32_0 = arith.constant 0 : i32
    return %c0_i32 : i32
  }
  func.func @transform_1(%arg0: i32) -> (i32, i32) {
    %c0_i32 = arith.constant 0 : i32
    %c0_i32_0 = arith.constant 0 : i32
    return %arg0, %c0_i32 : i32, i32
  }
  func.func @transform_2(%arg0: i32) -> (i32, i32) {
    %c0_i32 = arith.constant 0 : i32
    %c0_i32_0 = arith.constant 0 : i32
    %c0_i32_1 = arith.constant 0 : i32
    return %c0_i32, %c0_i32_0 : i32, i32
  }
  func.func @transform_3(%arg0: i32) -> (i32, i32) {
    %c0_i32 = arith.constant 0 : i32
    %c0_i32_0 = arith.constant 0 : i32
    %c0_i32_1 = arith.constant 0 : i32
    return %c0_i32, %c0_i32_0 : i32, i32
  }
  func.func @transform_4(%arg0: i32) -> (i32, i32) {
    %c0_i32 = arith.constant 0 : i32
    %c0_i32_0 = arith.constant 0 : i32
    %c0_i32_1 = arith.constant 0 : i32
    return %c0_i32, %c0_i32_0 : i32, i32
  }
  func.func @transform_5(%arg0: i32) -> (i32, i32) {
    %c0_i32 = arith.constant 0 : i32
    %c0_i32_0 = arith.constant 0 : i32
    %c0_i32_1 = arith.constant 0 : i32
    return %c0_i32, %c0_i32_0 : i32, i32
  }
  func.func @transform_6(%arg0: i32) -> (i32, i32) {
    %c0_i32 = arith.constant 0 : i32
    %c0_i32_0 = arith.constant 0 : i32
    %c0_i32_1 = arith.constant 0 : i32
    return %c0_i32, %c0_i32_0 : i32, i32
  }
  func.func @transform_7(%arg0: i32) -> (i32, i32) {
    %c0_i32 = arith.constant 0 : i32
    %c0_i32_0 = arith.constant 0 : i32
    %c0_i32_1 = arith.constant 0 : i32
    return %c0_i32, %c0_i32_0 : i32, i32
  }
  func.func @transform_8(%arg0: i32) -> (i32, i32) {
    %c0_i32 = arith.constant 0 : i32
    %c0_i32_0 = arith.constant 0 : i32
    %c0_i32_1 = arith.constant 0 : i32
    return %c0_i32, %c0_i32_0 : i32, i32
  }
  func.func @transform_9(%arg0: i32) -> (i32, i32) {
    %c0_i32 = arith.constant 0 : i32
    %c0_i32_0 = arith.constant 0 : i32
    %c0_i32_1 = arith.constant 0 : i32
    return %c0_i32, %c0_i32_0 : i32, i32
  }
  func.func @transform_10(%arg0: i32) -> (i32, i32) {
    %c0_i32 = arith.constant 0 : i32
    %c0_i32_0 = arith.constant 0 : i32
    return %arg0, %c0_i32 : i32, i32
  }
}

module attributes {stable_mosaic.version = 11 : i64} {
  func.func @encoder_kernel(%arg0: i32, %arg1: memref<3xf32, #tpu.memory_space<smem>>, %arg2: memref<8x128xbf16, #tpu.memory_space<vmem>>, %arg3: memref<128x896xbf16, #tpu.memory_space<vmem>>, %arg4: memref<1x896xf32, #tpu.memory_space<vmem>>, %arg5: memref<896x512xbf16, #tpu.memory_space<vmem>>, %arg6: memref<1x512xf32, #tpu.memory_space<vmem>>, %arg7: memref<512x256xbf16, #tpu.memory_space<vmem>>, %arg8: memref<1x256xf32, #tpu.memory_space<vmem>>, %arg9: memref<256x128xbf16, #tpu.memory_space<vmem>>, %arg10: memref<1x128xf32, #tpu.memory_space<vmem>>, %arg11: memref<8x128xf32, #tpu.memory_space<vmem>>) attributes {dimension_semantics = [#tpu.dimension_semantics<parallel>], iteration_bounds = array<i64: 1>, scalar_prefetch = 0 : i64, scratch_operands = 0 : i64, tpu.core_type = #tpu.core_type<tc>, window_params = [{transform_indices = @transform_0, window_bounds = array<i64: 3>}, {transform_indices = @transform_1, window_bounds = array<i64: 8, 128>}, {pipeline_mode = #tpu.pipeline_mode<synchronous>, transform_indices = @transform_2, window_bounds = array<i64: 128, 896>}, {pipeline_mode = #tpu.pipeline_mode<synchronous>, transform_indices = @transform_3, window_bounds = array<i64: 1, 896>}, {pipeline_mode = #tpu.pipeline_mode<synchronous>, transform_indices = @transform_4, window_bounds = array<i64: 896, 512>}, {pipeline_mode = #tpu.pipeline_mode<synchronous>, transform_indices = @transform_5, window_bounds = array<i64: 1, 512>}, {pipeline_mode = #tpu.pipeline_mode<synchronous>, transform_indices = @transform_6, window_bounds = array<i64: 512, 256>}, {pipeline_mode = #tpu.pipeline_mode<synchronous>, transform_indices = @transform_7, window_bounds = array<i64: 1, 256>}, {pipeline_mode = #tpu.pipeline_mode<synchronous>, transform_indices = @transform_8, window_bounds = array<i64: 256, 128>}, {pipeline_mode = #tpu.pipeline_mode<synchronous>, transform_indices = @transform_9, window_bounds = array<i64: 1, 128>}, {transform_indices = @transform_10, window_bounds = array<i64: 8, 128>}]} {
    %c0 = arith.constant 0 : index
    %0 = memref.load %arg1[%c0] : memref<3xf32, #tpu.memory_space<smem>>
    %c1 = arith.constant 1 : index
    %1 = memref.load %arg1[%c1] : memref<3xf32, #tpu.memory_space<smem>>
    %c2 = arith.constant 2 : index
    %2 = memref.load %arg1[%c2] : memref<3xf32, #tpu.memory_space<smem>>
    %c0_0 = arith.constant 0 : index
    %c0_1 = arith.constant 0 : index
    %3 = vector.load %arg4[%c0_0, %c0_1] : memref<1x896xf32, #tpu.memory_space<vmem>>, vector<1x896xf32>
    %c0_2 = arith.constant 0 : index
    %c0_3 = arith.constant 0 : index
    %4 = vector.load %arg6[%c0_2, %c0_3] : memref<1x512xf32, #tpu.memory_space<vmem>>, vector<1x512xf32>
    %c0_4 = arith.constant 0 : index
    %c0_5 = arith.constant 0 : index
    %5 = vector.load %arg8[%c0_4, %c0_5] : memref<1x256xf32, #tpu.memory_space<vmem>>, vector<1x256xf32>
    %c0_6 = arith.constant 0 : index
    %c0_7 = arith.constant 0 : index
    %6 = vector.load %arg10[%c0_6, %c0_7] : memref<1x128xf32, #tpu.memory_space<vmem>>, vector<1x128xf32>
    %c0_8 = arith.constant 0 : index
    %c0_9 = arith.constant 0 : index
    %7 = vector.load %arg2[%c0_8, %c0_9] : memref<8x128xbf16, #tpu.memory_space<vmem>>, vector<8x128xbf16>
    %c0_10 = arith.constant 0 : index
    %c0_11 = arith.constant 0 : index
    %8 = vector.load %arg3[%c0_10, %c0_11] : memref<128x896xbf16, #tpu.memory_space<vmem>>, vector<128x896xbf16>
    %cst = arith.constant dense<0.000000e+00> : vector<8x896xf32>
    %9 = tpu.matmul %7, %8, %cst {dimension_numbers = #tpu.dot_dimension_numbers<[1], [0], [0], [1], [0, 0, 1, 1], [], []>} : vector<8x128xbf16>, vector<128x896xbf16>, vector<8x896xf32> -> vector<8x896xf32>
    %10 = vector.broadcast %3 : vector<1x896xf32> to vector<8x896xf32>
    %11 = arith.addf %9, %10 : vector<8x896xf32>
    %cst_12 = arith.constant 0.000000e+00 : f32
    %12 = vector.broadcast %cst_12 : f32 to vector<8x896xf32>
    %13 = arith.cmpf ogt, %11, %12 : vector<8x896xf32>
    %14 = vector.broadcast %0 : f32 to vector<8x896xf32>
    %15 = arith.mulf %14, %11 : vector<8x896xf32>
    %16 = arith.select %13, %11, %15 : vector<8x896xi1>, vector<8x896xf32>
    %17 = arith.truncf %16 : vector<8x896xf32> to vector<8x896xbf16>
    %c0_13 = arith.constant 0 : index
    %c0_14 = arith.constant 0 : index
    %18 = vector.load %arg5[%c0_13, %c0_14] : memref<896x512xbf16, #tpu.memory_space<vmem>>, vector<896x512xbf16>
    %cst_15 = arith.constant dense<0.000000e+00> : vector<8x512xf32>
    %19 = tpu.matmul %17, %18, %cst_15 {dimension_numbers = #tpu.dot_dimension_numbers<[1], [0], [0], [1], [0, 0, 1, 1], [], []>} : vector<8x896xbf16>, vector<896x512xbf16>, vector<8x512xf32> -> vector<8x512xf32>
    %20 = vector.broadcast %4 : vector<1x512xf32> to vector<8x512xf32>
    %21 = arith.addf %19, %20 : vector<8x512xf32>
    %cst_16 = arith.constant 0.000000e+00 : f32
    %22 = vector.broadcast %cst_16 : f32 to vector<8x512xf32>
    %23 = arith.cmpf ogt, %21, %22 : vector<8x512xf32>
    %24 = vector.broadcast %1 : f32 to vector<8x512xf32>
    %25 = arith.mulf %24, %21 : vector<8x512xf32>
    %26 = arith.select %23, %21, %25 : vector<8x512xi1>, vector<8x512xf32>
    %27 = arith.truncf %26 : vector<8x512xf32> to vector<8x512xbf16>
    %c0_17 = arith.constant 0 : index
    %c0_18 = arith.constant 0 : index
    %28 = vector.load %arg7[%c0_17, %c0_18] : memref<512x256xbf16, #tpu.memory_space<vmem>>, vector<512x256xbf16>
    %cst_19 = arith.constant dense<0.000000e+00> : vector<8x256xf32>
    %29 = tpu.matmul %27, %28, %cst_19 {dimension_numbers = #tpu.dot_dimension_numbers<[1], [0], [0], [1], [0, 0, 1, 1], [], []>} : vector<8x512xbf16>, vector<512x256xbf16>, vector<8x256xf32> -> vector<8x256xf32>
    %30 = vector.broadcast %5 : vector<1x256xf32> to vector<8x256xf32>
    %31 = arith.addf %29, %30 : vector<8x256xf32>
    %cst_20 = arith.constant 0.000000e+00 : f32
    %32 = vector.broadcast %cst_20 : f32 to vector<8x256xf32>
    %33 = arith.cmpf ogt, %31, %32 : vector<8x256xf32>
    %34 = vector.broadcast %2 : f32 to vector<8x256xf32>
    %35 = arith.mulf %34, %31 : vector<8x256xf32>
    %36 = arith.select %33, %31, %35 : vector<8x256xi1>, vector<8x256xf32>
    %37 = arith.truncf %36 : vector<8x256xf32> to vector<8x256xbf16>
    %c0_21 = arith.constant 0 : index
    %c0_22 = arith.constant 0 : index
    %38 = vector.load %arg9[%c0_21, %c0_22] : memref<256x128xbf16, #tpu.memory_space<vmem>>, vector<256x128xbf16>
    %cst_23 = arith.constant dense<0.000000e+00> : vector<8x128xf32>
    %39 = tpu.matmul %37, %38, %cst_23 {dimension_numbers = #tpu.dot_dimension_numbers<[1], [0], [0], [1], [0, 0, 1, 1], [], []>} : vector<8x256xbf16>, vector<256x128xbf16>, vector<8x128xf32> -> vector<8x128xf32>
    %40 = vector.broadcast %6 : vector<1x128xf32> to vector<8x128xf32>
    %41 = arith.addf %39, %40 : vector<8x128xf32>
    %c0_24 = arith.constant 0 : index
    %c0_25 = arith.constant 0 : index
    %42 = vector.load %arg11[%c0_24, %c0_25] : memref<8x128xf32, #tpu.memory_space<vmem>>, vector<8x128xf32>
    tpu.vector_store %arg11[%c0_24, %c0_25], %41 {strides = array<i32>} : memref<8x128xf32, #tpu.memory_space<vmem>>, vector<8x128xf32>,
    return
  }
  func.func @transform_0(%arg0: i32) -> i32 {
    %c0_i32 = arith.constant 0 : i32
    %c0_i32_0 = arith.constant 0 : i32
    return %c0_i32 : i32
  }
  func.func @transform_1(%arg0: i32) -> (i32, i32) {
    %c0_i32 = arith.constant 0 : i32
    %c0_i32_0 = arith.constant 0 : i32
    return %arg0, %c0_i32 : i32, i32
  }
  func.func @transform_2(%arg0: i32) -> (i32, i32) {
    %c0_i32 = arith.constant 0 : i32
    %c0_i32_0 = arith.constant 0 : i32
    %c0_i32_1 = arith.constant 0 : i32
    return %c0_i32, %c0_i32_0 : i32, i32
  }
  func.func @transform_3(%arg0: i32) -> (i32, i32) {
    %c0_i32 = arith.constant 0 : i32
    %c0_i32_0 = arith.constant 0 : i32
    %c0_i32_1 = arith.constant 0 : i32
    return %c0_i32, %c0_i32_0 : i32, i32
  }
  func.func @transform_4(%arg0: i32) -> (i32, i32) {
    %c0_i32 = arith.constant 0 : i32
    %c0_i32_0 = arith.constant 0 : i32
    %c0_i32_1 = arith.constant 0 : i32
    return %c0_i32, %c0_i32_0 : i32, i32
  }
  func.func @transform_5(%arg0: i32) -> (i32, i32) {
    %c0_i32 = arith.constant 0 : i32
    %c0_i32_0 = arith.constant 0 : i32
    %c0_i32_1 = arith.constant 0 : i32
    return %c0_i32, %c0_i32_0 : i32, i32
  }
  func.func @transform_6(%arg0: i32) -> (i32, i32) {
    %c0_i32 = arith.constant 0 : i32
    %c0_i32_0 = arith.constant 0 : i32
    %c0_i32_1 = arith.constant 0 : i32
    return %c0_i32, %c0_i32_0 : i32, i32
  }
  func.func @transform_7(%arg0: i32) -> (i32, i32) {
    %c0_i32 = arith.constant 0 : i32
    %c0_i32_0 = arith.constant 0 : i32
    %c0_i32_1 = arith.constant 0 : i32
    return %c0_i32, %c0_i32_0 : i32, i32
  }
  func.func @transform_8(%arg0: i32) -> (i32, i32) {
    %c0_i32 = arith.constant 0 : i32
    %c0_i32_0 = arith.constant 0 : i32
    %c0_i32_1 = arith.constant 0 : i32
    return %c0_i32, %c0_i32_0 : i32, i32
  }
  func.func @transform_9(%arg0: i32) -> (i32, i32) {
    %c0_i32 = arith.constant 0 : i32
    %c0_i32_0 = arith.constant 0 : i32
    %c0_i32_1 = arith.constant 0 : i32
    return %c0_i32, %c0_i32_0 : i32, i32
  }
  func.func @transform_10(%arg0: i32) -> (i32, i32) {
    %c0_i32 = arith.constant 0 : i32
    %c0_i32_0 = arith.constant 0 : i32
    return %arg0, %c0_i32 : i32, i32
  }
}

</mosaic_0001>

<llo_original>
// kernel: tpu_custom_call.1
$region0: #{tpu_custom_call.1}
  #allocation0 [shape = 'u32[]', space=smem, size = 0x4, offset = 0x4, fixed_abs, tag = 'smem constant byte address 0x4 - core index']
  #allocation1 [shape = 'u32[144,128]{1,0:T(1,128)}', space=vmem, size = 0x12000, scoped, tag = 'internal scratch']
  %s0 = inlined_call_operand.hbm [shape: f32[3], index: 0, kind: input, shape index: {}]
  %s1 = inlined_call_operand.hbm [shape: bf16[8,128], index: 1, kind: input, shape index: {}]
  %s2 = inlined_call_operand.hbm [shape: bf16[128,896], index: 2, kind: input, shape index: {}]
  %s3 = inlined_call_operand.vmem [shape: f32[1,896], index: 3, kind: input, shape index: {}]
  %s4 = inlined_call_operand.hbm [shape: bf16[896,512], index: 4, kind: input, shape index: {}]
  %s5 = inlined_call_operand.vmem [shape: f32[1,512], index: 5, kind: input, shape index: {}]
  %s6 = inlined_call_operand.hbm [shape: bf16[512,256], index: 6, kind: input, shape index: {}]
  %s7 = inlined_call_operand.vmem [shape: f32[1,256], index: 7, kind: input, shape index: {}]
  %s8 = inlined_call_operand.hbm [shape: bf16[256,128], index: 8, kind: input, shape index: {}]
  %s9 = inlined_call_operand.vmem [shape: f32[1,128], index: 9, kind: input, shape index: {}]
  %s10 = inlined_call_operand.hbm [shape: f32[8,128], index: 10, kind: output, shape index: {}]
  %s11 = sld [smem:[#allocation0]]
  $region74: #{tpu_custom_call.1} parent=0
    _
  %s13 = ssub.s32 1, %s11
  %s14 = scalar_select 0, %s13, %s11
  $region1: #{tpu_custom_call.1} parent=0
    #allocation2 [shape = 'u8[512]{0}', space=smem, size = 0x200, scoped, tag = 'input window, operand 0, single buffered']
    #allocation3 [shape = 's32[1]{0}', space=sflag, size = 0x4, scoped, tag = 'scoped memory for tpu_custom_call.1']
    #allocation4 [shape = 's32[1]{0}', space=sflag, size = 0x4, scoped, tag = 'scoped memory for tpu_custom_call.1']
    #allocation5 [shape = 's32[1]{0}', space=sflag, size = 0x4, scoped, tag = 'scoped memory for tpu_custom_call.1']
    #allocation6 [shape = 'u8[2048]{0}', space=vmem, size = 0x800, scoped, tag = 'input window, operand 1, single buffered']
    #allocation7 [shape = 'u8[229376]{0}', space=vmem, size = 0x38000, scoped, tag = 'input window, operand 2, single buffered']
    #allocation8 [shape = 's32[1]{0}', space=sflag, size = 0x4, scoped, tag = 'scoped memory for tpu_custom_call.1']
    #allocation9 [shape = 'u8[917504]{0}', space=vmem, size = 0xe0000, scoped, tag = 'input window, operand 4, single buffered']
    #allocation10 [shape = 'u8[262144]{0}', space=vmem, size = 0x40000, scoped, tag = 'input window, operand 6, single buffered']
    #allocation11 [shape = 's32[1]{0}', space=sflag, size = 0x4, scoped, tag = 'scoped memory for tpu_custom_call.1']
    #allocation12 [shape = 'u8[65536]{0}', space=vmem, size = 0x10000, scoped, tag = 'input window, operand 8, single buffered']
    #allocation13 [shape = 'u8[4096]{0}', space=vmem, size = 0x1000, scoped, tag = 'output window, operand 0, single buffered']
    %15 = vsyncpa [#allocation5], 0
    %16 = vsyncpa [#allocation3], 0
    %17 = vsyncpa [#allocation8], 0
    %18 = vsyncpa [#allocation11], 0
    %19 = vsyncpa [#allocation4], 0
    // Predicated region
    $region2: #{tpu_custom_call.1} parent=1 // pred_check
      _
    $region3: #{tpu_custom_call.1} parent=1 // pred_check_branch
      %21 = sbr.rel (0) target = $region5
    $region4: #{tpu_custom_call.1} parent=1 // pred_region
      %s23 = ssub.s32 16, 16
      %24 = vsyncadd [#allocation5], %s23
      %27 = dma.hbm_to_smem %s0, 16, [#allocation2], [#allocation5]
    $region5: #{tpu_custom_call.1} parent=1 // pred_fallthru
      _
    // Predicated region
    $region6: #{tpu_custom_call.1} parent=1 // pred_check
      _
    $region7: #{tpu_custom_call.1} parent=1 // pred_check_branch
      %29 = sbr.rel (0) target = $region9
    $region8: #{tpu_custom_call.1} parent=1 // pred_region
      %s31 = ssub.s32 64, 64
      %32 = vsyncadd [#allocation3], %s31
      %s34 = sshll.u32 [#allocation6], 4
      %s35 = int_to_ptr.vmem [resolvable:$true] %s34
      %37 = dma.hbm_to_vmem [thread:$0]  %s1, 64, %s35, [#allocation3]
    $region9: #{tpu_custom_call.1} parent=1 // pred_fallthru
      _
    // Predicated region
    $region10: #{tpu_custom_call.1} parent=1 // pred_check
      _
    $region11: #{tpu_custom_call.1} parent=1 // pred_check_branch
      %39 = sbr.rel (0) target = $region13
    $region12: #{tpu_custom_call.1} parent=1 // pred_region
      %s41 = ssub.s32 7168, 7168
      %42 = vsyncadd [#allocation8], %s41
      %s43 = sshll.u32 [#allocation7], 4
      %s44 = int_to_ptr.vmem [resolvable:$true] %s43
      %49 = dma.hbm_to_vmem [thread:$0]  %s2, 7168, %s44, [#allocation8], 448, 448, 28
    $region13: #{tpu_custom_call.1} parent=1 // pred_fallthru
      _
    // Predicated region
    $region14: #{tpu_custom_call.1} parent=1 // pred_check
      _
    $region15: #{tpu_custom_call.1} parent=1 // pred_check_branch
      %51 = sbr.rel (0) target = $region17
    $region16: #{tpu_custom_call.1} parent=1 // pred_region
      _
    $region17: #{tpu_custom_call.1} parent=1 // pred_fallthru
      _
    // Predicated region
    $region18: #{tpu_custom_call.1} parent=1 // pred_check
      _
    $region19: #{tpu_custom_call.1} parent=1 // pred_check_branch
      %53 = sbr.rel (0) target = $region21
    $region20: #{tpu_custom_call.1} parent=1 // pred_region
      %s55 = ssub.s32 28672, 28672
      %56 = vsyncadd [#allocation8], %s55
      %s57 = sshll.u32 [#allocation9], 4
      %s58 = int_to_ptr.vmem [resolvable:$true] %s57
      %63 = dma.hbm_to_vmem [thread:$0]  %s4, 28672, %s58, [#allocation8], 256, 256, 16
    $region21: #{tpu_custom_call.1} parent=1 // pred_fallthru
      _
    // Predicated region
    $region22: #{tpu_custom_call.1} parent=1 // pred_check
      _
    $region23: #{tpu_custom_call.1} parent=1 // pred_check_branch
      %65 = sbr.rel (0) target = $region25
    $region24: #{tpu_custom_call.1} parent=1 // pred_region
      _
    $region25: #{tpu_custom_call.1} parent=1 // pred_fallthru
      _
    // Predicated region
    $region26: #{tpu_custom_call.1} parent=1 // pred_check
      _
    $region27: #{tpu_custom_call.1} parent=1 // pred_check_branch
      %67 = sbr.rel (0) target = $region29
    $region28: #{tpu_custom_call.1} parent=1 // pred_region
      %s69 = ssub.s32 8192, 8192
      %70 = vsyncadd [#allocation11], %s69
      %s71 = sshll.u32 [#allocation10], 4
      %s72 = int_to_ptr.vmem [resolvable:$true] %s71
      %77 = dma.hbm_to_vmem [thread:$0]  %s6, 8192, %s72, [#allocation11], 128, 128, 8
    $region29: #{tpu_custom_call.1} parent=1 // pred_fallthru
      _
    // Predicated region
    $region30: #{tpu_custom_call.1} parent=1 // pred_check
      _
    $region31: #{tpu_custom_call.1} parent=1 // pred_check_branch
      %79 = sbr.rel (0) target = $region33
    $region32: #{tpu_custom_call.1} parent=1 // pred_region
      _
    $region33: #{tpu_custom_call.1} parent=1 // pred_fallthru
      _
    // Predicated region
    $region34: #{tpu_custom_call.1} parent=1 // pred_check
      _
    $region35: #{tpu_custom_call.1} parent=1 // pred_check_branch
      %81 = sbr.rel (0) target = $region37
    $region36: #{tpu_custom_call.1} parent=1 // pred_region
      %s83 = ssub.s32 2048, 2048
      %84 = vsyncadd [#allocation11], %s83
      %s85 = sshll.u32 [#allocation12], 4
      %s86 = int_to_ptr.vmem [resolvable:$true] %s85
      %91 = dma.hbm_to_vmem [thread:$0]  %s8, 2048, %s86, [#allocation11], 64, 64, 4
    $region37: #{tpu_custom_call.1} parent=1 // pred_fallthru
      _
    // Predicated region
    $region38: #{tpu_custom_call.1} parent=1 // pred_check
      _
    $region39: #{tpu_custom_call.1} parent=1 // pred_check_branch
      %93 = sbr.rel (0) target = $region41
    $region40: #{tpu_custom_call.1} parent=1 // pred_region
      _
    $region41: #{tpu_custom_call.1} parent=1 // pred_fallthru
      _
    // Predicated region
    $region42: #{tpu_custom_call.1} parent=1 // pred_check
      _
    $region43: #{tpu_custom_call.1} parent=1 // pred_check_branch
      %95 = sbr.rel (0) target = $region45
    $region44: #{tpu_custom_call.1} parent=1 // pred_region
      %96 = dma.done [#allocation5], 16
    $region45: #{tpu_custom_call.1} parent=1 // pred_fallthru
      _
    // Predicated region
    $region46: #{tpu_custom_call.1} parent=1 // pred_check
      _
    $region47: #{tpu_custom_call.1} parent=1 // pred_check_branch
      %98 = sbr.rel (0) target = $region49
    $region48: #{tpu_custom_call.1} parent=1 // pred_region
      %99 = dma.done [#allocation3], 64
    $region49: #{tpu_custom_call.1} parent=1 // pred_fallthru
      _
    // Predicated region
    $region50: #{tpu_custom_call.1} parent=1 // pred_check
      _
    $region51: #{tpu_custom_call.1} parent=1 // pred_check_branch
      %101 = sbr.rel (0) target = $region53
    $region52: #{tpu_custom_call.1} parent=1 // pred_region
      %102 = dma.done [#allocation8], 7168
    $region53: #{tpu_custom_call.1} parent=1 // pred_fallthru
      _
    // Predicated region
    $region54: #{tpu_custom_call.1} parent=1 // pred_check
      _
    $region55: #{tpu_custom_call.1} parent=1 // pred_check_branch
      %104 = sbr.rel (0) target = $region57
    $region56: #{tpu_custom_call.1} parent=1 // pred_region
      %105 = dma.done [#allocation8], 28672
    $region57: #{tpu_custom_call.1} parent=1 // pred_fallthru
      _
    // Predicated region
    $region58: #{tpu_custom_call.1} parent=1 // pred_check
      _
    $region59: #{tpu_custom_call.1} parent=1 // pred_check_branch
      %107 = sbr.rel (0) target = $region61
    $region60: #{tpu_custom_call.1} parent=1 // pred_region
      %108 = dma.done [#allocation11], 8192
    $region61: #{tpu_custom_call.1} parent=1 // pred_fallthru
      _
    // Predicated region
    $region62: #{tpu_custom_call.1} parent=1 // pred_check
      _
    $region63: #{tpu_custom_call.1} parent=1 // pred_check_branch
      %110 = sbr.rel (0) target = $region65
    $region64: #{tpu_custom_call.1} parent=1 // pred_region
      %111 = dma.done [#allocation11], 2048
    $region65: #{tpu_custom_call.1} parent=1 // pred_fallthru
      _
    %112 = sfence
    %s114 = sld [smem:[#allocation2]]
    %s115 = sld [smem:[#allocation2 + $0x1]]
    %s116 = sld [smem:[#allocation2 + $0x2]]
    %v117 = vld [vmem:[%s3] sm:$0xff]
    %v118 = vld [vmem:[%s5] sm:$0xf]
    %v119 = vld [vmem:[%s7] sm:$0x3]
    %v120 = vld [vmem:[%s9] sm:$0x1]
    %v121 = vld [vmem:[#allocation6] sm:$0xf]
    %v122 = vld [vmem:[#allocation7] sm:$0xff]
    %v123 = vld [vmem:[#allocation7 + $0x8] sm:$0xff]
    %v124 = vld [vmem:[#allocation7 + $0x10] sm:$0xff]
    %v125 = vld [vmem:[#allocation7 + $0x18] sm:$0xf]
    %v126 = vld [vmem:[#allocation7 + $0x1c] sm:$0xff]
    %v127 = vld [vmem:[#allocation7 + $0x24] sm:$0xff]
    %v128 = vld [vmem:[#allocation7 + $0x2c] sm:$0xff]
    %v129 = vld [vmem:[#allocation7 + $0x34] sm:$0xf]
    %v130 = vld [vmem:[#allocation7 + $0x38] sm:$0xff]
    %v131 = vld [vmem:[#allocation7 + $0x40] sm:$0xff]
    %v132 = vld [vmem:[#allocation7 + $0x48] sm:$0xff]
    %v133 = vld [vmem:[#allocation7 + $0x50] sm:$0xf]
    %v134 = vld [vmem:[#allocation7 + $0x54] sm:$0xff]
    %v135 = vld [vmem:[#allocation7 + $0x5c] sm:$0xff]
    %v136 = vld [vmem:[#allocation7 + $0x64] sm:$0xff]
    %v137 = vld [vmem:[#allocation7 + $0x6c] sm:$0xf]
    %v138 = vld [vmem:[#allocation7 + $0x70] sm:$0xff]
    %v139 = vld [vmem:[#allocation7 + $0x78] sm:$0xff]
    %v140 = vld [vmem:[#allocation7 + $0x80] sm:$0xff]
    %v141 = vld [vmem:[#allocation7 + $0x88] sm:$0xf]
    %v142 = vld [vmem:[#allocation7 + $0x8c] sm:$0xff]
    %v143 = vld [vmem:[#allocation7 + $0x94] sm:$0xff]
    %v144 = vld [vmem:[#allocation7 + $0x9c] sm:$0xff]
    %v145 = vld [vmem:[#allocation7 + $0xa4] sm:$0xf]
    %v146 = vld [vmem:[#allocation7 + $0xa8] sm:$0xff]
    %v147 = vld [vmem:[#allocation7 + $0xb0] sm:$0xff]
    %v148 = vld [vmem:[#allocation7 + $0xb8] sm:$0xff]
    %v149 = vld [vmem:[#allocation7 + $0xc0] sm:$0xf]
    %v150 = vld [vmem:[#allocation7 + $0xc4] sm:$0xff]
    %v151 = vld [vmem:[#allocation7 + $0xcc] sm:$0xff]
    %v152 = vld [vmem:[#allocation7 + $0xd4] sm:$0xff]
    %v153 = vld [vmem:[#allocation7 + $0xdc] sm:$0xf]
    %v154 = vld [vmem:[#allocation7 + $0xe0] sm:$0xff]
    %v155 = vld [vmem:[#allocation7 + $0xe8] sm:$0xff]
    %v156 = vld [vmem:[#allocation7 + $0xf0] sm:$0xff]
    %v157 = vld [vmem:[#allocation7 + $0xf8] sm:$0xf]
    %v158 = vld [vmem:[#allocation7 + $0xfc] sm:$0xff]
    %v159 = vld [vmem:[#allocation7 + $0x104] sm:$0xff]
    %v160 = vld [vmem:[#allocation7 + $0x10c] sm:$0xff]
    %v161 = vld [vmem:[#allocation7 + $0x114] sm:$0xf]
    %v162 = vld [vmem:[#allocation7 + $0x118] sm:$0xff]
    %v163 = vld [vmem:[#allocation7 + $0x120] sm:$0xff]
    %v164 = vld [vmem:[#allocation7 + $0x128] sm:$0xff]
    %v165 = vld [vmem:[#allocation7 + $0x130] sm:$0xf]
    %v166 = vld [vmem:[#allocation7 + $0x134] sm:$0xff]
    %v167 = vld [vmem:[#allocation7 + $0x13c] sm:$0xff]
    %v168 = vld [vmem:[#allocation7 + $0x144] sm:$0xff]
    %v169 = vld [vmem:[#allocation7 + $0x14c] sm:$0xf]
    %v170 = vld [vmem:[#allocation7 + $0x150] sm:$0xff]
    %v171 = vld [vmem:[#allocation7 + $0x158] sm:$0xff]
    %v172 = vld [vmem:[#allocation7 + $0x160] sm:$0xff]
    %v173 = vld [vmem:[#allocation7 + $0x168] sm:$0xf]
    %v174 = vld [vmem:[#allocation7 + $0x16c] sm:$0xff]
    %v175 = vld [vmem:[#allocation7 + $0x174] sm:$0xff]
    %v176 = vld [vmem:[#allocation7 + $0x17c] sm:$0xff]
    %v177 = vld [vmem:[#allocation7 + $0x184] sm:$0xf]
    %v178 = vld [vmem:[#allocation7 + $0x188] sm:$0xff]
    %v179 = vld [vmem:[#allocation7 + $0x190] sm:$0xff]
    %v180 = vld [vmem:[#allocation7 + $0x198] sm:$0xff]
    %v181 = vld [vmem:[#allocation7 + $0x1a0] sm:$0xf]
    %v182 = vld [vmem:[#allocation7 + $0x1a4] sm:$0xff]
    %v183 = vld [vmem:[#allocation7 + $0x1ac] sm:$0xff]
    %v184 = vld [vmem:[#allocation7 + $0x1b4] sm:$0xff]
    %v185 = vld [vmem:[#allocation7 + $0x1bc] sm:$0xf]
    %v187 = vlaneseq
    %v188 = vshrl.u32 %v187, 7
    %v189 = vsub.s32 0, %v188
    %v190 = vrot.slane %v117, %v189
    %v191 = vlaneseq
    %v192 = vshrl.u32 %v191, 7
    %v193 = vsub.s32 1, %v192
    %v194 = vrot.slane %v117, %v193
    %v195 = vlaneseq
    %v196 = vshrl.u32 %v195, 7
    %v197 = vsub.s32 2, %v196
    %v198 = vrot.slane %v117, %v197
    %v199 = vlaneseq
    %v200 = vshrl.u32 %v199, 7
    %v201 = vsub.s32 3, %v200
    %v202 = vrot.slane %v117, %v201
    %v203 = vlaneseq
    %v204 = vshrl.u32 %v203, 7
    %v205 = vsub.s32 4, %v204
    %v206 = vrot.slane %v117, %v205
    %v207 = vlaneseq
    %v208 = vshrl.u32 %v207, 7
    %v209 = vsub.s32 5, %v208
    %v210 = vrot.slane %v117, %v209
    %v211 = vlaneseq
    %v212 = vshrl.u32 %v211, 7
    %v213 = vsub.s32 6, %v212
    %v214 = vrot.slane %v117, %v213
    %v286 = vunpack.c.l.b16 %v122
    %v287 = vunpack.c.h.b16 %v122
    %v288 = vunpack.c.l.b16 %v123
    %v289 = vunpack.c.h.b16 %v123
    %v290 = vunpack.c.l.b16 %v124
    %v291 = vunpack.c.h.b16 %v124
    %v292 = vunpack.c.l.b16 %v125
    %v293 = vunpack.c.l.b16 %v126
    %v294 = vunpack.c.h.b16 %v126
    %v295 = vunpack.c.l.b16 %v127
    %v296 = vunpack.c.h.b16 %v127
    %v297 = vunpack.c.l.b16 %v128
    %v298 = vunpack.c.h.b16 %v128
    %v299 = vunpack.c.l.b16 %v129
    %v300 = vunpack.c.l.b16 %v130
    %v301 = vunpack.c.h.b16 %v130
    %v302 = vunpack.c.l.b16 %v131
    %v303 = vunpack.c.h.b16 %v131
    %v304 = vunpack.c.l.b16 %v132
    %v305 = vunpack.c.h.b16 %v132
    %v306 = vunpack.c.l.b16 %v133
    %v307 = vunpack.c.l.b16 %v134
    %v308 = vunpack.c.h.b16 %v134
    %v309 = vunpack.c.l.b16 %v135
    %v310 = vunpack.c.h.b16 %v135
    %v311 = vunpack.c.l.b16 %v136
    %v312 = vunpack.c.h.b16 %v136
    %v313 = vunpack.c.l.b16 %v137
    %v314 = vunpack.c.l.b16 %v138
    %v315 = vunpack.c.h.b16 %v138
    %v316 = vunpack.c.l.b16 %v139
    %v317 = vunpack.c.h.b16 %v139
    %v318 = vunpack.c.l.b16 %v140
    %v319 = vunpack.c.h.b16 %v140
    %v320 = vunpack.c.l.b16 %v141
    %v321 = vunpack.c.l.b16 %v142
    %v322 = vunpack.c.h.b16 %v142
    %v323 = vunpack.c.l.b16 %v143
    %v324 = vunpack.c.h.b16 %v143
    %v325 = vunpack.c.l.b16 %v144
    %v326 = vunpack.c.h.b16 %v144
    %v327 = vunpack.c.l.b16 %v145
    %v328 = vunpack.c.l.b16 %v146
    %v329 = vunpack.c.h.b16 %v146
    %v330 = vunpack.c.l.b16 %v147
    %v331 = vunpack.c.h.b16 %v147
    %v332 = vunpack.c.l.b16 %v148
    %v333 = vunpack.c.h.b16 %v148
    %v334 = vunpack.c.l.b16 %v149
    %v335 = vunpack.c.l.b16 %v150
    %v336 = vunpack.c.h.b16 %v150
    %v337 = vunpack.c.l.b16 %v151
    %v338 = vunpack.c.h.b16 %v151
    %v339 = vunpack.c.l.b16 %v152
    %v340 = vunpack.c.h.b16 %v152
    %v341 = vunpack.c.l.b16 %v153
    %v342 = vunpack.c.l.b16 %v154
    %v343 = vunpack.c.h.b16 %v154
    %v344 = vunpack.c.l.b16 %v155
    %v345 = vunpack.c.h.b16 %v155
    %v346 = vunpack.c.l.b16 %v156
    %v347 = vunpack.c.h.b16 %v156
    %v348 = vunpack.c.l.b16 %v157
    %v349 = vunpack.c.l.b16 %v158
    %v350 = vunpack.c.h.b16 %v158
    %v351 = vunpack.c.l.b16 %v159
    %v352 = vunpack.c.h.b16 %v159
    %v353 = vunpack.c.l.b16 %v160
    %v354 = vunpack.c.h.b16 %v160
    %v355 = vunpack.c.l.b16 %v161
    %v356 = vunpack.c.l.b16 %v162
    %v357 = vunpack.c.h.b16 %v162
    %v358 = vunpack.c.l.b16 %v163
    %v359 = vunpack.c.h.b16 %v163
    %v360 = vunpack.c.l.b16 %v164
    %v361 = vunpack.c.h.b16 %v164
    %v362 = vunpack.c.l.b16 %v165
    %v363 = vunpack.c.l.b16 %v166
    %v364 = vunpack.c.h.b16 %v166
    %v365 = vunpack.c.l.b16 %v167
    %v366 = vunpack.c.h.b16 %v167
    %v367 = vunpack.c.l.b16 %v168
    %v368 = vunpack.c.h.b16 %v168
    %v369 = vunpack.c.l.b16 %v169
    %v370 = vunpack.c.l.b16 %v170
    %v371 = vunpack.c.h.b16 %v170
    %v372 = vunpack.c.l.b16 %v171
    %v373 = vunpack.c.h.b16 %v171
    %v374 = vunpack.c.l.b16 %v172
    %v375 = vunpack.c.h.b16 %v172
    %v376 = vunpack.c.l.b16 %v173
    %v377 = vunpack.c.l.b16 %v174
    %v378 = vunpack.c.h.b16 %v174
    %v379 = vunpack.c.l.b16 %v175
    %v380 = vunpack.c.h.b16 %v175
    %v381 = vunpack.c.l.b16 %v176
    %v382 = vunpack.c.h.b16 %v176
    %v383 = vunpack.c.l.b16 %v177
    %v384 = vunpack.c.l.b16 %v178
    %v385 = vunpack.c.h.b16 %v178
    %v386 = vunpack.c.l.b16 %v179
    %v387 = vunpack.c.h.b16 %v179
    %v388 = vunpack.c.l.b16 %v180
    %v389 = vunpack.c.h.b16 %v180
    %v390 = vunpack.c.l.b16 %v181
    %v391 = vunpack.c.l.b16 %v182
    %v392 = vunpack.c.h.b16 %v182
    %v393 = vunpack.c.l.b16 %v183
    %v394 = vunpack.c.h.b16 %v183
    %v395 = vunpack.c.l.b16 %v184
    %v396 = vunpack.c.h.b16 %v184
    %v397 = vunpack.c.l.b16 %v185
    %v398 = vpack.c.b16 %v293, %v286
    %v399 = vpack.c.b16 %v294, %v287
    %v400 = vpack.c.b16 %v295, %v288
    %v401 = vpack.c.b16 %v296, %v289
    %v402 = vpack.c.b16 %v297, %v290
    %v403 = vpack.c.b16 %v298, %v291
    %v404 = vpack.c.b16 %v299, %v292
    %v405 = vpack.c.b16 %v307, %v300
    %v406 = vpack.c.b16 %v308, %v301
    %v407 = vpack.c.b16 %v309, %v302
    %v408 = vpack.c.b16 %v310, %v303
    %v409 = vpack.c.b16 %v311, %v304
    %v410 = vpack.c.b16 %v312, %v305
    %v411 = vpack.c.b16 %v313, %v306
    %v412 = vpack.c.b16 %v321, %v314
    %v413 = vpack.c.b16 %v322, %v315
    %v414 = vpack.c.b16 %v323, %v316
    %v415 = vpack.c.b16 %v324, %v317
    %v416 = vpack.c.b16 %v325, %v318
    %v417 = vpack.c.b16 %v326, %v319
    %v418 = vpack.c.b16 %v327, %v320
    %v419 = vpack.c.b16 %v335, %v328
    %v420 = vpack.c.b16 %v336, %v329
    %v421 = vpack.c.b16 %v337, %v330
    %v422 = vpack.c.b16 %v338, %v331
    %v423 = vpack.c.b16 %v339, %v332
    %v424 = vpack.c.b16 %v340, %v333
    %v425 = vpack.c.b16 %v341, %v334
    %v426 = vpack.c.b16 %v349, %v342
    %v427 = vpack.c.b16 %v350, %v343
    %v428 = vpack.c.b16 %v351, %v344
    %v429 = vpack.c.b16 %v352, %v345
    %v430 = vpack.c.b16 %v353, %v346
    %v431 = vpack.c.b16 %v354, %v347
    %v432 = vpack.c.b16 %v355, %v348
    %v433 = vpack.c.b16 %v363, %v356
    %v434 = vpack.c.b16 %v364, %v357
    %v435 = vpack.c.b16 %v365, %v358
    %v436 = vpack.c.b16 %v366, %v359
    %v437 = vpack.c.b16 %v367, %v360
    %v438 = vpack.c.b16 %v368, %v361
    %v439 = vpack.c.b16 %v369, %v362
    %v440 = vpack.c.b16 %v377, %v370
    %v441 = vpack.c.b16 %v378, %v371
    %v442 = vpack.c.b16 %v379, %v372
    %v443 = vpack.c.b16 %v380, %v373
    %v444 = vpack.c.b16 %v381, %v374
    %v445 = vpack.c.b16 %v382, %v375
    %v446 = vpack.c.b16 %v383, %v376
    %v447 = vpack.c.b16 %v391, %v384
    %v448 = vpack.c.b16 %v392, %v385
    %v449 = vpack.c.b16 %v393, %v386
    %v450 = vpack.c.b16 %v394, %v387
    %v451 = vpack.c.b16 %v395, %v388
    %v452 = vpack.c.b16 %v396, %v389
    %v453 = vpack.c.b16 %v397, %v390
    %510 = vmatprep.subr.bf16.mxu0 %v399
    %511 = vmatpush1.bf16.msra.mxu0 %v398
    %512 = vmatprep.subr.bf16.mxu0 %v406
    %513 = vmatpush1.bf16.msra.mxu0 %v405
    %514 = vmatprep.subr.bf16.mxu0 %v413
    %515 = vmatpush1.bf16.msra.mxu0 %v412
    %516 = vmatprep.subr.bf16.mxu0 %v420
    %517 = vmatpush1.bf16.msra.mxu0 %v419
    %518 = vmatprep.subr.bf16.mxu0 %v427
    %519 = vmatpush1.bf16.msra.mxu0 %v426
    %520 = vmatprep.subr.bf16.mxu0 %v434
    %521 = vmatpush1.bf16.msra.mxu0 %v433
    %522 = vmatprep.subr.bf16.mxu0 %v441
    %523 = vmatpush1.bf16.msra.mxu0 %v440
    %524 = vmatprep.subr.bf16.mxu0 %v448
    %525 = vmatpush1.bf16.msra.mxu0 %v447
    %526 = vmatprep.subr.bf16.mxu0 0
    %527 = vmatpush1.bf16.msra.mxu0 0
    %528 = vmatprep.subr.bf16.mxu0 0
    %529 = vmatpush1.bf16.msra.mxu0 0
    %530 = vmatprep.subr.bf16.mxu0 0
    %531 = vmatpush1.bf16.msra.mxu0 0
    %532 = vmatprep.subr.bf16.mxu0 0
    %533 = vmatpush1.bf16.msra.mxu0 0
    %534 = vmatprep.subr.bf16.mxu0 0
    %535 = vmatpush1.bf16.msra.mxu0 0
    %536 = vmatprep.subr.bf16.mxu0 0
    %537 = vmatpush1.bf16.msra.mxu0 0
    %538 = vmatprep.subr.bf16.mxu0 0
    %539 = vmatpush1.bf16.msra.mxu0 0
    %540 = vmatprep.subr.bf16.mxu0 0
    %541 = vmatpush1.bf16.msra.mxu0 0
    %542 = vmatprep.mubr.bf16.mxu0 0
    %543 = vmatmul.mubr.bf16.gmra.mrb[0].mxu0 %v121
    %v544 = vpop.f32.mrb[0].mxu0
    %v545 = vadd.f32 %v190, %v544
    %v546 = vpop.f32.mrb[0].mxu0
    %v547 = vadd.f32 %v194, %v546
    %v548 = vpop.f32.mrb[0].mxu0
    %v549 = vpop.f32.mrb[0].mxu0
    %550 = vdwg.mxu0
    %551 = vmatprep.subr.bf16.mxu0 %v401
    %552 = vmatpush1.bf16.msra.mxu0 %v400
    %553 = vmatprep.subr.bf16.mxu0 %v408
    %554 = vmatpush1.bf16.msra.mxu0 %v407
    %555 = vmatprep.subr.bf16.mxu0 %v415
    %556 = vmatpush1.bf16.msra.mxu0 %v414
    %557 = vmatprep.subr.bf16.mxu0 %v422
    %558 = vmatpush1.bf16.msra.mxu0 %v421
    %559 = vmatprep.subr.bf16.mxu0 %v429
    %560 = vmatpush1.bf16.msra.mxu0 %v428
    %561 = vmatprep.subr.bf16.mxu0 %v436
    %562 = vmatpush1.bf16.msra.mxu0 %v435
    %563 = vmatprep.subr.bf16.mxu0 %v443
    %564 = vmatpush1.bf16.msra.mxu0 %v442
    %565 = vmatprep.subr.bf16.mxu0 %v450
    %566 = vmatpush1.bf16.msra.mxu0 %v449
    %567 = vmatprep.subr.bf16.mxu0 0
    %568 = vmatpush1.bf16.msra.mxu0 0
    %569 = vmatprep.subr.bf16.mxu0 0
    %570 = vmatpush1.bf16.msra.mxu0 0
    %571 = vmatprep.subr.bf16.mxu0 0
    %572 = vmatpush1.bf16.msra.mxu0 0
    %573 = vmatprep.subr.bf16.mxu0 0
    %574 = vmatpush1.bf16.msra.mxu0 0
    %575 = vmatprep.subr.bf16.mxu0 0
    %576 = vmatpush1.bf16.msra.mxu0 0
    %577 = vmatprep.subr.bf16.mxu0 0
    %578 = vmatpush1.bf16.msra.mxu0 0
    %579 = vmatprep.subr.bf16.mxu0 0
    %580 = vmatpush1.bf16.msra.mxu0 0
    %581 = vmatprep.subr.bf16.mxu0 0
    %582 = vmatpush1.bf16.msra.mxu0 0
    %583 = vmatprep.mubr.bf16.mxu0 0
    %584 = vmatmul.mubr.bf16.gmra.mrb[0].mxu0 %v121
    %v585 = vpop.f32.mrb[0].mxu0
    %v586 = vadd.f32 %v198, %v585
    %v587 = vpop.f32.mrb[0].mxu0
    %v588 = vadd.f32 %v202, %v587
    %v589 = vpop.f32.mrb[0].mxu0
    %v590 = vpop.f32.mrb[0].mxu0
    %591 = vdwg.mxu0
    %592 = vmatprep.subr.bf16.mxu0 %v403
    %593 = vmatpush1.bf16.msra.mxu0 %v402
    %594 = vmatprep.subr.bf16.mxu0 %v410
    %595 = vmatpush1.bf16.msra.mxu0 %v409
    %596 = vmatprep.subr.bf16.mxu0 %v417
    %597 = vmatpush1.bf16.msra.mxu0 %v416
    %598 = vmatprep.subr.bf16.mxu0 %v424
    %599 = vmatpush1.bf16.msra.mxu0 %v423
    %600 = vmatprep.subr.bf16.mxu0 %v431
    %601 = vmatpush1.bf16.msra.mxu0 %v430
    %602 = vmatprep.subr.bf16.mxu0 %v438
    %603 = vmatpush1.bf16.msra.mxu0 %v437
    %604 = vmatprep.subr.bf16.mxu0 %v445
    %605 = vmatpush1.bf16.msra.mxu0 %v444
    %606 = vmatprep.subr.bf16.mxu0 %v452
    %607 = vmatpush1.bf16.msra.mxu0 %v451
    %608 = vmatprep.subr.bf16.mxu0 0
    %609 = vmatpush1.bf16.msra.mxu0 0
    %610 = vmatprep.subr.bf16.mxu0 0
    %611 = vmatpush1.bf16.msra.mxu0 0
    %612 = vmatprep.subr.bf16.mxu0 0
    %613 = vmatpush1.bf16.msra.mxu0 0
    %614 = vmatprep.subr.bf16.mxu0 0
    %615 = vmatpush1.bf16.msra.mxu0 0
    %616 = vmatprep.subr.bf16.mxu0 0
    %617 = vmatpush1.bf16.msra.mxu0 0
    %618 = vmatprep.subr.bf16.mxu0 0
    %619 = vmatpush1.bf16.msra.mxu0 0
    %620 = vmatprep.subr.bf16.mxu0 0
    %621 = vmatpush1.bf16.msra.mxu0 0
    %622 = vmatprep.subr.bf16.mxu0 0
    %623 = vmatpush1.bf16.msra.mxu0 0
    %624 = vmatprep.mubr.bf16.mxu0 0
    %625 = vmatmul.mubr.bf16.gmra.mrb[0].mxu0 %v121
    %v626 = vpop.f32.mrb[0].mxu0
    %v627 = vadd.f32 %v206, %v626
    %v628 = vpop.f32.mrb[0].mxu0
    %v629 = vadd.f32 %v210, %v628
    %v630 = vpop.f32.mrb[0].mxu0
    %v631 = vpop.f32.mrb[0].mxu0
    %632 = vdwg.mxu0
    %633 = vmatprep.subr.bf16.mxu0 0
    %634 = vmatpush1.bf16.msra.mxu0 %v404
    %635 = vmatprep.subr.bf16.mxu0 0
    %636 = vmatpush1.bf16.msra.mxu0 %v411
    %637 = vmatprep.subr.bf16.mxu0 0
    %638 = vmatpush1.bf16.msra.mxu0 %v418
    %639 = vmatprep.subr.bf16.mxu0 0
    %640 = vmatpush1.bf16.msra.mxu0 %v425
    %641 = vmatprep.subr.bf16.mxu0 0
    %642 = vmatpush1.bf16.msra.mxu0 %v432
    %643 = vmatprep.subr.bf16.mxu0 0
    %644 = vmatpush1.bf16.msra.mxu0 %v439
    %645 = vmatprep.subr.bf16.mxu0 0
    %646 = vmatpush1.bf16.msra.mxu0 %v446
    %647 = vmatprep.subr.bf16.mxu0 0
    %648 = vmatpush1.bf16.msra.mxu0 %v453
    %649 = vmatprep.subr.bf16.mxu0 0
    %650 = vmatpush1.bf16.msra.mxu0 0
    %651 = vmatprep.subr.bf16.mxu0 0
    %652 = vmatpush1.bf16.msra.mxu0 0
    %653 = vmatprep.subr.bf16.mxu0 0
    %654 = vmatpush1.bf16.msra.mxu0 0
    %655 = vmatprep.subr.bf16.mxu0 0
    %656 = vmatpush1.bf16.msra.mxu0 0
    %657 = vmatprep.subr.bf16.mxu0 0
    %658 = vmatpush1.bf16.msra.mxu0 0
    %659 = vmatprep.subr.bf16.mxu0 0
    %660 = vmatpush1.bf16.msra.mxu0 0
    %661 = vmatprep.subr.bf16.mxu0 0
    %662 = vmatpush1.bf16.msra.mxu0 0
    %663 = vmatprep.subr.bf16.mxu0 0
    %664 = vmatpush1.bf16.msra.mxu0 0
    %665 = vmatprep.mubr.bf16.mxu0 0
    %666 = vmatmul.mubr.bf16.gmra.mrb[0].mxu0 %v121
    %v667 = vpop.f32.mrb[0].mxu0
    %v668 = vadd.f32 %v214, %v667
    %v669 = vpop.f32.mrb[0].mxu0
    %v670 = vpop.f32.mrb[0].mxu0
    %v671 = vpop.f32.mrb[0].mxu0
    %672 = vdwg.mxu0
    %vm673 = vcmp.gt.f32.partialorder %v545, 0.0
    %vm674 = vcmp.gt.f32.partialorder %v547, 0.0
    %vm675 = vcmp.gt.f32.partialorder %v586, 0.0
    %vm676 = vcmp.gt.f32.partialorder %v588, 0.0
    %vm677 = vcmp.gt.f32.partialorder %v627, 0.0
    %vm678 = vcmp.gt.f32.partialorder %v629, 0.0
    %vm679 = vcmp.gt.f32.partialorder %v668, 0.0
    %v680 = vstv %s114
    %v681 = vmul.f32 %v680, %v545
    %v682 = vmul.f32 %v680, %v547
    %v683 = vmul.f32 %v680, %v586
    %v684 = vmul.f32 %v680, %v588
    %v685 = vmul.f32 %v680, %v627
    %v686 = vmul.f32 %v680, %v629
    %v687 = vmul.f32 %v680, %v668
    %v688 = vsel %vm673, %v545, %v681
    %v689 = vsel %vm674, %v547, %v682
    %v690 = vsel %vm675, %v586, %v683
    %v691 = vsel %vm676, %v588, %v684
    %v692 = vsel %vm677, %v627, %v685
    %v693 = vsel %vm678, %v629, %v686
    %v694 = vsel %vm679, %v668, %v687
    %v695 = vpack.c.bf16 %v688, %v688
    %v696 = vpack.c.bf16 %v689, %v689
    %v697 = vpack.c.bf16 %v690, %v690
    %v698 = vpack.c.bf16 %v691, %v691
    %v699 = vpack.c.bf16 %v692, %v692
    %v700 = vpack.c.bf16 %v693, %v693
    %v701 = vpack.c.bf16 %v694, %v694
    %v702 = vld [vmem:[#allocation9] sm:$0xff]
    %v703 = vld [vmem:[#allocation9 + $0x8] sm:$0xff]
    %v704 = vld [vmem:[#allocation9 + $0x10] sm:$0xff]
    %v705 = vld [vmem:[#allocation9 + $0x18] sm:$0xff]
    %v706 = vld [vmem:[#allocation9 + $0x20] sm:$0xff]
    %v707 = vld [vmem:[#allocation9 + $0x28] sm:$0xff]
    %v708 = vld [vmem:[#allocation9 + $0x30] sm:$0xff]
    %v709 = vld [vmem:[#allocation9 + $0x38] sm:$0xff]
    %v710 = vld [vmem:[#allocation9 + $0x40] sm:$0xff]
    %v711 = vld [vmem:[#allocation9 + $0x48] sm:$0xff]
    %v712 = vld [vmem:[#allocation9 + $0x50] sm:$0xff]
    %v713 = vld [vmem:[#allocation9 + $0x58] sm:$0xff]
    %v714 = vld [vmem:[#allocation9 + $0x60] sm:$0xff]
    %v715 = vld [vmem:[#allocation9 + $0x68] sm:$0xff]
    %v716 = vld [vmem:[#allocation9 + $0x70] sm:$0xff]
    %v717 = vld [vmem:[#allocation9 + $0x78] sm:$0xff]
    %v718 = vld [vmem:[#allocation9 + $0x80] sm:$0xff]
    %v719 = vld [vmem:[#allocation9 + $0x88] sm:$0xff]
    %v720 = vld [vmem:[#allocation9 + $0x90] sm:$0xff]
    %v721 = vld [vmem:[#allocation9 + $0x98] sm:$0xff]
    %v722 = vld [vmem:[#allocation9 + $0xa0] sm:$0xff]
    %v723 = vld [vmem:[#allocation9 + $0xa8] sm:$0xff]
    %v724 = vld [vmem:[#allocation9 + $0xb0] sm:$0xff]
    %v725 = vld [vmem:[#allocation9 + $0xb8] sm:$0xff]
    %v726 = vld [vmem:[#allocation9 + $0xc0] sm:$0xff]
    %v727 = vld [vmem:[#allocation9 + $0xc8] sm:$0xff]
    %v728 = vld [vmem:[#allocation9 + $0xd0] sm:$0xff]
    %v729 = vld [vmem:[#allocation9 + $0xd8] sm:$0xff]
    %v730 = vld [vmem:[#allocation9 + $0xe0] sm:$0xff]
    %v731 = vld [vmem:[#allocation9 + $0xe8] sm:$0xff]
    %v732 = vld [vmem:[#allocation9 + $0xf0] sm:$0xff]
    %v733 = vld [vmem:[#allocation9 + $0xf8] sm:$0xff]
    %v734 = vld [vmem:[#allocation9 + $0x100] sm:$0xff]
    %v735 = vld [vmem:[#allocation9 + $0x108] sm:$0xff]
    %v736 = vld [vmem:[#allocation9 + $0x110] sm:$0xff]
    %v737 = vld [vmem:[#allocation9 + $0x118] sm:$0xff]
    %v738 = vld [vmem:[#allocation9 + $0x120] sm:$0xff]
    %v739 = vld [vmem:[#allocation9 + $0x128] sm:$0xff]
    %v740 = vld [vmem:[#allocation9 + $0x130] sm:$0xff]
    %v741 = vld [vmem:[#allocation9 + $0x138] sm:$0xff]
    %v742 = vld [vmem:[#allocation9 + $0x140] sm:$0xff]
    %v743 = vld [vmem:[#allocation9 + $0x148] sm:$0xff]
    %v744 = vld [vmem:[#allocation9 + $0x150] sm:$0xff]
    %v745 = vld [vmem:[#allocation9 + $0x158] sm:$0xff]
    %v746 = vld [vmem:[#allocation9 + $0x160] sm:$0xff]
    %v747 = vld [vmem:[#allocation9 + $0x168] sm:$0xff]
    %v748 = vld [vmem:[#allocation9 + $0x170] sm:$0xff]
    %v749 = vld [vmem:[#allocation9 + $0x178] sm:$0xff]
    %v750 = vld [vmem:[#allocation9 + $0x180] sm:$0xff]
    %v751 = vld [vmem:[#allocation9 + $0x188] sm:$0xff]
    %v752 = vld [vmem:[#allocation9 + $0x190] sm:$0xff]
    %v753 = vld [vmem:[#allocation9 + $0x198] sm:$0xff]
    %v754 = vld [vmem:[#allocation9 + $0x1a0] sm:$0xff]
    %v755 = vld [vmem:[#allocation9 + $0x1a8] sm:$0xff]
    %v756 = vld [vmem:[#allocation9 + $0x1b0] sm:$0xff]
    %v757 = vld [vmem:[#allocation9 + $0x1b8] sm:$0xff]
    %v758 = vld [vmem:[#allocation9 + $0x1c0] sm:$0xff]
    %v759 = vld [vmem:[#allocation9 + $0x1c8] sm:$0xff]
    %v760 = vld [vmem:[#allocation9 + $0x1d0] sm:$0xff]
    %v761 = vld [vmem:[#allocation9 + $0x1d8] sm:$0xff]
    %v762 = vld [vmem:[#allocation9 + $0x1e0] sm:$0xff]
    %v763 = vld [vmem:[#allocation9 + $0x1e8] sm:$0xff]
    %v764 = vld [vmem:[#allocation9 + $0x1f0] sm:$0xff]
    %v765 = vld [vmem:[#allocation9 + $0x1f8] sm:$0xff]
    %v766 = vld [vmem:[#allocation9 + $0x200] sm:$0xff]
    %v767 = vld [vmem:[#allocation9 + $0x208] sm:$0xff]
    %v768 = vld [vmem:[#allocation9 + $0x210] sm:$0xff]
    %v769 = vld [vmem:[#allocation9 + $0x218] sm:$0xff]
    %v770 = vld [vmem:[#allocation9 + $0x220] sm:$0xff]
    %v771 = vld [vmem:[#allocation9 + $0x228] sm:$0xff]
    %v772 = vld [vmem:[#allocation9 + $0x230] sm:$0xff]
    %v773 = vld [vmem:[#allocation9 + $0x238] sm:$0xff]
    %v774 = vld [vmem:[#allocation9 + $0x240] sm:$0xff]
    %v775 = vld [vmem:[#allocation9 + $0x248] sm:$0xff]
    %v776 = vld [vmem:[#allocation9 + $0x250] sm:$0xff]
    %v777 = vld [vmem:[#allocation9 + $0x258] sm:$0xff]
    %v778 = vld [vmem:[#allocation9 + $0x260] sm:$0xff]
    %v779 = vld [vmem:[#allocation9 + $0x268] sm:$0xff]
    %v780 = vld [vmem:[#allocation9 + $0x270] sm:$0xff]
    %v781 = vld [vmem:[#allocation9 + $0x278] sm:$0xff]
    %v782 = vld [vmem:[#allocation9 + $0x280] sm:$0xff]
    %v783 = vld [vmem:[#allocation9 + $0x288] sm:$0xff]
    %v784 = vld [vmem:[#allocation9 + $0x290] sm:$0xff]
    %v785 = vld [vmem:[#allocation9 + $0x298] sm:$0xff]
    %v786 = vld [vmem:[#allocation9 + $0x2a0] sm:$0xff]
    %v787 = vld [vmem:[#allocation9 + $0x2a8] sm:$0xff]
    %v788 = vld [vmem:[#allocation9 + $0x2b0] sm:$0xff]
    %v789 = vld [vmem:[#allocation9 + $0x2b8] sm:$0xff]
    %v790 = vld [vmem:[#allocation9 + $0x2c0] sm:$0xff]
    %v791 = vld [vmem:[#allocation9 + $0x2c8] sm:$0xff]
    %v792 = vld [vmem:[#allocation9 + $0x2d0] sm:$0xff]
    %v793 = vld [vmem:[#allocation9 + $0x2d8] sm:$0xff]
    %v794 = vld [vmem:[#allocation9 + $0x2e0] sm:$0xff]
    %v795 = vld [vmem:[#allocation9 + $0x2e8] sm:$0xff]
    %v796 = vld [vmem:[#allocation9 + $0x2f0] sm:$0xff]
    %v797 = vld [vmem:[#allocation9 + $0x2f8] sm:$0xff]
    %v798 = vld [vmem:[#allocation9 + $0x300] sm:$0xff]
    %v799 = vld [vmem:[#allocation9 + $0x308] sm:$0xff]
    %v800 = vld [vmem:[#allocation9 + $0x310] sm:$0xff]
    %v801 = vld [vmem:[#allocation9 + $0x318] sm:$0xff]
    %v802 = vld [vmem:[#allocation9 + $0x320] sm:$0xff]
    %v803 = vld [vmem:[#allocation9 + $0x328] sm:$0xff]
    %v804 = vld [vmem:[#allocation9 + $0x330] sm:$0xff]
    %v805 = vld [vmem:[#allocation9 + $0x338] sm:$0xff]
    %v806 = vld [vmem:[#allocation9 + $0x340] sm:$0xff]
    %v807 = vld [vmem:[#allocation9 + $0x348] sm:$0xff]
    %v808 = vld [vmem:[#allocation9 + $0x350] sm:$0xff]
    %v809 = vld [vmem:[#allocation9 + $0x358] sm:$0xff]
    %v810 = vld [vmem:[#allocation9 + $0x360] sm:$0xff]
    %v811 = vld [vmem:[#allocation9 + $0x368] sm:$0xff]
    %v812 = vld [vmem:[#allocation9 + $0x370] sm:$0xff]
    %v813 = vld [vmem:[#allocation9 + $0x378] sm:$0xff]
    %v814 = vld [vmem:[#allocation9 + $0x380] sm:$0xff]
    %v815 = vld [vmem:[#allocation9 + $0x388] sm:$0xff]
    %v816 = vld [vmem:[#allocation9 + $0x390] sm:$0xff]
    %v817 = vld [vmem:[#allocation9 + $0x398] sm:$0xff]
    %v818 = vld [vmem:[#allocation9 + $0x3a0] sm:$0xff]
    %v819 = vld [vmem:[#allocation9 + $0x3a8] sm:$0xff]
    %v820 = vld [vmem:[#allocation9 + $0x3b0] sm:$0xff]
    %v821 = vld [vmem:[#allocation9 + $0x3b8] sm:$0xff]
    %v822 = vld [vmem:[#allocation9 + $0x3c0] sm:$0xff]
    %v823 = vld [vmem:[#allocation9 + $0x3c8] sm:$0xff]
    %v824 = vld [vmem:[#allocation9 + $0x3d0] sm:$0xff]
    %v825 = vld [vmem:[#allocation9 + $0x3d8] sm:$0xff]
    %v826 = vld [vmem:[#allocation9 + $0x3e0] sm:$0xff]
    %v827 = vld [vmem:[#allocation9 + $0x3e8] sm:$0xff]
    %v828 = vld [vmem:[#allocation9 + $0x3f0] sm:$0xff]
    %v829 = vld [vmem:[#allocation9 + $0x3f8] sm:$0xff]
    %v830 = vld [vmem:[#allocation9 + $0x400] sm:$0xff]
    %v831 = vld [vmem:[#allocation9 + $0x408] sm:$0xff]
    %v832 = vld [vmem:[#allocation9 + $0x410] sm:$0xff]
    %v833 = vld [vmem:[#allocation9 + $0x418] sm:$0xff]
    %v834 = vld [vmem:[#allocation9 + $0x420] sm:$0xff]
    %v835 = vld [vmem:[#allocation9 + $0x428] sm:$0xff]
    %v836 = vld [vmem:[#allocation9 + $0x430] sm:$0xff]
    %v837 = vld [vmem:[#allocation9 + $0x438] sm:$0xff]
    %v838 = vld [vmem:[#allocation9 + $0x440] sm:$0xff]
    %v839 = vld [vmem:[#allocation9 + $0x448] sm:$0xff]
    %v840 = vld [vmem:[#allocation9 + $0x450] sm:$0xff]
    %v841 = vld [vmem:[#allocation9 + $0x458] sm:$0xff]
    %v842 = vld [vmem:[#allocation9 + $0x460] sm:$0xff]
    %v843 = vld [vmem:[#allocation9 + $0x468] sm:$0xff]
    %v844 = vld [vmem:[#allocation9 + $0x470] sm:$0xff]
    %v845 = vld [vmem:[#allocation9 + $0x478] sm:$0xff]
    %v846 = vld [vmem:[#allocation9 + $0x480] sm:$0xff]
    %v847 = vld [vmem:[#allocation9 + $0x488] sm:$0xff]
    %v848 = vld [vmem:[#allocation9 + $0x490] sm:$0xff]
    %v849 = vld [vmem:[#allocation9 + $0x498] sm:$0xff]
    %v850 = vld [vmem:[#allocation9 + $0x4a0] sm:$0xff]
    %v851 = vld [vmem:[#allocation9 + $0x4a8] sm:$0xff]
    %v852 = vld [vmem:[#allocation9 + $0x4b0] sm:$0xff]
    %v853 = vld [vmem:[#allocation9 + $0x4b8] sm:$0xff]
    %v854 = vld [vmem:[#allocation9 + $0x4c0] sm:$0xff]
    %v855 = vld [vmem:[#allocation9 + $0x4c8] sm:$0xff]
    %v856 = vld [vmem:[#allocation9 + $0x4d0] sm:$0xff]
    %v857 = vld [vmem:[#allocation9 + $0x4d8] sm:$0xff]
    %v858 = vld [vmem:[#allocation9 + $0x4e0] sm:$0xff]
    %v859 = vld [vmem:[#allocation9 + $0x4e8] sm:$0xff]
    %v860 = vld [vmem:[#allocation9 + $0x4f0] sm:$0xff]
    %v861 = vld [vmem:[#allocation9 + $0x4f8] sm:$0xff]
    %v862 = vld [vmem:[#allocation9 + $0x500] sm:$0xff]
    %v863 = vld [vmem:[#allocation9 + $0x508] sm:$0xff]
    %v864 = vld [vmem:[#allocation9 + $0x510] sm:$0xff]
    %v865 = vld [vmem:[#allocation9 + $0x518] sm:$0xff]
    %v866 = vld [vmem:[#allocation9 + $0x520] sm:$0xff]
    %v867 = vld [vmem:[#allocation9 + $0x528] sm:$0xff]
    %v868 = vld [vmem:[#allocation9 + $0x530] sm:$0xff]
    %v869 = vld [vmem:[#allocation9 + $0x538] sm:$0xff]
    %v870 = vld [vmem:[#allocation9 + $0x540] sm:$0xff]
    %v871 = vld [vmem:[#allocation9 + $0x548] sm:$0xff]
    %v872 = vld [vmem:[#allocation9 + $0x550] sm:$0xff]
    %v873 = vld [vmem:[#allocation9 + $0x558] sm:$0xff]
    %v874 = vld [vmem:[#allocation9 + $0x560] sm:$0xff]
    %v875 = vld [vmem:[#allocation9 + $0x568] sm:$0xff]
    %v876 = vld [vmem:[#allocation9 + $0x570] sm:$0xff]
    %v877 = vld [vmem:[#allocation9 + $0x578] sm:$0xff]
    %v878 = vld [vmem:[#allocation9 + $0x580] sm:$0xff]
    %v879 = vld [vmem:[#allocation9 + $0x588] sm:$0xff]
    %v880 = vld [vmem:[#allocation9 + $0x590] sm:$0xff]
    %v881 = vld [vmem:[#allocation9 + $0x598] sm:$0xff]
    %v882 = vld [vmem:[#allocation9 + $0x5a0] sm:$0xff]
    %v883 = vld [vmem:[#allocation9 + $0x5a8] sm:$0xff]
    %v884 = vld [vmem:[#allocation9 + $0x5b0] sm:$0xff]
    %v885 = vld [vmem:[#allocation9 + $0x5b8] sm:$0xff]
    %v886 = vld [vmem:[#allocation9 + $0x5c0] sm:$0xff]
    %v887 = vld [vmem:[#allocation9 + $0x5c8] sm:$0xff]
    %v888 = vld [vmem:[#allocation9 + $0x5d0] sm:$0xff]
    %v889 = vld [vmem:[#allocation9 + $0x5d8] sm:$0xff]
    %v890 = vld [vmem:[#allocation9 + $0x5e0] sm:$0xff]
    %v891 = vld [vmem:[#allocation9 + $0x5e8] sm:$0xff]
    %v892 = vld [vmem:[#allocation9 + $0x5f0] sm:$0xff]
    %v893 = vld [vmem:[#allocation9 + $0x5f8] sm:$0xff]
    %v894 = vld [vmem:[#allocation9 + $0x600] sm:$0xff]
    %v895 = vld [vmem:[#allocation9 + $0x608] sm:$0xff]
    %v896 = vld [vmem:[#allocation9 + $0x610] sm:$0xff]
    %v897 = vld [vmem:[#allocation9 + $0x618] sm:$0xff]
    %v898 = vld [vmem:[#allocation9 + $0x620] sm:$0xff]
    %v899 = vld [vmem:[#allocation9 + $0x628] sm:$0xff]
    %v900 = vld [vmem:[#allocation9 + $0x630] sm:$0xff]
    %v901 = vld [vmem:[#allocation9 + $0x638] sm:$0xff]
    %v902 = vld [vmem:[#allocation9 + $0x640] sm:$0xff]
    %v903 = vld [vmem:[#allocation9 + $0x648] sm:$0xff]
    %v904 = vld [vmem:[#allocation9 + $0x650] sm:$0xff]
    %v905 = vld [vmem:[#allocation9 + $0x658] sm:$0xff]
    %v906 = vld [vmem:[#allocation9 + $0x660] sm:$0xff]
    %v907 = vld [vmem:[#allocation9 + $0x668] sm:$0xff]
    %v908 = vld [vmem:[#allocation9 + $0x670] sm:$0xff]
    %v909 = vld [vmem:[#allocation9 + $0x678] sm:$0xff]
    %v910 = vld [vmem:[#allocation9 + $0x680] sm:$0xff]
    %v911 = vld [vmem:[#allocation9 + $0x688] sm:$0xff]
    %v912 = vld [vmem:[#allocation9 + $0x690] sm:$0xff]
    %v913 = vld [vmem:[#allocation9 + $0x698] sm:$0xff]
    %v914 = vld [vmem:[#allocation9 + $0x6a0] sm:$0xff]
    %v915 = vld [vmem:[#allocation9 + $0x6a8] sm:$0xff]
    %v916 = vld [vmem:[#allocation9 + $0x6b0] sm:$0xff]
    %v917 = vld [vmem:[#allocation9 + $0x6b8] sm:$0xff]
    %v918 = vld [vmem:[#allocation9 + $0x6c0] sm:$0xff]
    %v919 = vld [vmem:[#allocation9 + $0x6c8] sm:$0xff]
    %v920 = vld [vmem:[#allocation9 + $0x6d0] sm:$0xff]
    %v921 = vld [vmem:[#allocation9 + $0x6d8] sm:$0xff]
    %v922 = vld [vmem:[#allocation9 + $0x6e0] sm:$0xff]
    %v923 = vld [vmem:[#allocation9 + $0x6e8] sm:$0xff]
    %v924 = vld [vmem:[#allocation9 + $0x6f0] sm:$0xff]
    %v925 = vld [vmem:[#allocation9 + $0x6f8] sm:$0xff]
    %v927 = vlaneseq
    %v928 = vshrl.u32 %v927, 7
    %v929 = vsub.s32 0, %v928
    %v930 = vrot.slane %v118, %v929
    %v931 = vlaneseq
    %v932 = vshrl.u32 %v931, 7
    %v933 = vsub.s32 1, %v932
    %v934 = vrot.slane %v118, %v933
    %v935 = vlaneseq
    %v936 = vshrl.u32 %v935, 7
    %v937 = vsub.s32 2, %v936
    %v938 = vrot.slane %v118, %v937
    %v939 = vlaneseq
    %v940 = vshrl.u32 %v939, 7
    %v941 = vsub.s32 3, %v940
    %v942 = vrot.slane %v118, %v941
    %v1171 = vunpack.c.l.b16 %v702
    %v1172 = vunpack.c.h.b16 %v702
    %v1173 = vunpack.c.l.b16 %v703
    %v1174 = vunpack.c.h.b16 %v703
    %v1175 = vunpack.c.l.b16 %v704
    %v1176 = vunpack.c.h.b16 %v704
    %v1177 = vunpack.c.l.b16 %v705
    %v1178 = vunpack.c.h.b16 %v705
    %v1179 = vunpack.c.l.b16 %v706
    %v1180 = vunpack.c.h.b16 %v706
    %v1181 = vunpack.c.l.b16 %v707
    %v1182 = vunpack.c.h.b16 %v707
    %v1183 = vunpack.c.l.b16 %v708
    %v1184 = vunpack.c.h.b16 %v708
    %v1185 = vunpack.c.l.b16 %v709
    %v1186 = vunpack.c.h.b16 %v709
    %v1187 = vunpack.c.l.b16 %v710
    %v1188 = vunpack.c.h.b16 %v710
    %v1189 = vunpack.c.l.b16 %v711
    %v1190 = vunpack.c.h.b16 %v711
    %v1191 = vunpack.c.l.b16 %v712
    %v1192 = vunpack.c.h.b16 %v712
    %v1193 = vunpack.c.l.b16 %v713
    %v1194 = vunpack.c.h.b16 %v713
    %v1195 = vunpack.c.l.b16 %v714
    %v1196 = vunpack.c.h.b16 %v714
    %v1197 = vunpack.c.l.b16 %v715
    %v1198 = vunpack.c.h.b16 %v715
    %v1199 = vunpack.c.l.b16 %v716
    %v1200 = vunpack.c.h.b16 %v716
    %v1201 = vunpack.c.l.b16 %v717
    %v1202 = vunpack.c.h.b16 %v717
    %v1203 = vunpack.c.l.b16 %v718
    %v1204 = vunpack.c.h.b16 %v718
    %v1205 = vunpack.c.l.b16 %v719
    %v1206 = vunpack.c.h.b16 %v719
    %v1207 = vunpack.c.l.b16 %v720
    %v1208 = vunpack.c.h.b16 %v720
    %v1209 = vunpack.c.l.b16 %v721
    %v1210 = vunpack.c.h.b16 %v721
    %v1211 = vunpack.c.l.b16 %v722
    %v1212 = vunpack.c.h.b16 %v722
    %v1213 = vunpack.c.l.b16 %v723
    %v1214 = vunpack.c.h.b16 %v723
    %v1215 = vunpack.c.l.b16 %v724
    %v1216 = vunpack.c.h.b16 %v724
    %v1217 = vunpack.c.l.b16 %v725
    %v1218 = vunpack.c.h.b16 %v725
    %v1219 = vunpack.c.l.b16 %v726
    %v1220 = vunpack.c.h.b16 %v726
    %v1221 = vunpack.c.l.b16 %v727
    %v1222 = vunpack.c.h.b16 %v727
    %v1223 = vunpack.c.l.b16 %v728
    %v1224 = vunpack.c.h.b16 %v728
    %v1225 = vunpack.c.l.b16 %v729
    %v1226 = vunpack.c.h.b16 %v729
    %v1227 = vunpack.c.l.b16 %v730
    %v1228 = vunpack.c.h.b16 %v730
    %v1229 = vunpack.c.l.b16 %v731
    %v1230 = vunpack.c.h.b16 %v731
    %v1231 = vunpack.c.l.b16 %v732
    %v1232 = vunpack.c.h.b16 %v732
    %v1233 = vunpack.c.l.b16 %v733
    %v1234 = vunpack.c.h.b16 %v733
    %v1235 = vunpack.c.l.b16 %v734
    %v1236 = vunpack.c.h.b16 %v734
    %v1237 = vunpack.c.l.b16 %v735
    %v1238 = vunpack.c.h.b16 %v735
    %v1239 = vunpack.c.l.b16 %v736
    %v1240 = vunpack.c.h.b16 %v736
    %v1241 = vunpack.c.l.b16 %v737
    %v1242 = vunpack.c.h.b16 %v737
    %v1243 = vunpack.c.l.b16 %v738
    %v1244 = vunpack.c.h.b16 %v738
    %v1245 = vunpack.c.l.b16 %v739
    %v1246 = vunpack.c.h.b16 %v739
    %v1247 = vunpack.c.l.b16 %v740
    %v1248 = vunpack.c.h.b16 %v740
    %v1249 = vunpack.c.l.b16 %v741
    %v1250 = vunpack.c.h.b16 %v741
    %v1251 = vunpack.c.l.b16 %v742
    %v1252 = vunpack.c.h.b16 %v742
    %v1253 = vunpack.c.l.b16 %v743
    %v1254 = vunpack.c.h.b16 %v743
    %v1255 = vunpack.c.l.b16 %v744
    %v1256 = vunpack.c.h.b16 %v744
    %v1257 = vunpack.c.l.b16 %v745
    %v1258 = vunpack.c.h.b16 %v745
    %v1259 = vunpack.c.l.b16 %v746
    %v1260 = vunpack.c.h.b16 %v746
    %v1261 = vunpack.c.l.b16 %v747
    %v1262 = vunpack.c.h.b16 %v747
    %v1263 = vunpack.c.l.b16 %v748
    %v1264 = vunpack.c.h.b16 %v748
    %v1265 = vunpack.c.l.b16 %v749
    %v1266 = vunpack.c.h.b16 %v749
    %v1267 = vunpack.c.l.b16 %v750
    %v1268 = vunpack.c.h.b16 %v750
    %v1269 = vunpack.c.l.b16 %v751
    %v1270 = vunpack.c.h.b16 %v751
    %v1271 = vunpack.c.l.b16 %v752
    %v1272 = vunpack.c.h.b16 %v752
    %v1273 = vunpack.c.l.b16 %v753
    %v1274 = vunpack.c.h.b16 %v753
    %v1275 = vunpack.c.l.b16 %v754
    %v1276 = vunpack.c.h.b16 %v754
    %v1277 = vunpack.c.l.b16 %v755
    %v1278 = vunpack.c.h.b16 %v755
    %v1279 = vunpack.c.l.b16 %v756
    %v1280 = vunpack.c.h.b16 %v756
    %v1281 = vunpack.c.l.b16 %v757
    %v1282 = vunpack.c.h.b16 %v757
    %v1283 = vunpack.c.l.b16 %v758
    %v1284 = vunpack.c.h.b16 %v758
    %v1285 = vunpack.c.l.b16 %v759
    %v1286 = vunpack.c.h.b16 %v759
    %v1287 = vunpack.c.l.b16 %v760
    %v1288 = vunpack.c.h.b16 %v760
    %v1289 = vunpack.c.l.b16 %v761
    %v1290 = vunpack.c.h.b16 %v761
    %v1291 = vunpack.c.l.b16 %v762
    %v1292 = vunpack.c.h.b16 %v762
    %v1293 = vunpack.c.l.b16 %v763
    %v1294 = vunpack.c.h.b16 %v763
    %v1295 = vunpack.c.l.b16 %v764
    %v1296 = vunpack.c.h.b16 %v764
    %v1297 = vunpack.c.l.b16 %v765
    %v1298 = vunpack.c.h.b16 %v765
    %v1299 = vunpack.c.l.b16 %v766
    %v1300 = vunpack.c.h.b16 %v766
    %v1301 = vunpack.c.l.b16 %v767
    %v1302 = vunpack.c.h.b16 %v767
    %v1303 = vunpack.c.l.b16 %v768
    %v1304 = vunpack.c.h.b16 %v768
    %v1305 = vunpack.c.l.b16 %v769
    %v1306 = vunpack.c.h.b16 %v769
    %v1307 = vunpack.c.l.b16 %v770
    %v1308 = vunpack.c.h.b16 %v770
    %v1309 = vunpack.c.l.b16 %v771
    %v1310 = vunpack.c.h.b16 %v771
    %v1311 = vunpack.c.l.b16 %v772
    %v1312 = vunpack.c.h.b16 %v772
    %v1313 = vunpack.c.l.b16 %v773
    %v1314 = vunpack.c.h.b16 %v773
    %v1315 = vunpack.c.l.b16 %v774
    %v1316 = vunpack.c.h.b16 %v774
    %v1317 = vunpack.c.l.b16 %v775
    %v1318 = vunpack.c.h.b16 %v775
    %v1319 = vunpack.c.l.b16 %v776
    %v1320 = vunpack.c.h.b16 %v776
    %v1321 = vunpack.c.l.b16 %v777
    %v1322 = vunpack.c.h.b16 %v777
    %v1323 = vunpack.c.l.b16 %v778
    %v1324 = vunpack.c.h.b16 %v778
    %v1325 = vunpack.c.l.b16 %v779
    %v1326 = vunpack.c.h.b16 %v779
    %v1327 = vunpack.c.l.b16 %v780
    %v1328 = vunpack.c.h.b16 %v780
    %v1329 = vunpack.c.l.b16 %v781
    %v1330 = vunpack.c.h.b16 %v781
    %v1331 = vunpack.c.l.b16 %v782
    %v1332 = vunpack.c.h.b16 %v782
    %v1333 = vunpack.c.l.b16 %v783
    %v1334 = vunpack.c.h.b16 %v783
    %v1335 = vunpack.c.l.b16 %v784
    %v1336 = vunpack.c.h.b16 %v784
    %v1337 = vunpack.c.l.b16 %v785
    %v1338 = vunpack.c.h.b16 %v785
    %v1339 = vunpack.c.l.b16 %v786
    %v1340 = vunpack.c.h.b16 %v786
    %v1341 = vunpack.c.l.b16 %v787
    %v1342 = vunpack.c.h.b16 %v787
    %v1343 = vunpack.c.l.b16 %v788
    %v1344 = vunpack.c.h.b16 %v788
    %v1345 = vunpack.c.l.b16 %v789
    %v1346 = vunpack.c.h.b16 %v789
    %v1347 = vunpack.c.l.b16 %v790
    %v1348 = vunpack.c.h.b16 %v790
    %v1349 = vunpack.c.l.b16 %v791
    %v1350 = vunpack.c.h.b16 %v791
    %v1351 = vunpack.c.l.b16 %v792
    %v1352 = vunpack.c.h.b16 %v792
    %v1353 = vunpack.c.l.b16 %v793
    %v1354 = vunpack.c.h.b16 %v793
    %v1355 = vunpack.c.l.b16 %v794
    %v1356 = vunpack.c.h.b16 %v794
    %v1357 = vunpack.c.l.b16 %v795
    %v1358 = vunpack.c.h.b16 %v795
    %v1359 = vunpack.c.l.b16 %v796
    %v1360 = vunpack.c.h.b16 %v796
    %v1361 = vunpack.c.l.b16 %v797
    %v1362 = vunpack.c.h.b16 %v797
    %v1363 = vunpack.c.l.b16 %v798
    %v1364 = vunpack.c.h.b16 %v798
    %v1365 = vunpack.c.l.b16 %v799
    %v1366 = vunpack.c.h.b16 %v799
    %v1367 = vunpack.c.l.b16 %v800
    %v1368 = vunpack.c.h.b16 %v800
    %v1369 = vunpack.c.l.b16 %v801
    %v1370 = vunpack.c.h.b16 %v801
    %v1371 = vunpack.c.l.b16 %v802
    %v1372 = vunpack.c.h.b16 %v802
    %v1373 = vunpack.c.l.b16 %v803
    %v1374 = vunpack.c.h.b16 %v803
    %v1375 = vunpack.c.l.b16 %v804
    %v1376 = vunpack.c.h.b16 %v804
    %v1377 = vunpack.c.l.b16 %v805
    %v1378 = vunpack.c.h.b16 %v805
    %v1379 = vunpack.c.l.b16 %v806
    %v1380 = vunpack.c.h.b16 %v806
    %v1381 = vunpack.c.l.b16 %v807
    %v1382 = vunpack.c.h.b16 %v807
    %v1383 = vunpack.c.l.b16 %v808
    %v1384 = vunpack.c.h.b16 %v808
    %v1385 = vunpack.c.l.b16 %v809
    %v1386 = vunpack.c.h.b16 %v809
    %v1387 = vunpack.c.l.b16 %v810
    %v1388 = vunpack.c.h.b16 %v810
    %v1389 = vunpack.c.l.b16 %v811
    %v1390 = vunpack.c.h.b16 %v811
    %v1391 = vunpack.c.l.b16 %v812
    %v1392 = vunpack.c.h.b16 %v812
    %v1393 = vunpack.c.l.b16 %v813
    %v1394 = vunpack.c.h.b16 %v813
    %v1395 = vunpack.c.l.b16 %v814
    %v1396 = vunpack.c.h.b16 %v814
    %v1397 = vunpack.c.l.b16 %v815
    %v1398 = vunpack.c.h.b16 %v815
    %v1399 = vunpack.c.l.b16 %v816
    %v1400 = vunpack.c.h.b16 %v816
    %v1401 = vunpack.c.l.b16 %v817
    %v1402 = vunpack.c.h.b16 %v817
    %v1403 = vunpack.c.l.b16 %v818
    %v1404 = vunpack.c.h.b16 %v818
    %v1405 = vunpack.c.l.b16 %v819
    %v1406 = vunpack.c.h.b16 %v819
    %v1407 = vunpack.c.l.b16 %v820
    %v1408 = vunpack.c.h.b16 %v820
    %v1409 = vunpack.c.l.b16 %v821
    %v1410 = vunpack.c.h.b16 %v821
    %v1411 = vunpack.c.l.b16 %v822
    %v1412 = vunpack.c.h.b16 %v822
    %v1413 = vunpack.c.l.b16 %v823
    %v1414 = vunpack.c.h.b16 %v823
    %v1415 = vunpack.c.l.b16 %v824
    %v1416 = vunpack.c.h.b16 %v824
    %v1417 = vunpack.c.l.b16 %v825
    %v1418 = vunpack.c.h.b16 %v825
    %v1419 = vunpack.c.l.b16 %v826
    %v1420 = vunpack.c.h.b16 %v826
    %v1421 = vunpack.c.l.b16 %v827
    %v1422 = vunpack.c.h.b16 %v827
    %v1423 = vunpack.c.l.b16 %v828
    %v1424 = vunpack.c.h.b16 %v828
    %v1425 = vunpack.c.l.b16 %v829
    %v1426 = vunpack.c.h.b16 %v829
    %v1427 = vunpack.c.l.b16 %v830
    %v1428 = vunpack.c.h.b16 %v830
    %v1429 = vunpack.c.l.b16 %v831
    %v1430 = vunpack.c.h.b16 %v831
    %v1431 = vunpack.c.l.b16 %v832
    %v1432 = vunpack.c.h.b16 %v832
    %v1433 = vunpack.c.l.b16 %v833
    %v1434 = vunpack.c.h.b16 %v833
    %v1435 = vunpack.c.l.b16 %v834
    %v1436 = vunpack.c.h.b16 %v834
    %v1437 = vunpack.c.l.b16 %v835
    %v1438 = vunpack.c.h.b16 %v835
    %v1439 = vunpack.c.l.b16 %v836
    %v1440 = vunpack.c.h.b16 %v836
    %v1441 = vunpack.c.l.b16 %v837
    %v1442 = vunpack.c.h.b16 %v837
    %v1443 = vunpack.c.l.b16 %v838
    %v1444 = vunpack.c.h.b16 %v838
    %v1445 = vunpack.c.l.b16 %v839
    %v1446 = vunpack.c.h.b16 %v839
    %v1447 = vunpack.c.l.b16 %v840
    %v1448 = vunpack.c.h.b16 %v840
    %v1449 = vunpack.c.l.b16 %v841
    %v1450 = vunpack.c.h.b16 %v841
    %v1451 = vunpack.c.l.b16 %v842
    %v1452 = vunpack.c.h.b16 %v842
    %v1453 = vunpack.c.l.b16 %v843
    %v1454 = vunpack.c.h.b16 %v843
    %v1455 = vunpack.c.l.b16 %v844
    %v1456 = vunpack.c.h.b16 %v844
    %v1457 = vunpack.c.l.b16 %v845
    %v1458 = vunpack.c.h.b16 %v845
    %v1459 = vunpack.c.l.b16 %v846
    %v1460 = vunpack.c.h.b16 %v846
    %v1461 = vunpack.c.l.b16 %v847
    %v1462 = vunpack.c.h.b16 %v847
    %v1463 = vunpack.c.l.b16 %v848
    %v1464 = vunpack.c.h.b16 %v848
    %v1465 = vunpack.c.l.b16 %v849
    %v1466 = vunpack.c.h.b16 %v849
    %v1467 = vunpack.c.l.b16 %v850
    %v1468 = vunpack.c.h.b16 %v850
    %v1469 = vunpack.c.l.b16 %v851
    %v1470 = vunpack.c.h.b16 %v851
    %v1471 = vunpack.c.l.b16 %v852
    %v1472 = vunpack.c.h.b16 %v852
    %v1473 = vunpack.c.l.b16 %v853
    %v1474 = vunpack.c.h.b16 %v853
    %v1475 = vunpack.c.l.b16 %v854
    %v1476 = vunpack.c.h.b16 %v854
    %v1477 = vunpack.c.l.b16 %v855
    %v1478 = vunpack.c.h.b16 %v855
    %v1479 = vunpack.c.l.b16 %v856
    %v1480 = vunpack.c.h.b16 %v856
    %v1481 = vunpack.c.l.b16 %v857
    %v1482 = vunpack.c.h.b16 %v857
    %v1483 = vunpack.c.l.b16 %v858
    %v1484 = vunpack.c.h.b16 %v858
    %v1485 = vunpack.c.l.b16 %v859
    %v1486 = vunpack.c.h.b16 %v859
    %v1487 = vunpack.c.l.b16 %v860
    %v1488 = vunpack.c.h.b16 %v860
    %v1489 = vunpack.c.l.b16 %v861
    %v1490 = vunpack.c.h.b16 %v861
    %v1491 = vunpack.c.l.b16 %v862
    %v1492 = vunpack.c.h.b16 %v862
    %v1493 = vunpack.c.l.b16 %v863
    %v1494 = vunpack.c.h.b16 %v863
    %v1495 = vunpack.c.l.b16 %v864
    %v1496 = vunpack.c.h.b16 %v864
    %v1497 = vunpack.c.l.b16 %v865
    %v1498 = vunpack.c.h.b16 %v865
    %v1499 = vunpack.c.l.b16 %v866
    %v1500 = vunpack.c.h.b16 %v866
    %v1501 = vunpack.c.l.b16 %v867
    %v1502 = vunpack.c.h.b16 %v867
    %v1503 = vunpack.c.l.b16 %v868
    %v1504 = vunpack.c.h.b16 %v868
    %v1505 = vunpack.c.l.b16 %v869
    %v1506 = vunpack.c.h.b16 %v869
    %v1507 = vunpack.c.l.b16 %v870
    %v1508 = vunpack.c.h.b16 %v870
    %v1509 = vunpack.c.l.b16 %v871
    %v1510 = vunpack.c.h.b16 %v871
    %v1511 = vunpack.c.l.b16 %v872
    %v1512 = vunpack.c.h.b16 %v872
    %v1513 = vunpack.c.l.b16 %v873
    %v1514 = vunpack.c.h.b16 %v873
    %v1515 = vunpack.c.l.b16 %v874
    %v1516 = vunpack.c.h.b16 %v874
    %v1517 = vunpack.c.l.b16 %v875
    %v1518 = vunpack.c.h.b16 %v875
    %v1519 = vunpack.c.l.b16 %v876
    %v1520 = vunpack.c.h.b16 %v876
    %v1521 = vunpack.c.l.b16 %v877
    %v1522 = vunpack.c.h.b16 %v877
    %v1523 = vunpack.c.l.b16 %v878
    %v1524 = vunpack.c.h.b16 %v878
    %v1525 = vunpack.c.l.b16 %v879
    %v1526 = vunpack.c.h.b16 %v879
    %v1527 = vunpack.c.l.b16 %v880
    %v1528 = vunpack.c.h.b16 %v880
    %v1529 = vunpack.c.l.b16 %v881
    %v1530 = vunpack.c.h.b16 %v881
    %v1531 = vunpack.c.l.b16 %v882
    %v1532 = vunpack.c.h.b16 %v882
    %v1533 = vunpack.c.l.b16 %v883
    %v1534 = vunpack.c.h.b16 %v883
    %v1535 = vunpack.c.l.b16 %v884
    %v1536 = vunpack.c.h.b16 %v884
    %v1537 = vunpack.c.l.b16 %v885
    %v1538 = vunpack.c.h.b16 %v885
    %v1539 = vunpack.c.l.b16 %v886
    %v1540 = vunpack.c.h.b16 %v886
    %v1541 = vunpack.c.l.b16 %v887
    %v1542 = vunpack.c.h.b16 %v887
    %v1543 = vunpack.c.l.b16 %v888
    %v1544 = vunpack.c.h.b16 %v888
    %v1545 = vunpack.c.l.b16 %v889
    %v1546 = vunpack.c.h.b16 %v889
    %v1547 = vunpack.c.l.b16 %v890
    %v1548 = vunpack.c.h.b16 %v890
    %v1549 = vunpack.c.l.b16 %v891
    %v1550 = vunpack.c.h.b16 %v891
    %v1551 = vunpack.c.l.b16 %v892
    %v1552 = vunpack.c.h.b16 %v892
    %v1553 = vunpack.c.l.b16 %v893
    %v1554 = vunpack.c.h.b16 %v893
    %v1555 = vunpack.c.l.b16 %v894
    %v1556 = vunpack.c.h.b16 %v894
    %v1557 = vunpack.c.l.b16 %v895
    %v1558 = vunpack.c.h.b16 %v895
    %v1559 = vunpack.c.l.b16 %v896
    %v1560 = vunpack.c.h.b16 %v896
    %v1561 = vunpack.c.l.b16 %v897
    %v1562 = vunpack.c.h.b16 %v897
    %v1563 = vunpack.c.l.b16 %v898
    %v1564 = vunpack.c.h.b16 %v898
    %v1565 = vunpack.c.l.b16 %v899
    %v1566 = vunpack.c.h.b16 %v899
    %v1567 = vunpack.c.l.b16 %v900
    %v1568 = vunpack.c.h.b16 %v900
    %v1569 = vunpack.c.l.b16 %v901
    %v1570 = vunpack.c.h.b16 %v901
    %v1571 = vunpack.c.l.b16 %v902
    %v1572 = vunpack.c.h.b16 %v902
    %v1573 = vunpack.c.l.b16 %v903
    %v1574 = vunpack.c.h.b16 %v903
    %v1575 = vunpack.c.l.b16 %v904
    %v1576 = vunpack.c.h.b16 %v904
    %v1577 = vunpack.c.l.b16 %v905
    %v1578 = vunpack.c.h.b16 %v905
    %v1579 = vunpack.c.l.b16 %v906
    %v1580 = vunpack.c.h.b16 %v906
    %v1581 = vunpack.c.l.b16 %v907
    %v1582 = vunpack.c.h.b16 %v907
    %v1583 = vunpack.c.l.b16 %v908
    %v1584 = vunpack.c.h.b16 %v908
    %v1585 = vunpack.c.l.b16 %v909
    %v1586 = vunpack.c.h.b16 %v909
    %v1587 = vunpack.c.l.b16 %v910
    %v1588 = vunpack.c.h.b16 %v910
    %v1589 = vunpack.c.l.b16 %v911
    %v1590 = vunpack.c.h.b16 %v911
    %v1591 = vunpack.c.l.b16 %v912
    %v1592 = vunpack.c.h.b16 %v912
    %v1593 = vunpack.c.l.b16 %v913
    %v1594 = vunpack.c.h.b16 %v913
    %v1595 = vunpack.c.l.b16 %v914
    %v1596 = vunpack.c.h.b16 %v914
    %v1597 = vunpack.c.l.b16 %v915
    %v1598 = vunpack.c.h.b16 %v915
    %v1599 = vunpack.c.l.b16 %v916
    %v1600 = vunpack.c.h.b16 %v916
    %v1601 = vunpack.c.l.b16 %v917
    %v1602 = vunpack.c.h.b16 %v917
    %v1603 = vunpack.c.l.b16 %v918
    %v1604 = vunpack.c.h.b16 %v918
    %v1605 = vunpack.c.l.b16 %v919
    %v1606 = vunpack.c.h.b16 %v919
    %v1607 = vunpack.c.l.b16 %v920
    %v1608 = vunpack.c.h.b16 %v920
    %v1609 = vunpack.c.l.b16 %v921
    %v1610 = vunpack.c.h.b16 %v921
    %v1611 = vunpack.c.l.b16 %v922
    %v1612 = vunpack.c.h.b16 %v922
    %v1613 = vunpack.c.l.b16 %v923
    %v1614 = vunpack.c.h.b16 %v923
    %v1615 = vunpack.c.l.b16 %v924
    %v1616 = vunpack.c.h.b16 %v924
    %v1617 = vunpack.c.l.b16 %v925
    %v1618 = vunpack.c.h.b16 %v925
    %v1619 = vpack.c.b16 %v1175, %v1171
    %v1620 = vpack.c.b16 %v1176, %v1172
    %v1621 = vpack.c.b16 %v1177, %v1173
    %v1622 = vpack.c.b16 %v1178, %v1174
    %v1623 = vpack.c.b16 %v1183, %v1179
    %v1624 = vpack.c.b16 %v1184, %v1180
    %v1625 = vpack.c.b16 %v1185, %v1181
    %v1626 = vpack.c.b16 %v1186, %v1182
    %v1627 = vpack.c.b16 %v1191, %v1187
    %v1628 = vpack.c.b16 %v1192, %v1188
    %v1629 = vpack.c.b16 %v1193, %v1189
    %v1630 = vpack.c.b16 %v1194, %v1190
    %v1631 = vpack.c.b16 %v1199, %v1195
    %v1632 = vpack.c.b16 %v1200, %v1196
    %v1633 = vpack.c.b16 %v1201, %v1197
    %v1634 = vpack.c.b16 %v1202, %v1198
    %v1635 = vpack.c.b16 %v1207, %v1203
    %v1636 = vpack.c.b16 %v1208, %v1204
    %v1637 = vpack.c.b16 %v1209, %v1205
    %v1638 = vpack.c.b16 %v1210, %v1206
    %v1639 = vpack.c.b16 %v1215, %v1211
    %v1640 = vpack.c.b16 %v1216, %v1212
    %v1641 = vpack.c.b16 %v1217, %v1213
    %v1642 = vpack.c.b16 %v1218, %v1214
    %v1643 = vpack.c.b16 %v1223, %v1219
    %v1644 = vpack.c.b16 %v1224, %v1220
    %v1645 = vpack.c.b16 %v1225, %v1221
    %v1646 = vpack.c.b16 %v1226, %v1222
    %v1647 = vpack.c.b16 %v1231, %v1227
    %v1648 = vpack.c.b16 %v1232, %v1228
    %v1649 = vpack.c.b16 %v1233, %v1229
    %v1650 = vpack.c.b16 %v1234, %v1230
    %v1651 = vpack.c.b16 %v1239, %v1235
    %v1652 = vpack.c.b16 %v1240, %v1236
    %v1653 = vpack.c.b16 %v1241, %v1237
    %v1654 = vpack.c.b16 %v1242, %v1238
    %v1655 = vpack.c.b16 %v1247, %v1243
    %v1656 = vpack.c.b16 %v1248, %v1244
    %v1657 = vpack.c.b16 %v1249, %v1245
    %v1658 = vpack.c.b16 %v1250, %v1246
    %v1659 = vpack.c.b16 %v1255, %v1251
    %v1660 = vpack.c.b16 %v1256, %v1252
    %v1661 = vpack.c.b16 %v1257, %v1253
    %v1662 = vpack.c.b16 %v1258, %v1254
    %v1663 = vpack.c.b16 %v1263, %v1259
    %v1664 = vpack.c.b16 %v1264, %v1260
    %v1665 = vpack.c.b16 %v1265, %v1261
    %v1666 = vpack.c.b16 %v1266, %v1262
    %v1667 = vpack.c.b16 %v1271, %v1267
    %v1668 = vpack.c.b16 %v1272, %v1268
    %v1669 = vpack.c.b16 %v1273, %v1269
    %v1670 = vpack.c.b16 %v1274, %v1270
    %v1671 = vpack.c.b16 %v1279, %v1275
    %v1672 = vpack.c.b16 %v1280, %v1276
    %v1673 = vpack.c.b16 %v1281, %v1277
    %v1674 = vpack.c.b16 %v1282, %v1278
    %v1675 = vpack.c.b16 %v1287, %v1283
    %v1676 = vpack.c.b16 %v1288, %v1284
    %v1677 = vpack.c.b16 %v1289, %v1285
    %v1678 = vpack.c.b16 %v1290, %v1286
    %v1679 = vpack.c.b16 %v1295, %v1291
    %v1680 = vpack.c.b16 %v1296, %v1292
    %v1681 = vpack.c.b16 %v1297, %v1293
    %v1682 = vpack.c.b16 %v1298, %v1294
    %v1683 = vpack.c.b16 %v1303, %v1299
    %v1684 = vpack.c.b16 %v1304, %v1300
    %v1685 = vpack.c.b16 %v1305, %v1301
    %v1686 = vpack.c.b16 %v1306, %v1302
    %v1687 = vpack.c.b16 %v1311, %v1307
    %v1688 = vpack.c.b16 %v1312, %v1308
    %v1689 = vpack.c.b16 %v1313, %v1309
    %v1690 = vpack.c.b16 %v1314, %v1310
    %v1691 = vpack.c.b16 %v1319, %v1315
    %v1692 = vpack.c.b16 %v1320, %v1316
    %v1693 = vpack.c.b16 %v1321, %v1317
    %v1694 = vpack.c.b16 %v1322, %v1318
    %v1695 = vpack.c.b16 %v1327, %v1323
    %v1696 = vpack.c.b16 %v1328, %v1324
    %v1697 = vpack.c.b16 %v1329, %v1325
    %v1698 = vpack.c.b16 %v1330, %v1326
    %v1699 = vpack.c.b16 %v1335, %v1331
    %v1700 = vpack.c.b16 %v1336, %v1332
    %v1701 = vpack.c.b16 %v1337, %v1333
    %v1702 = vpack.c.b16 %v1338, %v1334
    %v1703 = vpack.c.b16 %v1343, %v1339
    %v1704 = vpack.c.b16 %v1344, %v1340
    %v1705 = vpack.c.b16 %v1345, %v1341
    %v1706 = vpack.c.b16 %v1346, %v1342
    %v1707 = vpack.c.b16 %v1351, %v1347
    %v1708 = vpack.c.b16 %v1352, %v1348
    %v1709 = vpack.c.b16 %v1353, %v1349
    %v1710 = vpack.c.b16 %v1354, %v1350
    %v1711 = vpack.c.b16 %v1359, %v1355
    %v1712 = vpack.c.b16 %v1360, %v1356
    %v1713 = vpack.c.b16 %v1361, %v1357
    %v1714 = vpack.c.b16 %v1362, %v1358
    %v1715 = vpack.c.b16 %v1367, %v1363
    %v1716 = vpack.c.b16 %v1368, %v1364
    %v1717 = vpack.c.b16 %v1369, %v1365
    %v1718 = vpack.c.b16 %v1370, %v1366
    %v1719 = vpack.c.b16 %v1375, %v1371
    %v1720 = vpack.c.b16 %v1376, %v1372
    %v1721 = vpack.c.b16 %v1377, %v1373
    %v1722 = vpack.c.b16 %v1378, %v1374
    %v1723 = vpack.c.b16 %v1383, %v1379
    %v1724 = vpack.c.b16 %v1384, %v1380
    %v1725 = vpack.c.b16 %v1385, %v1381
    %v1726 = vpack.c.b16 %v1386, %v1382
    %v1727 = vpack.c.b16 %v1391, %v1387
    %v1728 = vpack.c.b16 %v1392, %v1388
    %v1729 = vpack.c.b16 %v1393, %v1389
    %v1730 = vpack.c.b16 %v1394, %v1390
    %v1731 = vpack.c.b16 %v1399, %v1395
    %v1732 = vpack.c.b16 %v1400, %v1396
    %v1733 = vpack.c.b16 %v1401, %v1397
    %v1734 = vpack.c.b16 %v1402, %v1398
    %v1735 = vpack.c.b16 %v1407, %v1403
    %v1736 = vpack.c.b16 %v1408, %v1404
    %v1737 = vpack.c.b16 %v1409, %v1405
    %v1738 = vpack.c.b16 %v1410, %v1406
    %v1739 = vpack.c.b16 %v1415, %v1411
    %v1740 = vpack.c.b16 %v1416, %v1412
    %v1741 = vpack.c.b16 %v1417, %v1413
    %v1742 = vpack.c.b16 %v1418, %v1414
    %v1743 = vpack.c.b16 %v1423, %v1419
    %v1744 = vpack.c.b16 %v1424, %v1420
    %v1745 = vpack.c.b16 %v1425, %v1421
    %v1746 = vpack.c.b16 %v1426, %v1422
    %v1747 = vpack.c.b16 %v1431, %v1427
    %v1748 = vpack.c.b16 %v1432, %v1428
    %v1749 = vpack.c.b16 %v1433, %v1429
    %v1750 = vpack.c.b16 %v1434, %v1430
    %v1751 = vpack.c.b16 %v1439, %v1435
    %v1752 = vpack.c.b16 %v1440, %v1436
    %v1753 = vpack.c.b16 %v1441, %v1437
    %v1754 = vpack.c.b16 %v1442, %v1438
    %v1755 = vpack.c.b16 %v1447, %v1443
    %v1756 = vpack.c.b16 %v1448, %v1444
    %v1757 = vpack.c.b16 %v1449, %v1445
    %v1758 = vpack.c.b16 %v1450, %v1446
    %v1759 = vpack.c.b16 %v1455, %v1451
    %v1760 = vpack.c.b16 %v1456, %v1452
    %v1761 = vpack.c.b16 %v1457, %v1453
    %v1762 = vpack.c.b16 %v1458, %v1454
    %v1763 = vpack.c.b16 %v1463, %v1459
    %v1764 = vpack.c.b16 %v1464, %v1460
    %v1765 = vpack.c.b16 %v1465, %v1461
    %v1766 = vpack.c.b16 %v1466, %v1462
    %v1767 = vpack.c.b16 %v1471, %v1467
    %v1768 = vpack.c.b16 %v1472, %v1468
    %v1769 = vpack.c.b16 %v1473, %v1469
    %v1770 = vpack.c.b16 %v1474, %v1470
    %v1771 = vpack.c.b16 %v1479, %v1475
    %v1772 = vpack.c.b16 %v1480, %v1476
    %v1773 = vpack.c.b16 %v1481, %v1477
    %v1774 = vpack.c.b16 %v1482, %v1478
    %v1775 = vpack.c.b16 %v1487, %v1483
    %v1776 = vpack.c.b16 %v1488, %v1484
    %v1777 = vpack.c.b16 %v1489, %v1485
    %v1778 = vpack.c.b16 %v1490, %v1486
    %v1779 = vpack.c.b16 %v1495, %v1491
    %v1780 = vpack.c.b16 %v1496, %v1492
    %v1781 = vpack.c.b16 %v1497, %v1493
    %v1782 = vpack.c.b16 %v1498, %v1494
    %v1783 = vpack.c.b16 %v1503, %v1499
    %v1784 = vpack.c.b16 %v1504, %v1500
    %v1785 = vpack.c.b16 %v1505, %v1501
    %v1786 = vpack.c.b16 %v1506, %v1502
    %v1787 = vpack.c.b16 %v1511, %v1507
    %v1788 = vpack.c.b16 %v1512, %v1508
    %v1789 = vpack.c.b16 %v1513, %v1509
    %v1790 = vpack.c.b16 %v1514, %v1510
    %v1791 = vpack.c.b16 %v1519, %v1515
    %v1792 = vpack.c.b16 %v1520, %v1516
    %v1793 = vpack.c.b16 %v1521, %v1517
    %v1794 = vpack.c.b16 %v1522, %v1518
    %v1795 = vpack.c.b16 %v1527, %v1523
    %v1796 = vpack.c.b16 %v1528, %v1524
    %v1797 = vpack.c.b16 %v1529, %v1525
    %v1798 = vpack.c.b16 %v1530, %v1526
    %v1799 = vpack.c.b16 %v1535, %v1531
    %v1800 = vpack.c.b16 %v1536, %v1532
    %v1801 = vpack.c.b16 %v1537, %v1533
    %v1802 = vpack.c.b16 %v1538, %v1534
    %v1803 = vpack.c.b16 %v1543, %v1539
    %v1804 = vpack.c.b16 %v1544, %v1540
    %v1805 = vpack.c.b16 %v1545, %v1541
    %v1806 = vpack.c.b16 %v1546, %v1542
    %v1807 = vpack.c.b16 %v1551, %v1547
    %v1808 = vpack.c.b16 %v1552, %v1548
    %v1809 = vpack.c.b16 %v1553, %v1549
    %v1810 = vpack.c.b16 %v1554, %v1550
    %v1811 = vpack.c.b16 %v1559, %v1555
    %v1812 = vpack.c.b16 %v1560, %v1556
    %v1813 = vpack.c.b16 %v1561, %v1557
    %v1814 = vpack.c.b16 %v1562, %v1558
    %v1815 = vpack.c.b16 %v1567, %v1563
    %v1816 = vpack.c.b16 %v1568, %v1564
    %v1817 = vpack.c.b16 %v1569, %v1565
    %v1818 = vpack.c.b16 %v1570, %v1566
    %v1819 = vpack.c.b16 %v1575, %v1571
    %v1820 = vpack.c.b16 %v1576, %v1572
    %v1821 = vpack.c.b16 %v1577, %v1573
    %v1822 = vpack.c.b16 %v1578, %v1574
    %v1823 = vpack.c.b16 %v1583, %v1579
    %v1824 = vpack.c.b16 %v1584, %v1580
    %v1825 = vpack.c.b16 %v1585, %v1581
    %v1826 = vpack.c.b16 %v1586, %v1582
    %v1827 = vpack.c.b16 %v1591, %v1587
    %v1828 = vpack.c.b16 %v1592, %v1588
    %v1829 = vpack.c.b16 %v1593, %v1589
    %v1830 = vpack.c.b16 %v1594, %v1590
    %v1831 = vpack.c.b16 %v1599, %v1595
    %v1832 = vpack.c.b16 %v1600, %v1596
    %v1833 = vpack.c.b16 %v1601, %v1597
    %v1834 = vpack.c.b16 %v1602, %v1598
    %v1835 = vpack.c.b16 %v1607, %v1603
    %v1836 = vpack.c.b16 %v1608, %v1604
    %v1837 = vpack.c.b16 %v1609, %v1605
    %v1838 = vpack.c.b16 %v1610, %v1606
    %v1839 = vpack.c.b16 %v1615, %v1611
    %v1840 = vpack.c.b16 %v1616, %v1612
    %v1841 = vpack.c.b16 %v1617, %v1613
    %v1842 = vpack.c.b16 %v1618, %v1614
    %2067 = vmatprep.subr.bf16.mxu0 %v1620
    %2068 = vmatpush1.bf16.msra.mxu0 %v1619
    %2069 = vmatprep.subr.bf16.mxu0 %v1624
    %2070 = vmatpush1.bf16.msra.mxu0 %v1623
    %2071 = vmatprep.subr.bf16.mxu0 %v1628
    %2072 = vmatpush1.bf16.msra.mxu0 %v1627
    %2073 = vmatprep.subr.bf16.mxu0 %v1632
    %2074 = vmatpush1.bf16.msra.mxu0 %v1631
    %2075 = vmatprep.subr.bf16.mxu0 %v1636
    %2076 = vmatpush1.bf16.msra.mxu0 %v1635
    %2077 = vmatprep.subr.bf16.mxu0 %v1640
    %2078 = vmatpush1.bf16.msra.mxu0 %v1639
    %2079 = vmatprep.subr.bf16.mxu0 %v1644
    %2080 = vmatpush1.bf16.msra.mxu0 %v1643
    %2081 = vmatprep.subr.bf16.mxu0 %v1648
    %2082 = vmatpush1.bf16.msra.mxu0 %v1647
    %2083 = vmatprep.subr.bf16.mxu0 %v1652
    %2084 = vmatpush1.bf16.msra.mxu0 %v1651
    %2085 = vmatprep.subr.bf16.mxu0 %v1656
    %2086 = vmatpush1.bf16.msra.mxu0 %v1655
    %2087 = vmatprep.subr.bf16.mxu0 %v1660
    %2088 = vmatpush1.bf16.msra.mxu0 %v1659
    %2089 = vmatprep.subr.bf16.mxu0 %v1664
    %2090 = vmatpush1.bf16.msra.mxu0 %v1663
    %2091 = vmatprep.subr.bf16.mxu0 %v1668
    %2092 = vmatpush1.bf16.msra.mxu0 %v1667
    %2093 = vmatprep.subr.bf16.mxu0 %v1672
    %2094 = vmatpush1.bf16.msra.mxu0 %v1671
    %2095 = vmatprep.subr.bf16.mxu0 %v1676
    %2096 = vmatpush1.bf16.msra.mxu0 %v1675
    %2097 = vmatprep.subr.bf16.mxu0 %v1680
    %2098 = vmatpush1.bf16.msra.mxu0 %v1679
    %2099 = vmatprep.mubr.bf16.mxu0 %v696
    %2100 = vmatmul.mubr.bf16.gmra.mrb[0].mxu0 %v695
    %v2101 = vpop.f32.mrb[0].mxu0
    %v2102 = vadd.f32 %v930, %v2101
    %v2103 = vpop.f32.mrb[0].mxu0
    %v2104 = vadd.f32 %v934, %v2103
    %v2105 = vpop.f32.mrb[0].mxu0
    %v2106 = vpop.f32.mrb[0].mxu0
    %2107 = vdwg.mxu0
    %2108 = vmatprep.subr.bf16.mxu0 %v1684
    %2109 = vmatpush1.bf16.msra.mxu0 %v1683
    %2110 = vmatprep.subr.bf16.mxu0 %v1688
    %2111 = vmatpush1.bf16.msra.mxu0 %v1687
    %2112 = vmatprep.subr.bf16.mxu0 %v1692
    %2113 = vmatpush1.bf16.msra.mxu0 %v1691
    %2114 = vmatprep.subr.bf16.mxu0 %v1696
    %2115 = vmatpush1.bf16.msra.mxu0 %v1695
    %2116 = vmatprep.subr.bf16.mxu0 %v1700
    %2117 = vmatpush1.bf16.msra.mxu0 %v1699
    %2118 = vmatprep.subr.bf16.mxu0 %v1704
    %2119 = vmatpush1.bf16.msra.mxu0 %v1703
    %2120 = vmatprep.subr.bf16.mxu0 %v1708
    %2121 = vmatpush1.bf16.msra.mxu0 %v1707
    %2122 = vmatprep.subr.bf16.mxu0 %v1712
    %2123 = vmatpush1.bf16.msra.mxu0 %v1711
    %2124 = vmatprep.subr.bf16.mxu0 %v1716
    %2125 = vmatpush1.bf16.msra.mxu0 %v1715
    %2126 = vmatprep.subr.bf16.mxu0 %v1720
    %2127 = vmatpush1.bf16.msra.mxu0 %v1719
    %2128 = vmatprep.subr.bf16.mxu0 %v1724
    %2129 = vmatpush1.bf16.msra.mxu0 %v1723
    %2130 = vmatprep.subr.bf16.mxu0 %v1728
    %2131 = vmatpush1.bf16.msra.mxu0 %v1727
    %2132 = vmatprep.subr.bf16.mxu0 %v1732
    %2133 = vmatpush1.bf16.msra.mxu0 %v1731
    %2134 = vmatprep.subr.bf16.mxu0 %v1736
    %2135 = vmatpush1.bf16.msra.mxu0 %v1735
    %2136 = vmatprep.subr.bf16.mxu0 %v1740
    %2137 = vmatpush1.bf16.msra.mxu0 %v1739
    %2138 = vmatprep.subr.bf16.mxu0 %v1744
    %2139 = vmatpush1.bf16.msra.mxu0 %v1743
    %2140 = vmatprep.mubr.bf16.mxu0 %v698
    %2141 = vmatmul.mubr.bf16.gmra.mrb[0].mxu0 %v697
    %v2142 = vpop.f32.mrb[0].mxu0
    %v2143 = vadd.f32 %v2102, %v2142
    %v2144 = vpop.f32.mrb[0].mxu0
    %v2145 = vadd.f32 %v2104, %v2144
    %v2146 = vpop.f32.mrb[0].mxu0
    %v2147 = vpop.f32.mrb[0].mxu0
    %2148 = vdwg.mxu0
    %2149 = vmatprep.subr.bf16.mxu0 %v1748
    %2150 = vmatpush1.bf16.msra.mxu0 %v1747
    %2151 = vmatprep.subr.bf16.mxu0 %v1752
    %2152 = vmatpush1.bf16.msra.mxu0 %v1751
    %2153 = vmatprep.subr.bf16.mxu0 %v1756
    %2154 = vmatpush1.bf16.msra.mxu0 %v1755
    %2155 = vmatprep.subr.bf16.mxu0 %v1760
    %2156 = vmatpush1.bf16.msra.mxu0 %v1759
    %2157 = vmatprep.subr.bf16.mxu0 %v1764
    %2158 = vmatpush1.bf16.msra.mxu0 %v1763
    %2159 = vmatprep.subr.bf16.mxu0 %v1768
    %2160 = vmatpush1.bf16.msra.mxu0 %v1767
    %2161 = vmatprep.subr.bf16.mxu0 %v1772
    %2162 = vmatpush1.bf16.msra.mxu0 %v1771
    %2163 = vmatprep.subr.bf16.mxu0 %v1776
    %2164 = vmatpush1.bf16.msra.mxu0 %v1775
    %2165 = vmatprep.subr.bf16.mxu0 %v1780
    %2166 = vmatpush1.bf16.msra.mxu0 %v1779
    %2167 = vmatprep.subr.bf16.mxu0 %v1784
    %2168 = vmatpush1.bf16.msra.mxu0 %v1783
    %2169 = vmatprep.subr.bf16.mxu0 %v1788
    %2170 = vmatpush1.bf16.msra.mxu0 %v1787
    %2171 = vmatprep.subr.bf16.mxu0 %v1792
    %2172 = vmatpush1.bf16.msra.mxu0 %v1791
    %2173 = vmatprep.subr.bf16.mxu0 %v1796
    %2174 = vmatpush1.bf16.msra.mxu0 %v1795
    %2175 = vmatprep.subr.bf16.mxu0 %v1800
    %2176 = vmatpush1.bf16.msra.mxu0 %v1799
    %2177 = vmatprep.subr.bf16.mxu0 %v1804
    %2178 = vmatpush1.bf16.msra.mxu0 %v1803
    %2179 = vmatprep.subr.bf16.mxu0 %v1808
    %2180 = vmatpush1.bf16.msra.mxu0 %v1807
    %2181 = vmatprep.mubr.bf16.mxu0 %v700
    %2182 = vmatmul.mubr.bf16.gmra.mrb[0].mxu0 %v699
    %v2183 = vpop.f32.mrb[0].mxu0
    %v2184 = vadd.f32 %v2143, %v2183
    %v2185 = vpop.f32.mrb[0].mxu0
    %v2186 = vadd.f32 %v2145, %v2185
    %v2187 = vpop.f32.mrb[0].mxu0
    %v2188 = vpop.f32.mrb[0].mxu0
    %2189 = vdwg.mxu0
    %2190 = vmatprep.subr.bf16.mxu0 %v1812
    %2191 = vmatpush1.bf16.msra.mxu0 %v1811
    %2192 = vmatprep.subr.bf16.mxu0 %v1816
    %2193 = vmatpush1.bf16.msra.mxu0 %v1815
    %2194 = vmatprep.subr.bf16.mxu0 %v1820
    %2195 = vmatpush1.bf16.msra.mxu0 %v1819
    %2196 = vmatprep.subr.bf16.mxu0 %v1824
    %2197 = vmatpush1.bf16.msra.mxu0 %v1823
    %2198 = vmatprep.subr.bf16.mxu0 %v1828
    %2199 = vmatpush1.bf16.msra.mxu0 %v1827
    %2200 = vmatprep.subr.bf16.mxu0 %v1832
    %2201 = vmatpush1.bf16.msra.mxu0 %v1831
    %2202 = vmatprep.subr.bf16.mxu0 %v1836
    %2203 = vmatpush1.bf16.msra.mxu0 %v1835
    %2204 = vmatprep.subr.bf16.mxu0 %v1840
    %2205 = vmatpush1.bf16.msra.mxu0 %v1839
    %2206 = vmatprep.subr.bf16.mxu0 0
    %2207 = vmatpush1.bf16.msra.mxu0 0
    %2208 = vmatprep.subr.bf16.mxu0 0
    %2209 = vmatpush1.bf16.msra.mxu0 0
    %2210 = vmatprep.subr.bf16.mxu0 0
    %2211 = vmatpush1.bf16.msra.mxu0 0
    %2212 = vmatprep.subr.bf16.mxu0 0
    %2213 = vmatpush1.bf16.msra.mxu0 0
    %2214 = vmatprep.subr.bf16.mxu0 0
    %2215 = vmatpush1.bf16.msra.mxu0 0
    %2216 = vmatprep.subr.bf16.mxu0 0
    %2217 = vmatpush1.bf16.msra.mxu0 0
    %2218 = vmatprep.subr.bf16.mxu0 0
    %2219 = vmatpush1.bf16.msra.mxu0 0
    %2220 = vmatprep.subr.bf16.mxu0 0
    %2221 = vmatpush1.bf16.msra.mxu0 0
    %2222 = vmatprep.mubr.bf16.mxu0 0
    %2223 = vmatmul.mubr.bf16.gmra.mrb[0].mxu0 %v701
    %v2224 = vpop.f32.mrb[0].mxu0
    %v2225 = vadd.f32 %v2184, %v2224
    %v2226 = vpop.f32.mrb[0].mxu0
    %v2227 = vadd.f32 %v2186, %v2226
    %v2228 = vpop.f32.mrb[0].mxu0
    %v2229 = vpop.f32.mrb[0].mxu0
    %2230 = vdwg.mxu0
    %2231 = vmatprep.subr.bf16.mxu0 %v1622
    %2232 = vmatpush1.bf16.msra.mxu0 %v1621
    %2233 = vmatprep.subr.bf16.mxu0 %v1626
    %2234 = vmatpush1.bf16.msra.mxu0 %v1625
    %2235 = vmatprep.subr.bf16.mxu0 %v1630
    %2236 = vmatpush1.bf16.msra.mxu0 %v1629
    %2237 = vmatprep.subr.bf16.mxu0 %v1634
    %2238 = vmatpush1.bf16.msra.mxu0 %v1633
    %2239 = vmatprep.subr.bf16.mxu0 %v1638
    %2240 = vmatpush1.bf16.msra.mxu0 %v1637
    %2241 = vmatprep.subr.bf16.mxu0 %v1642
    %2242 = vmatpush1.bf16.msra.mxu0 %v1641
    %2243 = vmatprep.subr.bf16.mxu0 %v1646
    %2244 = vmatpush1.bf16.msra.mxu0 %v1645
    %2245 = vmatprep.subr.bf16.mxu0 %v1650
    %2246 = vmatpush1.bf16.msra.mxu0 %v1649
    %2247 = vmatprep.subr.bf16.mxu0 %v1654
    %2248 = vmatpush1.bf16.msra.mxu0 %v1653
    %2249 = vmatprep.subr.bf16.mxu0 %v1658
    %2250 = vmatpush1.bf16.msra.mxu0 %v1657
    %2251 = vmatprep.subr.bf16.mxu0 %v1662
    %2252 = vmatpush1.bf16.msra.mxu0 %v1661
    %2253 = vmatprep.subr.bf16.mxu0 %v1666
    %2254 = vmatpush1.bf16.msra.mxu0 %v1665
    %2255 = vmatprep.subr.bf16.mxu0 %v1670
    %2256 = vmatpush1.bf16.msra.mxu0 %v1669
    %2257 = vmatprep.subr.bf16.mxu0 %v1674
    %2258 = vmatpush1.bf16.msra.mxu0 %v1673
    %2259 = vmatprep.subr.bf16.mxu0 %v1678
    %2260 = vmatpush1.bf16.msra.mxu0 %v1677
    %2261 = vmatprep.subr.bf16.mxu0 %v1682
    %2262 = vmatpush1.bf16.msra.mxu0 %v1681
    %2263 = vmatprep.mubr.bf16.mxu0 %v696
    %2264 = vmatmul.mubr.bf16.gmra.mrb[0].mxu0 %v695
    %v2265 = vpop.f32.mrb[0].mxu0
    %v2266 = vadd.f32 %v938, %v2265
    %v2267 = vpop.f32.mrb[0].mxu0
    %v2268 = vadd.f32 %v942, %v2267
    %v2269 = vpop.f32.mrb[0].mxu0
    %v2270 = vpop.f32.mrb[0].mxu0
    %2271 = vdwg.mxu0
    %2272 = vmatprep.subr.bf16.mxu0 %v1686
    %2273 = vmatpush1.bf16.msra.mxu0 %v1685
    %2274 = vmatprep.subr.bf16.mxu0 %v1690
    %2275 = vmatpush1.bf16.msra.mxu0 %v1689
    %2276 = vmatprep.subr.bf16.mxu0 %v1694
    %2277 = vmatpush1.bf16.msra.mxu0 %v1693
    %2278 = vmatprep.subr.bf16.mxu0 %v1698
    %2279 = vmatpush1.bf16.msra.mxu0 %v1697
    %2280 = vmatprep.subr.bf16.mxu0 %v1702
    %2281 = vmatpush1.bf16.msra.mxu0 %v1701
    %2282 = vmatprep.subr.bf16.mxu0 %v1706
    %2283 = vmatpush1.bf16.msra.mxu0 %v1705
    %2284 = vmatprep.subr.bf16.mxu0 %v1710
    %2285 = vmatpush1.bf16.msra.mxu0 %v1709
    %2286 = vmatprep.subr.bf16.mxu0 %v1714
    %2287 = vmatpush1.bf16.msra.mxu0 %v1713
    %2288 = vmatprep.subr.bf16.mxu0 %v1718
    %2289 = vmatpush1.bf16.msra.mxu0 %v1717
    %2290 = vmatprep.subr.bf16.mxu0 %v1722
    %2291 = vmatpush1.bf16.msra.mxu0 %v1721
    %2292 = vmatprep.subr.bf16.mxu0 %v1726
    %2293 = vmatpush1.bf16.msra.mxu0 %v1725
    %2294 = vmatprep.subr.bf16.mxu0 %v1730
    %2295 = vmatpush1.bf16.msra.mxu0 %v1729
    %2296 = vmatprep.subr.bf16.mxu0 %v1734
    %2297 = vmatpush1.bf16.msra.mxu0 %v1733
    %2298 = vmatprep.subr.bf16.mxu0 %v1738
    %2299 = vmatpush1.bf16.msra.mxu0 %v1737
    %2300 = vmatprep.subr.bf16.mxu0 %v1742
    %2301 = vmatpush1.bf16.msra.mxu0 %v1741
    %2302 = vmatprep.subr.bf16.mxu0 %v1746
    %2303 = vmatpush1.bf16.msra.mxu0 %v1745
    %2304 = vmatprep.mubr.bf16.mxu0 %v698
    %2305 = vmatmul.mubr.bf16.gmra.mrb[0].mxu0 %v697
    %v2306 = vpop.f32.mrb[0].mxu0
    %v2307 = vadd.f32 %v2266, %v2306
    %v2308 = vpop.f32.mrb[0].mxu0
    %v2309 = vadd.f32 %v2268, %v2308
    %v2310 = vpop.f32.mrb[0].mxu0
    %v2311 = vpop.f32.mrb[0].mxu0
    %2312 = vdwg.mxu0
    %2313 = vmatprep.subr.bf16.mxu0 %v1750
    %2314 = vmatpush1.bf16.msra.mxu0 %v1749
    %2315 = vmatprep.subr.bf16.mxu0 %v1754
    %2316 = vmatpush1.bf16.msra.mxu0 %v1753
    %2317 = vmatprep.subr.bf16.mxu0 %v1758
    %2318 = vmatpush1.bf16.msra.mxu0 %v1757
    %2319 = vmatprep.subr.bf16.mxu0 %v1762
    %2320 = vmatpush1.bf16.msra.mxu0 %v1761
    %2321 = vmatprep.subr.bf16.mxu0 %v1766
    %2322 = vmatpush1.bf16.msra.mxu0 %v1765
    %2323 = vmatprep.subr.bf16.mxu0 %v1770
    %2324 = vmatpush1.bf16.msra.mxu0 %v1769
    %2325 = vmatprep.subr.bf16.mxu0 %v1774
    %2326 = vmatpush1.bf16.msra.mxu0 %v1773
    %2327 = vmatprep.subr.bf16.mxu0 %v1778
    %2328 = vmatpush1.bf16.msra.mxu0 %v1777
    %2329 = vmatprep.subr.bf16.mxu0 %v1782
    %2330 = vmatpush1.bf16.msra.mxu0 %v1781
    %2331 = vmatprep.subr.bf16.mxu0 %v1786
    %2332 = vmatpush1.bf16.msra.mxu0 %v1785
    %2333 = vmatprep.subr.bf16.mxu0 %v1790
    %2334 = vmatpush1.bf16.msra.mxu0 %v1789
    %2335 = vmatprep.subr.bf16.mxu0 %v1794
    %2336 = vmatpush1.bf16.msra.mxu0 %v1793
    %2337 = vmatprep.subr.bf16.mxu0 %v1798
    %2338 = vmatpush1.bf16.msra.mxu0 %v1797
    %2339 = vmatprep.subr.bf16.mxu0 %v1802
    %2340 = vmatpush1.bf16.msra.mxu0 %v1801
    %2341 = vmatprep.subr.bf16.mxu0 %v1806
    %2342 = vmatpush1.bf16.msra.mxu0 %v1805
    %2343 = vmatprep.subr.bf16.mxu0 %v1810
    %2344 = vmatpush1.bf16.msra.mxu0 %v1809
    %2345 = vmatprep.mubr.bf16.mxu0 %v700
    %2346 = vmatmul.mubr.bf16.gmra.mrb[0].mxu0 %v699
    %v2347 = vpop.f32.mrb[0].mxu0
    %v2348 = vadd.f32 %v2307, %v2347
    %v2349 = vpop.f32.mrb[0].mxu0
    %v2350 = vadd.f32 %v2309, %v2349
    %v2351 = vpop.f32.mrb[0].mxu0
    %v2352 = vpop.f32.mrb[0].mxu0
    %2353 = vdwg.mxu0
    %2354 = vmatprep.subr.bf16.mxu0 %v1814
    %2355 = vmatpush1.bf16.msra.mxu0 %v1813
    %2356 = vmatprep.subr.bf16.mxu0 %v1818
    %2357 = vmatpush1.bf16.msra.mxu0 %v1817
    %2358 = vmatprep.subr.bf16.mxu0 %v1822
    %2359 = vmatpush1.bf16.msra.mxu0 %v1821
    %2360 = vmatprep.subr.bf16.mxu0 %v1826
    %2361 = vmatpush1.bf16.msra.mxu0 %v1825
    %2362 = vmatprep.subr.bf16.mxu0 %v1830
    %2363 = vmatpush1.bf16.msra.mxu0 %v1829
    %2364 = vmatprep.subr.bf16.mxu0 %v1834
    %2365 = vmatpush1.bf16.msra.mxu0 %v1833
    %2366 = vmatprep.subr.bf16.mxu0 %v1838
    %2367 = vmatpush1.bf16.msra.mxu0 %v1837
    %2368 = vmatprep.subr.bf16.mxu0 %v1842
    %2369 = vmatpush1.bf16.msra.mxu0 %v1841
    %2370 = vmatprep.subr.bf16.mxu0 0
    %2371 = vmatpush1.bf16.msra.mxu0 0
    %2372 = vmatprep.subr.bf16.mxu0 0
    %2373 = vmatpush1.bf16.msra.mxu0 0
    %2374 = vmatprep.subr.bf16.mxu0 0
    %2375 = vmatpush1.bf16.msra.mxu0 0
    %2376 = vmatprep.subr.bf16.mxu0 0
    %2377 = vmatpush1.bf16.msra.mxu0 0
    %2378 = vmatprep.subr.bf16.mxu0 0
    %2379 = vmatpush1.bf16.msra.mxu0 0
    %2380 = vmatprep.subr.bf16.mxu0 0
    %2381 = vmatpush1.bf16.msra.mxu0 0
    %2382 = vmatprep.subr.bf16.mxu0 0
    %2383 = vmatpush1.bf16.msra.mxu0 0
    %2384 = vmatprep.subr.bf16.mxu0 0
    %2385 = vmatpush1.bf16.msra.mxu0 0
    %2386 = vmatprep.mubr.bf16.mxu0 0
    %2387 = vmatmul.mubr.bf16.gmra.mrb[0].mxu0 %v701
    %v2388 = vpop.f32.mrb[0].mxu0
    %v2389 = vadd.f32 %v2348, %v2388
    %v2390 = vpop.f32.mrb[0].mxu0
    %v2391 = vadd.f32 %v2350, %v2390
    %v2392 = vpop.f32.mrb[0].mxu0
    %v2393 = vpop.f32.mrb[0].mxu0
    %2394 = vdwg.mxu0
    %vm2395 = vcmp.gt.f32.partialorder %v2225, 0.0
    %vm2396 = vcmp.gt.f32.partialorder %v2227, 0.0
    %vm2397 = vcmp.gt.f32.partialorder %v2389, 0.0
    %vm2398 = vcmp.gt.f32.partialorder %v2391, 0.0
    %v2399 = vstv %s115
    %v2400 = vmul.f32 %v2399, %v2225
    %v2401 = vmul.f32 %v2399, %v2227
    %v2402 = vmul.f32 %v2399, %v2389
    %v2403 = vmul.f32 %v2399, %v2391
    %v2404 = vsel %vm2395, %v2225, %v2400
    %v2405 = vsel %vm2396, %v2227, %v2401
    %v2406 = vsel %vm2397, %v2389, %v2402
    %v2407 = vsel %vm2398, %v2391, %v2403
    %v2408 = vpack.c.bf16 %v2404, %v2404
    %v2409 = vpack.c.bf16 %v2405, %v2405
    %v2410 = vpack.c.bf16 %v2406, %v2406
    %v2411 = vpack.c.bf16 %v2407, %v2407
    %v2412 = vld [vmem:[#allocation10] sm:$0xff]
    %v2413 = vld [vmem:[#allocation10 + $0x8] sm:$0xff]
    %v2414 = vld [vmem:[#allocation10 + $0x10] sm:$0xff]
    %v2415 = vld [vmem:[#allocation10 + $0x18] sm:$0xff]
    %v2416 = vld [vmem:[#allocation10 + $0x20] sm:$0xff]
    %v2417 = vld [vmem:[#allocation10 + $0x28] sm:$0xff]
    %v2418 = vld [vmem:[#allocation10 + $0x30] sm:$0xff]
    %v2419 = vld [vmem:[#allocation10 + $0x38] sm:$0xff]
    %v2420 = vld [vmem:[#allocation10 + $0x40] sm:$0xff]
    %v2421 = vld [vmem:[#allocation10 + $0x48] sm:$0xff]
    %v2422 = vld [vmem:[#allocation10 + $0x50] sm:$0xff]
    %v2423 = vld [vmem:[#allocation10 + $0x58] sm:$0xff]
    %v2424 = vld [vmem:[#allocation10 + $0x60] sm:$0xff]
    %v2425 = vld [vmem:[#allocation10 + $0x68] sm:$0xff]
    %v2426 = vld [vmem:[#allocation10 + $0x70] sm:$0xff]
    %v2427 = vld [vmem:[#allocation10 + $0x78] sm:$0xff]
    %v2428 = vld [vmem:[#allocation10 + $0x80] sm:$0xff]
    %v2429 = vld [vmem:[#allocation10 + $0x88] sm:$0xff]
    %v2430 = vld [vmem:[#allocation10 + $0x90] sm:$0xff]
    %v2431 = vld [vmem:[#allocation10 + $0x98] sm:$0xff]
    %v2432 = vld [vmem:[#allocation10 + $0xa0] sm:$0xff]
    %v2433 = vld [vmem:[#allocation10 + $0xa8] sm:$0xff]
    %v2434 = vld [vmem:[#allocation10 + $0xb0] sm:$0xff]
    %v2435 = vld [vmem:[#allocation10 + $0xb8] sm:$0xff]
    %v2436 = vld [vmem:[#allocation10 + $0xc0] sm:$0xff]
    %v2437 = vld [vmem:[#allocation10 + $0xc8] sm:$0xff]
    %v2438 = vld [vmem:[#allocation10 + $0xd0] sm:$0xff]
    %v2439 = vld [vmem:[#allocation10 + $0xd8] sm:$0xff]
    %v2440 = vld [vmem:[#allocation10 + $0xe0] sm:$0xff]
    %v2441 = vld [vmem:[#allocation10 + $0xe8] sm:$0xff]
    %v2442 = vld [vmem:[#allocation10 + $0xf0] sm:$0xff]
    %v2443 = vld [vmem:[#allocation10 + $0xf8] sm:$0xff]
    %v2444 = vld [vmem:[#allocation10 + $0x100] sm:$0xff]
    %v2445 = vld [vmem:[#allocation10 + $0x108] sm:$0xff]
    %v2446 = vld [vmem:[#allocation10 + $0x110] sm:$0xff]
    %v2447 = vld [vmem:[#allocation10 + $0x118] sm:$0xff]
    %v2448 = vld [vmem:[#allocation10 + $0x120] sm:$0xff]
    %v2449 = vld [vmem:[#allocation10 + $0x128] sm:$0xff]
    %v2450 = vld [vmem:[#allocation10 + $0x130] sm:$0xff]
    %v2451 = vld [vmem:[#allocation10 + $0x138] sm:$0xff]
    %v2452 = vld [vmem:[#allocation10 + $0x140] sm:$0xff]
    %v2453 = vld [vmem:[#allocation10 + $0x148] sm:$0xff]
    %v2454 = vld [vmem:[#allocation10 + $0x150] sm:$0xff]
    %v2455 = vld [vmem:[#allocation10 + $0x158] sm:$0xff]
    %v2456 = vld [vmem:[#allocation10 + $0x160] sm:$0xff]
    %v2457 = vld [vmem:[#allocation10 + $0x168] sm:$0xff]
    %v2458 = vld [vmem:[#allocation10 + $0x170] sm:$0xff]
    %v2459 = vld [vmem:[#allocation10 + $0x178] sm:$0xff]
    %v2460 = vld [vmem:[#allocation10 + $0x180] sm:$0xff]
    %v2461 = vld [vmem:[#allocation10 + $0x188] sm:$0xff]
    %v2462 = vld [vmem:[#allocation10 + $0x190] sm:$0xff]
    %v2463 = vld [vmem:[#allocation10 + $0x198] sm:$0xff]
    %v2464 = vld [vmem:[#allocation10 + $0x1a0] sm:$0xff]
    %v2465 = vld [vmem:[#allocation10 + $0x1a8] sm:$0xff]
    %v2466 = vld [vmem:[#allocation10 + $0x1b0] sm:$0xff]
    %v2467 = vld [vmem:[#allocation10 + $0x1b8] sm:$0xff]
    %v2468 = vld [vmem:[#allocation10 + $0x1c0] sm:$0xff]
    %v2469 = vld [vmem:[#allocation10 + $0x1c8] sm:$0xff]
    %v2470 = vld [vmem:[#allocation10 + $0x1d0] sm:$0xff]
    %v2471 = vld [vmem:[#allocation10 + $0x1d8] sm:$0xff]
    %v2472 = vld [vmem:[#allocation10 + $0x1e0] sm:$0xff]
    %v2473 = vld [vmem:[#allocation10 + $0x1e8] sm:$0xff]
    %v2474 = vld [vmem:[#allocation10 + $0x1f0] sm:$0xff]
    %v2475 = vld [vmem:[#allocation10 + $0x1f8] sm:$0xff]
    %v2477 = vlaneseq
    %v2478 = vshrl.u32 %v2477, 7
    %v2479 = vsub.s32 0, %v2478
    %v2480 = vrot.slane %v119, %v2479
    %v2481 = vlaneseq
    %v2482 = vshrl.u32 %v2481, 7
    %v2483 = vsub.s32 1, %v2482
    %v2484 = vrot.slane %v119, %v2483
    %v2551 = vunpack.c.l.b16 %v2412
    %v2552 = vunpack.c.h.b16 %v2412
    %v2553 = vunpack.c.l.b16 %v2413
    %v2554 = vunpack.c.h.b16 %v2413
    %v2555 = vunpack.c.l.b16 %v2414
    %v2556 = vunpack.c.h.b16 %v2414
    %v2557 = vunpack.c.l.b16 %v2415
    %v2558 = vunpack.c.h.b16 %v2415
    %v2559 = vunpack.c.l.b16 %v2416
    %v2560 = vunpack.c.h.b16 %v2416
    %v2561 = vunpack.c.l.b16 %v2417
    %v2562 = vunpack.c.h.b16 %v2417
    %v2563 = vunpack.c.l.b16 %v2418
    %v2564 = vunpack.c.h.b16 %v2418
    %v2565 = vunpack.c.l.b16 %v2419
    %v2566 = vunpack.c.h.b16 %v2419
    %v2567 = vunpack.c.l.b16 %v2420
    %v2568 = vunpack.c.h.b16 %v2420
    %v2569 = vunpack.c.l.b16 %v2421
    %v2570 = vunpack.c.h.b16 %v2421
    %v2571 = vunpack.c.l.b16 %v2422
    %v2572 = vunpack.c.h.b16 %v2422
    %v2573 = vunpack.c.l.b16 %v2423
    %v2574 = vunpack.c.h.b16 %v2423
    %v2575 = vunpack.c.l.b16 %v2424
    %v2576 = vunpack.c.h.b16 %v2424
    %v2577 = vunpack.c.l.b16 %v2425
    %v2578 = vunpack.c.h.b16 %v2425
    %v2579 = vunpack.c.l.b16 %v2426
    %v2580 = vunpack.c.h.b16 %v2426
    %v2581 = vunpack.c.l.b16 %v2427
    %v2582 = vunpack.c.h.b16 %v2427
    %v2583 = vunpack.c.l.b16 %v2428
    %v2584 = vunpack.c.h.b16 %v2428
    %v2585 = vunpack.c.l.b16 %v2429
    %v2586 = vunpack.c.h.b16 %v2429
    %v2587 = vunpack.c.l.b16 %v2430
    %v2588 = vunpack.c.h.b16 %v2430
    %v2589 = vunpack.c.l.b16 %v2431
    %v2590 = vunpack.c.h.b16 %v2431
    %v2591 = vunpack.c.l.b16 %v2432
    %v2592 = vunpack.c.h.b16 %v2432
    %v2593 = vunpack.c.l.b16 %v2433
    %v2594 = vunpack.c.h.b16 %v2433
    %v2595 = vunpack.c.l.b16 %v2434
    %v2596 = vunpack.c.h.b16 %v2434
    %v2597 = vunpack.c.l.b16 %v2435
    %v2598 = vunpack.c.h.b16 %v2435
    %v2599 = vunpack.c.l.b16 %v2436
    %v2600 = vunpack.c.h.b16 %v2436
    %v2601 = vunpack.c.l.b16 %v2437
    %v2602 = vunpack.c.h.b16 %v2437
    %v2603 = vunpack.c.l.b16 %v2438
    %v2604 = vunpack.c.h.b16 %v2438
    %v2605 = vunpack.c.l.b16 %v2439
    %v2606 = vunpack.c.h.b16 %v2439
    %v2607 = vunpack.c.l.b16 %v2440
    %v2608 = vunpack.c.h.b16 %v2440
    %v2609 = vunpack.c.l.b16 %v2441
    %v2610 = vunpack.c.h.b16 %v2441
    %v2611 = vunpack.c.l.b16 %v2442
    %v2612 = vunpack.c.h.b16 %v2442
    %v2613 = vunpack.c.l.b16 %v2443
    %v2614 = vunpack.c.h.b16 %v2443
    %v2615 = vunpack.c.l.b16 %v2444
    %v2616 = vunpack.c.h.b16 %v2444
    %v2617 = vunpack.c.l.b16 %v2445
    %v2618 = vunpack.c.h.b16 %v2445
    %v2619 = vunpack.c.l.b16 %v2446
    %v2620 = vunpack.c.h.b16 %v2446
    %v2621 = vunpack.c.l.b16 %v2447
    %v2622 = vunpack.c.h.b16 %v2447
    %v2623 = vunpack.c.l.b16 %v2448
    %v2624 = vunpack.c.h.b16 %v2448
    %v2625 = vunpack.c.l.b16 %v2449
    %v2626 = vunpack.c.h.b16 %v2449
    %v2627 = vunpack.c.l.b16 %v2450
    %v2628 = vunpack.c.h.b16 %v2450
    %v2629 = vunpack.c.l.b16 %v2451
    %v2630 = vunpack.c.h.b16 %v2451
    %v2631 = vunpack.c.l.b16 %v2452
    %v2632 = vunpack.c.h.b16 %v2452
    %v2633 = vunpack.c.l.b16 %v2453
    %v2634 = vunpack.c.h.b16 %v2453
    %v2635 = vunpack.c.l.b16 %v2454
    %v2636 = vunpack.c.h.b16 %v2454
    %v2637 = vunpack.c.l.b16 %v2455
    %v2638 = vunpack.c.h.b16 %v2455
    %v2639 = vunpack.c.l.b16 %v2456
    %v2640 = vunpack.c.h.b16 %v2456
    %v2641 = vunpack.c.l.b16 %v2457
    %v2642 = vunpack.c.h.b16 %v2457
    %v2643 = vunpack.c.l.b16 %v2458
    %v2644 = vunpack.c.h.b16 %v2458
    %v2645 = vunpack.c.l.b16 %v2459
    %v2646 = vunpack.c.h.b16 %v2459
    %v2647 = vunpack.c.l.b16 %v2460
    %v2648 = vunpack.c.h.b16 %v2460
    %v2649 = vunpack.c.l.b16 %v2461
    %v2650 = vunpack.c.h.b16 %v2461
    %v2651 = vunpack.c.l.b16 %v2462
    %v2652 = vunpack.c.h.b16 %v2462
    %v2653 = vunpack.c.l.b16 %v2463
    %v2654 = vunpack.c.h.b16 %v2463
    %v2655 = vunpack.c.l.b16 %v2464
    %v2656 = vunpack.c.h.b16 %v2464
    %v2657 = vunpack.c.l.b16 %v2465
    %v2658 = vunpack.c.h.b16 %v2465
    %v2659 = vunpack.c.l.b16 %v2466
    %v2660 = vunpack.c.h.b16 %v2466
    %v2661 = vunpack.c.l.b16 %v2467
    %v2662 = vunpack.c.h.b16 %v2467
    %v2663 = vunpack.c.l.b16 %v2468
    %v2664 = vunpack.c.h.b16 %v2468
    %v2665 = vunpack.c.l.b16 %v2469
    %v2666 = vunpack.c.h.b16 %v2469
    %v2667 = vunpack.c.l.b16 %v2470
    %v2668 = vunpack.c.h.b16 %v2470
    %v2669 = vunpack.c.l.b16 %v2471
    %v2670 = vunpack.c.h.b16 %v2471
    %v2671 = vunpack.c.l.b16 %v2472
    %v2672 = vunpack.c.h.b16 %v2472
    %v2673 = vunpack.c.l.b16 %v2473
    %v2674 = vunpack.c.h.b16 %v2473
    %v2675 = vunpack.c.l.b16 %v2474
    %v2676 = vunpack.c.h.b16 %v2474
    %v2677 = vunpack.c.l.b16 %v2475
    %v2678 = vunpack.c.h.b16 %v2475
    %v2679 = vpack.c.b16 %v2553, %v2551
    %v2680 = vpack.c.b16 %v2554, %v2552
    %v2681 = vpack.c.b16 %v2557, %v2555
    %v2682 = vpack.c.b16 %v2558, %v2556
    %v2683 = vpack.c.b16 %v2561, %v2559
    %v2684 = vpack.c.b16 %v2562, %v2560
    %v2685 = vpack.c.b16 %v2565, %v2563
    %v2686 = vpack.c.b16 %v2566, %v2564
    %v2687 = vpack.c.b16 %v2569, %v2567
    %v2688 = vpack.c.b16 %v2570, %v2568
    %v2689 = vpack.c.b16 %v2573, %v2571
    %v2690 = vpack.c.b16 %v2574, %v2572
    %v2691 = vpack.c.b16 %v2577, %v2575
    %v2692 = vpack.c.b16 %v2578, %v2576
    %v2693 = vpack.c.b16 %v2581, %v2579
    %v2694 = vpack.c.b16 %v2582, %v2580
    %v2695 = vpack.c.b16 %v2585, %v2583
    %v2696 = vpack.c.b16 %v2586, %v2584
    %v2697 = vpack.c.b16 %v2589, %v2587
    %v2698 = vpack.c.b16 %v2590, %v2588
    %v2699 = vpack.c.b16 %v2593, %v2591
    %v2700 = vpack.c.b16 %v2594, %v2592
    %v2701 = vpack.c.b16 %v2597, %v2595
    %v2702 = vpack.c.b16 %v2598, %v2596
    %v2703 = vpack.c.b16 %v2601, %v2599
    %v2704 = vpack.c.b16 %v2602, %v2600
    %v2705 = vpack.c.b16 %v2605, %v2603
    %v2706 = vpack.c.b16 %v2606, %v2604
    %v2707 = vpack.c.b16 %v2609, %v2607
    %v2708 = vpack.c.b16 %v2610, %v2608
    %v2709 = vpack.c.b16 %v2613, %v2611
    %v2710 = vpack.c.b16 %v2614, %v2612
    %v2711 = vpack.c.b16 %v2617, %v2615
    %v2712 = vpack.c.b16 %v2618, %v2616
    %v2713 = vpack.c.b16 %v2621, %v2619
    %v2714 = vpack.c.b16 %v2622, %v2620
    %v2715 = vpack.c.b16 %v2625, %v2623
    %v2716 = vpack.c.b16 %v2626, %v2624
    %v2717 = vpack.c.b16 %v2629, %v2627
    %v2718 = vpack.c.b16 %v2630, %v2628
    %v2719 = vpack.c.b16 %v2633, %v2631
    %v2720 = vpack.c.b16 %v2634, %v2632
    %v2721 = vpack.c.b16 %v2637, %v2635
    %v2722 = vpack.c.b16 %v2638, %v2636
    %v2723 = vpack.c.b16 %v2641, %v2639
    %v2724 = vpack.c.b16 %v2642, %v2640
    %v2725 = vpack.c.b16 %v2645, %v2643
    %v2726 = vpack.c.b16 %v2646, %v2644
    %v2727 = vpack.c.b16 %v2649, %v2647
    %v2728 = vpack.c.b16 %v2650, %v2648
    %v2729 = vpack.c.b16 %v2653, %v2651
    %v2730 = vpack.c.b16 %v2654, %v2652
    %v2731 = vpack.c.b16 %v2657, %v2655
    %v2732 = vpack.c.b16 %v2658, %v2656
    %v2733 = vpack.c.b16 %v2661, %v2659
    %v2734 = vpack.c.b16 %v2662, %v2660
    %v2735 = vpack.c.b16 %v2665, %v2663
    %v2736 = vpack.c.b16 %v2666, %v2664
    %v2737 = vpack.c.b16 %v2669, %v2667
    %v2738 = vpack.c.b16 %v2670, %v2668
    %v2739 = vpack.c.b16 %v2673, %v2671
    %v2740 = vpack.c.b16 %v2674, %v2672
    %v2741 = vpack.c.b16 %v2677, %v2675
    %v2742 = vpack.c.b16 %v2678, %v2676
    %2807 = vmatprep.subr.bf16.mxu0 %v2680
    %2808 = vmatpush1.bf16.msra.mxu0 %v2679
    %2809 = vmatprep.subr.bf16.mxu0 %v2682
    %2810 = vmatpush1.bf16.msra.mxu0 %v2681
    %2811 = vmatprep.subr.bf16.mxu0 %v2684
    %2812 = vmatpush1.bf16.msra.mxu0 %v2683
    %2813 = vmatprep.subr.bf16.mxu0 %v2686
    %2814 = vmatpush1.bf16.msra.mxu0 %v2685
    %2815 = vmatprep.subr.bf16.mxu0 %v2688
    %2816 = vmatpush1.bf16.msra.mxu0 %v2687
    %2817 = vmatprep.subr.bf16.mxu0 %v2690
    %2818 = vmatpush1.bf16.msra.mxu0 %v2689
    %2819 = vmatprep.subr.bf16.mxu0 %v2692
    %2820 = vmatpush1.bf16.msra.mxu0 %v2691
    %2821 = vmatprep.subr.bf16.mxu0 %v2694
    %2822 = vmatpush1.bf16.msra.mxu0 %v2693
    %2823 = vmatprep.subr.bf16.mxu0 %v2696
    %2824 = vmatpush1.bf16.msra.mxu0 %v2695
    %2825 = vmatprep.subr.bf16.mxu0 %v2698
    %2826 = vmatpush1.bf16.msra.mxu0 %v2697
    %2827 = vmatprep.subr.bf16.mxu0 %v2700
    %2828 = vmatpush1.bf16.msra.mxu0 %v2699
    %2829 = vmatprep.subr.bf16.mxu0 %v2702
    %2830 = vmatpush1.bf16.msra.mxu0 %v2701
    %2831 = vmatprep.subr.bf16.mxu0 %v2704
    %2832 = vmatpush1.bf16.msra.mxu0 %v2703
    %2833 = vmatprep.subr.bf16.mxu0 %v2706
    %2834 = vmatpush1.bf16.msra.mxu0 %v2705
    %2835 = vmatprep.subr.bf16.mxu0 %v2708
    %2836 = vmatpush1.bf16.msra.mxu0 %v2707
    %2837 = vmatprep.subr.bf16.mxu0 %v2710
    %2838 = vmatpush1.bf16.msra.mxu0 %v2709
    %2839 = vmatprep.mubr.bf16.mxu0 %v2409
    %2840 = vmatmul.mubr.bf16.gmra.mrb[0].mxu0 %v2408
    %v2841 = vpop.f32.mrb[0].mxu0
    %v2842 = vadd.f32 %v2480, %v2841
    %v2843 = vpop.f32.mrb[0].mxu0
    %v2844 = vadd.f32 %v2484, %v2843
    %v2845 = vpop.f32.mrb[0].mxu0
    %v2846 = vpop.f32.mrb[0].mxu0
    %2847 = vdwg.mxu0
    %2848 = vmatprep.subr.bf16.mxu0 %v2712
    %2849 = vmatpush1.bf16.msra.mxu0 %v2711
    %2850 = vmatprep.subr.bf16.mxu0 %v2714
    %2851 = vmatpush1.bf16.msra.mxu0 %v2713
    %2852 = vmatprep.subr.bf16.mxu0 %v2716
    %2853 = vmatpush1.bf16.msra.mxu0 %v2715
    %2854 = vmatprep.subr.bf16.mxu0 %v2718
    %2855 = vmatpush1.bf16.msra.mxu0 %v2717
    %2856 = vmatprep.subr.bf16.mxu0 %v2720
    %2857 = vmatpush1.bf16.msra.mxu0 %v2719
    %2858 = vmatprep.subr.bf16.mxu0 %v2722
    %2859 = vmatpush1.bf16.msra.mxu0 %v2721
    %2860 = vmatprep.subr.bf16.mxu0 %v2724
    %2861 = vmatpush1.bf16.msra.mxu0 %v2723
    %2862 = vmatprep.subr.bf16.mxu0 %v2726
    %2863 = vmatpush1.bf16.msra.mxu0 %v2725
    %2864 = vmatprep.subr.bf16.mxu0 %v2728
    %2865 = vmatpush1.bf16.msra.mxu0 %v2727
    %2866 = vmatprep.subr.bf16.mxu0 %v2730
    %2867 = vmatpush1.bf16.msra.mxu0 %v2729
    %2868 = vmatprep.subr.bf16.mxu0 %v2732
    %2869 = vmatpush1.bf16.msra.mxu0 %v2731
    %2870 = vmatprep.subr.bf16.mxu0 %v2734
    %2871 = vmatpush1.bf16.msra.mxu0 %v2733
    %2872 = vmatprep.subr.bf16.mxu0 %v2736
    %2873 = vmatpush1.bf16.msra.mxu0 %v2735
    %2874 = vmatprep.subr.bf16.mxu0 %v2738
    %2875 = vmatpush1.bf16.msra.mxu0 %v2737
    %2876 = vmatprep.subr.bf16.mxu0 %v2740
    %2877 = vmatpush1.bf16.msra.mxu0 %v2739
    %2878 = vmatprep.subr.bf16.mxu0 %v2742
    %2879 = vmatpush1.bf16.msra.mxu0 %v2741
    %2880 = vmatprep.mubr.bf16.mxu0 %v2411
    %2881 = vmatmul.mubr.bf16.gmra.mrb[0].mxu0 %v2410
    %v2882 = vpop.f32.mrb[0].mxu0
    %v2883 = vadd.f32 %v2842, %v2882
    %v2884 = vpop.f32.mrb[0].mxu0
    %v2885 = vadd.f32 %v2844, %v2884
    %v2886 = vpop.f32.mrb[0].mxu0
    %v2887 = vpop.f32.mrb[0].mxu0
    %2888 = vdwg.mxu0
    %vm2889 = vcmp.gt.f32.partialorder %v2883, 0.0
    %vm2890 = vcmp.gt.f32.partialorder %v2885, 0.0
    %v2891 = vstv %s116
    %v2892 = vmul.f32 %v2891, %v2883
    %v2893 = vmul.f32 %v2891, %v2885
    %v2894 = vsel %vm2889, %v2883, %v2892
    %v2895 = vsel %vm2890, %v2885, %v2893
    %v2896 = vpack.c.bf16 %v2894, %v2894
    %v2897 = vpack.c.bf16 %v2895, %v2895
    %v2898 = vld [vmem:[#allocation12] sm:$0xf]
    %v2899 = vld [vmem:[#allocation12 + $0x4] sm:$0xf]
    %v2900 = vld [vmem:[#allocation12 + $0x8] sm:$0xf]
    %v2901 = vld [vmem:[#allocation12 + $0xc] sm:$0xf]
    %v2902 = vld [vmem:[#allocation12 + $0x10] sm:$0xf]
    %v2903 = vld [vmem:[#allocation12 + $0x14] sm:$0xf]
    %v2904 = vld [vmem:[#allocation12 + $0x18] sm:$0xf]
    %v2905 = vld [vmem:[#allocation12 + $0x1c] sm:$0xf]
    %v2906 = vld [vmem:[#allocation12 + $0x20] sm:$0xf]
    %v2907 = vld [vmem:[#allocation12 + $0x24] sm:$0xf]
    %v2908 = vld [vmem:[#allocation12 + $0x28] sm:$0xf]
    %v2909 = vld [vmem:[#allocation12 + $0x2c] sm:$0xf]
    %v2910 = vld [vmem:[#allocation12 + $0x30] sm:$0xf]
    %v2911 = vld [vmem:[#allocation12 + $0x34] sm:$0xf]
    %v2912 = vld [vmem:[#allocation12 + $0x38] sm:$0xf]
    %v2913 = vld [vmem:[#allocation12 + $0x3c] sm:$0xf]
    %v2914 = vld [vmem:[#allocation12 + $0x40] sm:$0xf]
    %v2915 = vld [vmem:[#allocation12 + $0x44] sm:$0xf]
    %v2916 = vld [vmem:[#allocation12 + $0x48] sm:$0xf]
    %v2917 = vld [vmem:[#allocation12 + $0x4c] sm:$0xf]
    %v2918 = vld [vmem:[#allocation12 + $0x50] sm:$0xf]
    %v2919 = vld [vmem:[#allocation12 + $0x54] sm:$0xf]
    %v2920 = vld [vmem:[#allocation12 + $0x58] sm:$0xf]
    %v2921 = vld [vmem:[#allocation12 + $0x5c] sm:$0xf]
    %v2922 = vld [vmem:[#allocation12 + $0x60] sm:$0xf]
    %v2923 = vld [vmem:[#allocation12 + $0x64] sm:$0xf]
    %v2924 = vld [vmem:[#allocation12 + $0x68] sm:$0xf]
    %v2925 = vld [vmem:[#allocation12 + $0x6c] sm:$0xf]
    %v2926 = vld [vmem:[#allocation12 + $0x70] sm:$0xf]
    %v2927 = vld [vmem:[#allocation12 + $0x74] sm:$0xf]
    %v2928 = vld [vmem:[#allocation12 + $0x78] sm:$0xf]
    %v2929 = vld [vmem:[#allocation12 + $0x7c] sm:$0xf]
    %v2931 = vlaneseq
    %v2932 = vshrl.u32 %v2931, 7
    %v2933 = vsub.s32 0, %v2932
    %v2934 = vrot.slane %v120, %v2933
    %v2968 = vunpack.c.l.b16 %v2898
    %v2969 = vunpack.c.l.b16 %v2899
    %v2970 = vunpack.c.l.b16 %v2900
    %v2971 = vunpack.c.l.b16 %v2901
    %v2972 = vunpack.c.l.b16 %v2902
    %v2973 = vunpack.c.l.b16 %v2903
    %v2974 = vunpack.c.l.b16 %v2904
    %v2975 = vunpack.c.l.b16 %v2905
    %v2976 = vunpack.c.l.b16 %v2906
    %v2977 = vunpack.c.l.b16 %v2907
    %v2978 = vunpack.c.l.b16 %v2908
    %v2979 = vunpack.c.l.b16 %v2909
    %v2980 = vunpack.c.l.b16 %v2910
    %v2981 = vunpack.c.l.b16 %v2911
    %v2982 = vunpack.c.l.b16 %v2912
    %v2983 = vunpack.c.l.b16 %v2913
    %v2984 = vunpack.c.l.b16 %v2914
    %v2985 = vunpack.c.l.b16 %v2915
    %v2986 = vunpack.c.l.b16 %v2916
    %v2987 = vunpack.c.l.b16 %v2917
    %v2988 = vunpack.c.l.b16 %v2918
    %v2989 = vunpack.c.l.b16 %v2919
    %v2990 = vunpack.c.l.b16 %v2920
    %v2991 = vunpack.c.l.b16 %v2921
    %v2992 = vunpack.c.l.b16 %v2922
    %v2993 = vunpack.c.l.b16 %v2923
    %v2994 = vunpack.c.l.b16 %v2924
    %v2995 = vunpack.c.l.b16 %v2925
    %v2996 = vunpack.c.l.b16 %v2926
    %v2997 = vunpack.c.l.b16 %v2927
    %v2998 = vunpack.c.l.b16 %v2928
    %v2999 = vunpack.c.l.b16 %v2929
    %v3000 = vpack.c.b16 %v2969, %v2968
    %v3001 = vpack.c.b16 %v2971, %v2970
    %v3002 = vpack.c.b16 %v2973, %v2972
    %v3003 = vpack.c.b16 %v2975, %v2974
    %v3004 = vpack.c.b16 %v2977, %v2976
    %v3005 = vpack.c.b16 %v2979, %v2978
    %v3006 = vpack.c.b16 %v2981, %v2980
    %v3007 = vpack.c.b16 %v2983, %v2982
    %v3008 = vpack.c.b16 %v2985, %v2984
    %v3009 = vpack.c.b16 %v2987, %v2986
    %v3010 = vpack.c.b16 %v2989, %v2988
    %v3011 = vpack.c.b16 %v2991, %v2990
    %v3012 = vpack.c.b16 %v2993, %v2992
    %v3013 = vpack.c.b16 %v2995, %v2994
    %v3014 = vpack.c.b16 %v2997, %v2996
    %v3015 = vpack.c.b16 %v2999, %v2998
    %3032 = vmatprep.subr.bf16.mxu0 0
    %3033 = vmatpush1.bf16.msra.mxu0 %v3000
    %3034 = vmatprep.subr.bf16.mxu0 0
    %3035 = vmatpush1.bf16.msra.mxu0 %v3001
    %3036 = vmatprep.subr.bf16.mxu0 0
    %3037 = vmatpush1.bf16.msra.mxu0 %v3002
    %3038 = vmatprep.subr.bf16.mxu0 0
    %3039 = vmatpush1.bf16.msra.mxu0 %v3003
    %3040 = vmatprep.subr.bf16.mxu0 0
    %3041 = vmatpush1.bf16.msra.mxu0 %v3004
    %3042 = vmatprep.subr.bf16.mxu0 0
    %3043 = vmatpush1.bf16.msra.mxu0 %v3005
    %3044 = vmatprep.subr.bf16.mxu0 0
    %3045 = vmatpush1.bf16.msra.mxu0 %v3006
    %3046 = vmatprep.subr.bf16.mxu0 0
    %3047 = vmatpush1.bf16.msra.mxu0 %v3007
    %3048 = vmatprep.subr.bf16.mxu0 0
    %3049 = vmatpush1.bf16.msra.mxu0 %v3008
    %3050 = vmatprep.subr.bf16.mxu0 0
    %3051 = vmatpush1.bf16.msra.mxu0 %v3009
    %3052 = vmatprep.subr.bf16.mxu0 0
    %3053 = vmatpush1.bf16.msra.mxu0 %v3010
    %3054 = vmatprep.subr.bf16.mxu0 0
    %3055 = vmatpush1.bf16.msra.mxu0 %v3011
    %3056 = vmatprep.subr.bf16.mxu0 0
    %3057 = vmatpush1.bf16.msra.mxu0 %v3012
    %3058 = vmatprep.subr.bf16.mxu0 0
    %3059 = vmatpush1.bf16.msra.mxu0 %v3013
    %3060 = vmatprep.subr.bf16.mxu0 0
    %3061 = vmatpush1.bf16.msra.mxu0 %v3014
    %3062 = vmatprep.subr.bf16.mxu0 0
    %3063 = vmatpush1.bf16.msra.mxu0 %v3015
    %3064 = vmatprep.mubr.bf16.mxu0 %v2897
    %3065 = vmatmul.mubr.bf16.gmra.mrb[0].mxu0 %v2896
    %v3066 = vpop.f32.mrb[0].mxu0
    %v3067 = vadd.f32 %v2934, %v3066
    %v3068 = vpop.f32.mrb[0].mxu0
    %v3069 = vpop.f32.mrb[0].mxu0
    %v3070 = vpop.f32.mrb[0].mxu0
    %3071 = vdwg.mxu0
    %3072 = vst [vmem:[#allocation13] sm:$0xff] %v3067
    // Predicated region
    $region66: #{tpu_custom_call.1} parent=1 // pred_check
      _
    $region67: #{tpu_custom_call.1} parent=1 // pred_check_branch
      %3074 = sbr.rel (0) target = $region69
    $region68: #{tpu_custom_call.1} parent=1 // pred_region
      %s3076 = ssub.s32 128, 128
      %3077 = vsyncadd [#allocation4], %s3076
      %s3079 = sshll.u32 [#allocation13], 4
      %s3080 = int_to_ptr.vmem [resolvable:$true] %s3079
      %3082 = dma.vmem_to_hbm [thread:$0]  %s3080, 128, %s10, [#allocation4]
    $region69: #{tpu_custom_call.1} parent=1 // pred_fallthru
      _
    // Predicated region
    $region70: #{tpu_custom_call.1} parent=1 // pred_check
      _
    $region71: #{tpu_custom_call.1} parent=1 // pred_check_branch
      %3084 = sbr.rel (0) target = $region73
    $region72: #{tpu_custom_call.1} parent=1 // pred_region
      %3085 = dma.done [#allocation4], 128
    $region73: #{tpu_custom_call.1} parent=1 // pred_fallthru
      _
    %3086 = vsyncpa [#allocation3], 1
    %3087 = vsyncpa [#allocation8], 1
    %3088 = vsyncpa [#allocation11], 1
    %3089 = vsyncpa [#allocation4], 1
    %3090 = vsyncpa [#allocation5], 1

// kernel: tpu_custom_call.1
$region0: #{tpu_custom_call.1}
  #allocation0 [shape = 'u32[]', space=smem, size = 0x4, offset = 0x4, fixed_abs, tag = 'smem constant byte address 0x4 - core index']
  #allocation1 [shape = 'u32[144,128]{1,0:T(1,128)}', space=vmem, size = 0x12000, scoped, tag = 'internal scratch']
  %s0 = inlined_call_operand.hbm [shape: f32[3], index: 0, kind: input, shape index: {}]
  %s1 = inlined_call_operand.hbm [shape: bf16[8,128], index: 1, kind: input, shape index: {}]
  %s2 = inlined_call_operand.hbm [shape: bf16[128,896], index: 2, kind: input, shape index: {}]
  %s3 = inlined_call_operand.vmem [shape: f32[1,896], index: 3, kind: input, shape index: {}]
  %s4 = inlined_call_operand.hbm [shape: bf16[896,512], index: 4, kind: input, shape index: {}]
  %s5 = inlined_call_operand.vmem [shape: f32[1,512], index: 5, kind: input, shape index: {}]
  %s6 = inlined_call_operand.hbm [shape: bf16[512,256], index: 6, kind: input, shape index: {}]
  %s7 = inlined_call_operand.vmem [shape: f32[1,256], index: 7, kind: input, shape index: {}]
  %s8 = inlined_call_operand.hbm [shape: bf16[256,128], index: 8, kind: input, shape index: {}]
  %s9 = inlined_call_operand.vmem [shape: f32[1,128], index: 9, kind: input, shape index: {}]
  %s10 = inlined_call_operand.hbm [shape: f32[8,128], index: 10, kind: output, shape index: {}]
  %s11 = sld [smem:[#allocation0]]
  $region74: #{tpu_custom_call.1} parent=0
    _
  %s13 = ssub.s32 1, %s11
  %s14 = scalar_select 0, %s13, %s11
  $region1: #{tpu_custom_call.1} parent=0
    #allocation2 [shape = 'u8[512]{0}', space=smem, size = 0x200, scoped, tag = 'input window, operand 0, single buffered']
    #allocation3 [shape = 's32[1]{0}', space=sflag, size = 0x4, scoped, tag = 'scoped memory for tpu_custom_call.1']
    #allocation4 [shape = 's32[1]{0}', space=sflag, size = 0x4, scoped, tag = 'scoped memory for tpu_custom_call.1']
    #allocation5 [shape = 's32[1]{0}', space=sflag, size = 0x4, scoped, tag = 'scoped memory for tpu_custom_call.1']
    #allocation6 [shape = 'u8[2048]{0}', space=vmem, size = 0x800, scoped, tag = 'input window, operand 1, single buffered']
    #allocation7 [shape = 'u8[229376]{0}', space=vmem, size = 0x38000, scoped, tag = 'input window, operand 2, single buffered']
    #allocation8 [shape = 's32[1]{0}', space=sflag, size = 0x4, scoped, tag = 'scoped memory for tpu_custom_call.1']
    #allocation9 [shape = 'u8[917504]{0}', space=vmem, size = 0xe0000, scoped, tag = 'input window, operand 4, single buffered']
    #allocation10 [shape = 'u8[262144]{0}', space=vmem, size = 0x40000, scoped, tag = 'input window, operand 6, single buffered']
    #allocation11 [shape = 's32[1]{0}', space=sflag, size = 0x4, scoped, tag = 'scoped memory for tpu_custom_call.1']
    #allocation12 [shape = 'u8[65536]{0}', space=vmem, size = 0x10000, scoped, tag = 'input window, operand 8, single buffered']
    #allocation13 [shape = 'u8[4096]{0}', space=vmem, size = 0x1000, scoped, tag = 'output window, operand 0, single buffered']
    %15 = vsyncpa [#allocation5], 0
    %16 = vsyncpa [#allocation3], 0
    %17 = vsyncpa [#allocation8], 0
    %18 = vsyncpa [#allocation11], 0
    %19 = vsyncpa [#allocation4], 0
    // Predicated region
    $region2: #{tpu_custom_call.1} parent=1 // pred_check
      _
    $region3: #{tpu_custom_call.1} parent=1 // pred_check_branch
      %21 = sbr.rel (0) target = $region5
    $region4: #{tpu_custom_call.1} parent=1 // pred_region
      %s23 = ssub.s32 16, 16
      %24 = vsyncadd [#allocation5], %s23
      %27 = dma.hbm_to_smem %s0, 16, [#allocation2], [#allocation5]
    $region5: #{tpu_custom_call.1} parent=1 // pred_fallthru
      _
    // Predicated region
    $region6: #{tpu_custom_call.1} parent=1 // pred_check
      _
    $region7: #{tpu_custom_call.1} parent=1 // pred_check_branch
      %29 = sbr.rel (0) target = $region9
    $region8: #{tpu_custom_call.1} parent=1 // pred_region
      %s31 = ssub.s32 64, 64
      %32 = vsyncadd [#allocation3], %s31
      %s34 = sshll.u32 [#allocation6], 4
      %s35 = int_to_ptr.vmem [resolvable:$true] %s34
      %37 = dma.hbm_to_vmem [thread:$0]  %s1, 64, %s35, [#allocation3]
    $region9: #{tpu_custom_call.1} parent=1 // pred_fallthru
      _
    // Predicated region
    $region10: #{tpu_custom_call.1} parent=1 // pred_check
      _
    $region11: #{tpu_custom_call.1} parent=1 // pred_check_branch
      %39 = sbr.rel (0) target = $region13
    $region12: #{tpu_custom_call.1} parent=1 // pred_region
      %s41 = ssub.s32 7168, 7168
      %42 = vsyncadd [#allocation8], %s41
      %s43 = sshll.u32 [#allocation7], 4
      %s44 = int_to_ptr.vmem [resolvable:$true] %s43
      %49 = dma.hbm_to_vmem [thread:$0]  %s2, 7168, %s44, [#allocation8], 448, 448, 28
    $region13: #{tpu_custom_call.1} parent=1 // pred_fallthru
      _
    // Predicated region
    $region14: #{tpu_custom_call.1} parent=1 // pred_check
      _
    $region15: #{tpu_custom_call.1} parent=1 // pred_check_branch
      %51 = sbr.rel (0) target = $region17
    $region16: #{tpu_custom_call.1} parent=1 // pred_region
      _
    $region17: #{tpu_custom_call.1} parent=1 // pred_fallthru
      _
    // Predicated region
    $region18: #{tpu_custom_call.1} parent=1 // pred_check
      _
    $region19: #{tpu_custom_call.1} parent=1 // pred_check_branch
      %53 = sbr.rel (0) target = $region21
    $region20: #{tpu_custom_call.1} parent=1 // pred_region
      %s55 = ssub.s32 28672, 28672
      %56 = vsyncadd [#allocation8], %s55
      %s57 = sshll.u32 [#allocation9], 4
      %s58 = int_to_ptr.vmem [resolvable:$true] %s57
      %63 = dma.hbm_to_vmem [thread:$0]  %s4, 28672, %s58, [#allocation8], 256, 256, 16
    $region21: #{tpu_custom_call.1} parent=1 // pred_fallthru
      _
    // Predicated region
    $region22: #{tpu_custom_call.1} parent=1 // pred_check
      _
    $region23: #{tpu_custom_call.1} parent=1 // pred_check_branch
      %65 = sbr.rel (0) target = $region25
    $region24: #{tpu_custom_call.1} parent=1 // pred_region
      _
    $region25: #{tpu_custom_call.1} parent=1 // pred_fallthru
      _
    // Predicated region
    $region26: #{tpu_custom_call.1} parent=1 // pred_check
      _
    $region27: #{tpu_custom_call.1} parent=1 // pred_check_branch
      %67 = sbr.rel (0) target = $region29
    $region28: #{tpu_custom_call.1} parent=1 // pred_region
      %s69 = ssub.s32 8192, 8192
      %70 = vsyncadd [#allocation11], %s69
      %s71 = sshll.u32 [#allocation10], 4
      %s72 = int_to_ptr.vmem [resolvable:$true] %s71
      %77 = dma.hbm_to_vmem [thread:$0]  %s6, 8192, %s72, [#allocation11], 128, 128, 8
    $region29: #{tpu_custom_call.1} parent=1 // pred_fallthru
      _
    // Predicated region
    $region30: #{tpu_custom_call.1} parent=1 // pred_check
      _
    $region31: #{tpu_custom_call.1} parent=1 // pred_check_branch
      %79 = sbr.rel (0) target = $region33
    $region32: #{tpu_custom_call.1} parent=1 // pred_region
      _
    $region33: #{tpu_custom_call.1} parent=1 // pred_fallthru
      _
    // Predicated region
    $region34: #{tpu_custom_call.1} parent=1 // pred_check
      _
    $region35: #{tpu_custom_call.1} parent=1 // pred_check_branch
      %81 = sbr.rel (0) target = $region37
    $region36: #{tpu_custom_call.1} parent=1 // pred_region
      %s83 = ssub.s32 2048, 2048
      %84 = vsyncadd [#allocation11], %s83
      %s85 = sshll.u32 [#allocation12], 4
      %s86 = int_to_ptr.vmem [resolvable:$true] %s85
      %91 = dma.hbm_to_vmem [thread:$0]  %s8, 2048, %s86, [#allocation11], 64, 64, 4
    $region37: #{tpu_custom_call.1} parent=1 // pred_fallthru
      _
    // Predicated region
    $region38: #{tpu_custom_call.1} parent=1 // pred_check
      _
    $region39: #{tpu_custom_call.1} parent=1 // pred_check_branch
      %93 = sbr.rel (0) target = $region41
    $region40: #{tpu_custom_call.1} parent=1 // pred_region
      _
    $region41: #{tpu_custom_call.1} parent=1 // pred_fallthru
      _
    // Predicated region
    $region42: #{tpu_custom_call.1} parent=1 // pred_check
      _
    $region43: #{tpu_custom_call.1} parent=1 // pred_check_branch
      %95 = sbr.rel (0) target = $region45
    $region44: #{tpu_custom_call.1} parent=1 // pred_region
      %96 = dma.done [#allocation5], 16
    $region45: #{tpu_custom_call.1} parent=1 // pred_fallthru
      _
    // Predicated region
    $region46: #{tpu_custom_call.1} parent=1 // pred_check
      _
    $region47: #{tpu_custom_call.1} parent=1 // pred_check_branch
      %98 = sbr.rel (0) target = $region49
    $region48: #{tpu_custom_call.1} parent=1 // pred_region
      %99 = dma.done [#allocation3], 64
    $region49: #{tpu_custom_call.1} parent=1 // pred_fallthru
      _
    // Predicated region
    $region50: #{tpu_custom_call.1} parent=1 // pred_check
      _
    $region51: #{tpu_custom_call.1} parent=1 // pred_check_branch
      %101 = sbr.rel (0) target = $region53
    $region52: #{tpu_custom_call.1} parent=1 // pred_region
      %102 = dma.done [#allocation8], 7168
    $region53: #{tpu_custom_call.1} parent=1 // pred_fallthru
      _
    // Predicated region
    $region54: #{tpu_custom_call.1} parent=1 // pred_check
      _
    $region55: #{tpu_custom_call.1} parent=1 // pred_check_branch
      %104 = sbr.rel (0) target = $region57
    $region56: #{tpu_custom_call.1} parent=1 // pred_region
      %105 = dma.done [#allocation8], 28672
    $region57: #{tpu_custom_call.1} parent=1 // pred_fallthru
      _
    // Predicated region
    $region58: #{tpu_custom_call.1} parent=1 // pred_check
      _
    $region59: #{tpu_custom_call.1} parent=1 // pred_check_branch
      %107 = sbr.rel (0) target = $region61
    $region60: #{tpu_custom_call.1} parent=1 // pred_region
      %108 = dma.done [#allocation11], 8192
    $region61: #{tpu_custom_call.1} parent=1 // pred_fallthru
      _
    // Predicated region
    $region62: #{tpu_custom_call.1} parent=1 // pred_check
      _
    $region63: #{tpu_custom_call.1} parent=1 // pred_check_branch
      %110 = sbr.rel (0) target = $region65
    $region64: #{tpu_custom_call.1} parent=1 // pred_region
      %111 = dma.done [#allocation11], 2048
    $region65: #{tpu_custom_call.1} parent=1 // pred_fallthru
      _
    %112 = sfence
    %s114 = sld [smem:[#allocation2]]
    %s115 = sld [smem:[#allocation2 + $0x1]]
    %s116 = sld [smem:[#allocation2 + $0x2]]
    %v117 = vld [vmem:[%s3] sm:$0xff]
    %v118 = vld [vmem:[%s5] sm:$0xf]
    %v119 = vld [vmem:[%s7] sm:$0x3]
    %v120 = vld [vmem:[%s9] sm:$0x1]
    %v121 = vld [vmem:[#allocation6] sm:$0xf]
    %v122 = vld [vmem:[#allocation7] sm:$0xff]
    %v123 = vld [vmem:[#allocation7 + $0x8] sm:$0xff]
    %v124 = vld [vmem:[#allocation7 + $0x10] sm:$0xff]
    %v125 = vld [vmem:[#allocation7 + $0x18] sm:$0xf]
    %v126 = vld [vmem:[#allocation7 + $0x1c] sm:$0xff]
    %v127 = vld [vmem:[#allocation7 + $0x24] sm:$0xff]
    %v128 = vld [vmem:[#allocation7 + $0x2c] sm:$0xff]
    %v129 = vld [vmem:[#allocation7 + $0x34] sm:$0xf]
    %v130 = vld [vmem:[#allocation7 + $0x38] sm:$0xff]
    %v131 = vld [vmem:[#allocation7 + $0x40] sm:$0xff]
    %v132 = vld [vmem:[#allocation7 + $0x48] sm:$0xff]
    %v133 = vld [vmem:[#allocation7 + $0x50] sm:$0xf]
    %v134 = vld [vmem:[#allocation7 + $0x54] sm:$0xff]
    %v135 = vld [vmem:[#allocation7 + $0x5c] sm:$0xff]
    %v136 = vld [vmem:[#allocation7 + $0x64] sm:$0xff]
    %v137 = vld [vmem:[#allocation7 + $0x6c] sm:$0xf]
    %v138 = vld [vmem:[#allocation7 + $0x70] sm:$0xff]
    %v139 = vld [vmem:[#allocation7 + $0x78] sm:$0xff]
    %v140 = vld [vmem:[#allocation7 + $0x80] sm:$0xff]
    %v141 = vld [vmem:[#allocation7 + $0x88] sm:$0xf]
    %v142 = vld [vmem:[#allocation7 + $0x8c] sm:$0xff]
    %v143 = vld [vmem:[#allocation7 + $0x94] sm:$0xff]
    %v144 = vld [vmem:[#allocation7 + $0x9c] sm:$0xff]
    %v145 = vld [vmem:[#allocation7 + $0xa4] sm:$0xf]
    %v146 = vld [vmem:[#allocation7 + $0xa8] sm:$0xff]
    %v147 = vld [vmem:[#allocation7 + $0xb0] sm:$0xff]
    %v148 = vld [vmem:[#allocation7 + $0xb8] sm:$0xff]
    %v149 = vld [vmem:[#allocation7 + $0xc0] sm:$0xf]
    %v150 = vld [vmem:[#allocation7 + $0xc4] sm:$0xff]
    %v151 = vld [vmem:[#allocation7 + $0xcc] sm:$0xff]
    %v152 = vld [vmem:[#allocation7 + $0xd4] sm:$0xff]
    %v153 = vld [vmem:[#allocation7 + $0xdc] sm:$0xf]
    %v154 = vld [vmem:[#allocation7 + $0xe0] sm:$0xff]
    %v155 = vld [vmem:[#allocation7 + $0xe8] sm:$0xff]
    %v156 = vld [vmem:[#allocation7 + $0xf0] sm:$0xff]
    %v157 = vld [vmem:[#allocation7 + $0xf8] sm:$0xf]
    %v158 = vld [vmem:[#allocation7 + $0xfc] sm:$0xff]
    %v159 = vld [vmem:[#allocation7 + $0x104] sm:$0xff]
    %v160 = vld [vmem:[#allocation7 + $0x10c] sm:$0xff]
    %v161 = vld [vmem:[#allocation7 + $0x114] sm:$0xf]
    %v162 = vld [vmem:[#allocation7 + $0x118] sm:$0xff]
    %v163 = vld [vmem:[#allocation7 + $0x120] sm:$0xff]
    %v164 = vld [vmem:[#allocation7 + $0x128] sm:$0xff]
    %v165 = vld [vmem:[#allocation7 + $0x130] sm:$0xf]
    %v166 = vld [vmem:[#allocation7 + $0x134] sm:$0xff]
    %v167 = vld [vmem:[#allocation7 + $0x13c] sm:$0xff]
    %v168 = vld [vmem:[#allocation7 + $0x144] sm:$0xff]
    %v169 = vld [vmem:[#allocation7 + $0x14c] sm:$0xf]
    %v170 = vld [vmem:[#allocation7 + $0x150] sm:$0xff]
    %v171 = vld [vmem:[#allocation7 + $0x158] sm:$0xff]
    %v172 = vld [vmem:[#allocation7 + $0x160] sm:$0xff]
    %v173 = vld [vmem:[#allocation7 + $0x168] sm:$0xf]
    %v174 = vld [vmem:[#allocation7 + $0x16c] sm:$0xff]
    %v175 = vld [vmem:[#allocation7 + $0x174] sm:$0xff]
    %v176 = vld [vmem:[#allocation7 + $0x17c] sm:$0xff]
    %v177 = vld [vmem:[#allocation7 + $0x184] sm:$0xf]
    %v178 = vld [vmem:[#allocation7 + $0x188] sm:$0xff]
    %v179 = vld [vmem:[#allocation7 + $0x190] sm:$0xff]
    %v180 = vld [vmem:[#allocation7 + $0x198] sm:$0xff]
    %v181 = vld [vmem:[#allocation7 + $0x1a0] sm:$0xf]
    %v182 = vld [vmem:[#allocation7 + $0x1a4] sm:$0xff]
    %v183 = vld [vmem:[#allocation7 + $0x1ac] sm:$0xff]
    %v184 = vld [vmem:[#allocation7 + $0x1b4] sm:$0xff]
    %v185 = vld [vmem:[#allocation7 + $0x1bc] sm:$0xf]
    %v187 = vlaneseq
    %v188 = vshrl.u32 %v187, 7
    %v189 = vsub.s32 0, %v188
    %v190 = vrot.slane %v117, %v189
    %v191 = vlaneseq
    %v192 = vshrl.u32 %v191, 7
    %v193 = vsub.s32 1, %v192
    %v194 = vrot.slane %v117, %v193
    %v195 = vlaneseq
    %v196 = vshrl.u32 %v195, 7
    %v197 = vsub.s32 2, %v196
    %v198 = vrot.slane %v117, %v197
    %v199 = vlaneseq
    %v200 = vshrl.u32 %v199, 7
    %v201 = vsub.s32 3, %v200
    %v202 = vrot.slane %v117, %v201
    %v203 = vlaneseq
    %v204 = vshrl.u32 %v203, 7
    %v205 = vsub.s32 4, %v204
    %v206 = vrot.slane %v117, %v205
    %v207 = vlaneseq
    %v208 = vshrl.u32 %v207, 7
    %v209 = vsub.s32 5, %v208
    %v210 = vrot.slane %v117, %v209
    %v211 = vlaneseq
    %v212 = vshrl.u32 %v211, 7
    %v213 = vsub.s32 6, %v212
    %v214 = vrot.slane %v117, %v213
    %v286 = vunpack.c.l.b16 %v122
    %v287 = vunpack.c.h.b16 %v122
    %v288 = vunpack.c.l.b16 %v123
    %v289 = vunpack.c.h.b16 %v123
    %v290 = vunpack.c.l.b16 %v124
    %v291 = vunpack.c.h.b16 %v124
    %v292 = vunpack.c.l.b16 %v125
    %v293 = vunpack.c.l.b16 %v126
    %v294 = vunpack.c.h.b16 %v126
    %v295 = vunpack.c.l.b16 %v127
    %v296 = vunpack.c.h.b16 %v127
    %v297 = vunpack.c.l.b16 %v128
    %v298 = vunpack.c.h.b16 %v128
    %v299 = vunpack.c.l.b16 %v129
    %v300 = vunpack.c.l.b16 %v130
    %v301 = vunpack.c.h.b16 %v130
    %v302 = vunpack.c.l.b16 %v131
    %v303 = vunpack.c.h.b16 %v131
    %v304 = vunpack.c.l.b16 %v132
    %v305 = vunpack.c.h.b16 %v132
    %v306 = vunpack.c.l.b16 %v133
    %v307 = vunpack.c.l.b16 %v134
    %v308 = vunpack.c.h.b16 %v134
    %v309 = vunpack.c.l.b16 %v135
    %v310 = vunpack.c.h.b16 %v135
    %v311 = vunpack.c.l.b16 %v136
    %v312 = vunpack.c.h.b16 %v136
    %v313 = vunpack.c.l.b16 %v137
    %v314 = vunpack.c.l.b16 %v138
    %v315 = vunpack.c.h.b16 %v138
    %v316 = vunpack.c.l.b16 %v139
    %v317 = vunpack.c.h.b16 %v139
    %v318 = vunpack.c.l.b16 %v140
    %v319 = vunpack.c.h.b16 %v140
    %v320 = vunpack.c.l.b16 %v141
    %v321 = vunpack.c.l.b16 %v142
    %v322 = vunpack.c.h.b16 %v142
    %v323 = vunpack.c.l.b16 %v143
    %v324 = vunpack.c.h.b16 %v143
    %v325 = vunpack.c.l.b16 %v144
    %v326 = vunpack.c.h.b16 %v144
    %v327 = vunpack.c.l.b16 %v145
    %v328 = vunpack.c.l.b16 %v146
    %v329 = vunpack.c.h.b16 %v146
    %v330 = vunpack.c.l.b16 %v147
    %v331 = vunpack.c.h.b16 %v147
    %v332 = vunpack.c.l.b16 %v148
    %v333 = vunpack.c.h.b16 %v148
    %v334 = vunpack.c.l.b16 %v149
    %v335 = vunpack.c.l.b16 %v150
    %v336 = vunpack.c.h.b16 %v150
    %v337 = vunpack.c.l.b16 %v151
    %v338 = vunpack.c.h.b16 %v151
    %v339 = vunpack.c.l.b16 %v152
    %v340 = vunpack.c.h.b16 %v152
    %v341 = vunpack.c.l.b16 %v153
    %v342 = vunpack.c.l.b16 %v154
    %v343 = vunpack.c.h.b16 %v154
    %v344 = vunpack.c.l.b16 %v155
    %v345 = vunpack.c.h.b16 %v155
    %v346 = vunpack.c.l.b16 %v156
    %v347 = vunpack.c.h.b16 %v156
    %v348 = vunpack.c.l.b16 %v157
    %v349 = vunpack.c.l.b16 %v158
    %v350 = vunpack.c.h.b16 %v158
    %v351 = vunpack.c.l.b16 %v159
    %v352 = vunpack.c.h.b16 %v159
    %v353 = vunpack.c.l.b16 %v160
    %v354 = vunpack.c.h.b16 %v160
    %v355 = vunpack.c.l.b16 %v161
    %v356 = vunpack.c.l.b16 %v162
    %v357 = vunpack.c.h.b16 %v162
    %v358 = vunpack.c.l.b16 %v163
    %v359 = vunpack.c.h.b16 %v163
    %v360 = vunpack.c.l.b16 %v164
    %v361 = vunpack.c.h.b16 %v164
    %v362 = vunpack.c.l.b16 %v165
    %v363 = vunpack.c.l.b16 %v166
    %v364 = vunpack.c.h.b16 %v166
    %v365 = vunpack.c.l.b16 %v167
    %v366 = vunpack.c.h.b16 %v167
    %v367 = vunpack.c.l.b16 %v168
    %v368 = vunpack.c.h.b16 %v168
    %v369 = vunpack.c.l.b16 %v169
    %v370 = vunpack.c.l.b16 %v170
    %v371 = vunpack.c.h.b16 %v170
    %v372 = vunpack.c.l.b16 %v171
    %v373 = vunpack.c.h.b16 %v171
    %v374 = vunpack.c.l.b16 %v172
    %v375 = vunpack.c.h.b16 %v172
    %v376 = vunpack.c.l.b16 %v173
    %v377 = vunpack.c.l.b16 %v174
    %v378 = vunpack.c.h.b16 %v174
    %v379 = vunpack.c.l.b16 %v175
    %v380 = vunpack.c.h.b16 %v175
    %v381 = vunpack.c.l.b16 %v176
    %v382 = vunpack.c.h.b16 %v176
    %v383 = vunpack.c.l.b16 %v177
    %v384 = vunpack.c.l.b16 %v178
    %v385 = vunpack.c.h.b16 %v178
    %v386 = vunpack.c.l.b16 %v179
    %v387 = vunpack.c.h.b16 %v179
    %v388 = vunpack.c.l.b16 %v180
    %v389 = vunpack.c.h.b16 %v180
    %v390 = vunpack.c.l.b16 %v181
    %v391 = vunpack.c.l.b16 %v182
    %v392 = vunpack.c.h.b16 %v182
    %v393 = vunpack.c.l.b16 %v183
    %v394 = vunpack.c.h.b16 %v183
    %v395 = vunpack.c.l.b16 %v184
    %v396 = vunpack.c.h.b16 %v184
    %v397 = vunpack.c.l.b16 %v185
    %v398 = vpack.c.b16 %v293, %v286
    %v399 = vpack.c.b16 %v294, %v287
    %v400 = vpack.c.b16 %v295, %v288
    %v401 = vpack.c.b16 %v296, %v289
    %v402 = vpack.c.b16 %v297, %v290
    %v403 = vpack.c.b16 %v298, %v291
    %v404 = vpack.c.b16 %v299, %v292
    %v405 = vpack.c.b16 %v307, %v300
    %v406 = vpack.c.b16 %v308, %v301
    %v407 = vpack.c.b16 %v309, %v302
    %v408 = vpack.c.b16 %v310, %v303
    %v409 = vpack.c.b16 %v311, %v304
    %v410 = vpack.c.b16 %v312, %v305
    %v411 = vpack.c.b16 %v313, %v306
    %v412 = vpack.c.b16 %v321, %v314
    %v413 = vpack.c.b16 %v322, %v315
    %v414 = vpack.c.b16 %v323, %v316
    %v415 = vpack.c.b16 %v324, %v317
    %v416 = vpack.c.b16 %v325, %v318
    %v417 = vpack.c.b16 %v326, %v319
    %v418 = vpack.c.b16 %v327, %v320
    %v419 = vpack.c.b16 %v335, %v328
    %v420 = vpack.c.b16 %v336, %v329
    %v421 = vpack.c.b16 %v337, %v330
    %v422 = vpack.c.b16 %v338, %v331
    %v423 = vpack.c.b16 %v339, %v332
    %v424 = vpack.c.b16 %v340, %v333
    %v425 = vpack.c.b16 %v341, %v334
    %v426 = vpack.c.b16 %v349, %v342
    %v427 = vpack.c.b16 %v350, %v343
    %v428 = vpack.c.b16 %v351, %v344
    %v429 = vpack.c.b16 %v352, %v345
    %v430 = vpack.c.b16 %v353, %v346
    %v431 = vpack.c.b16 %v354, %v347
    %v432 = vpack.c.b16 %v355, %v348
    %v433 = vpack.c.b16 %v363, %v356
    %v434 = vpack.c.b16 %v364, %v357
    %v435 = vpack.c.b16 %v365, %v358
    %v436 = vpack.c.b16 %v366, %v359
    %v437 = vpack.c.b16 %v367, %v360
    %v438 = vpack.c.b16 %v368, %v361
    %v439 = vpack.c.b16 %v369, %v362
    %v440 = vpack.c.b16 %v377, %v370
    %v441 = vpack.c.b16 %v378, %v371
    %v442 = vpack.c.b16 %v379, %v372
    %v443 = vpack.c.b16 %v380, %v373
    %v444 = vpack.c.b16 %v381, %v374
    %v445 = vpack.c.b16 %v382, %v375
    %v446 = vpack.c.b16 %v383, %v376
    %v447 = vpack.c.b16 %v391, %v384
    %v448 = vpack.c.b16 %v392, %v385
    %v449 = vpack.c.b16 %v393, %v386
    %v450 = vpack.c.b16 %v394, %v387
    %v451 = vpack.c.b16 %v395, %v388
    %v452 = vpack.c.b16 %v396, %v389
    %v453 = vpack.c.b16 %v397, %v390
    %510 = vmatprep.subr.bf16.mxu0 %v399
    %511 = vmatpush1.bf16.msra.mxu0 %v398
    %512 = vmatprep.subr.bf16.mxu0 %v406
    %513 = vmatpush1.bf16.msra.mxu0 %v405
    %514 = vmatprep.subr.bf16.mxu0 %v413
    %515 = vmatpush1.bf16.msra.mxu0 %v412
    %516 = vmatprep.subr.bf16.mxu0 %v420
    %517 = vmatpush1.bf16.msra.mxu0 %v419
    %518 = vmatprep.subr.bf16.mxu0 %v427
    %519 = vmatpush1.bf16.msra.mxu0 %v426
    %520 = vmatprep.subr.bf16.mxu0 %v434
    %521 = vmatpush1.bf16.msra.mxu0 %v433
    %522 = vmatprep.subr.bf16.mxu0 %v441
    %523 = vmatpush1.bf16.msra.mxu0 %v440
    %524 = vmatprep.subr.bf16.mxu0 %v448
    %525 = vmatpush1.bf16.msra.mxu0 %v447
    %526 = vmatprep.subr.bf16.mxu0 0
    %527 = vmatpush1.bf16.msra.mxu0 0
    %528 = vmatprep.subr.bf16.mxu0 0
    %529 = vmatpush1.bf16.msra.mxu0 0
    %530 = vmatprep.subr.bf16.mxu0 0
    %531 = vmatpush1.bf16.msra.mxu0 0
    %532 = vmatprep.subr.bf16.mxu0 0
    %533 = vmatpush1.bf16.msra.mxu0 0
    %534 = vmatprep.subr.bf16.mxu0 0
    %535 = vmatpush1.bf16.msra.mxu0 0
    %536 = vmatprep.subr.bf16.mxu0 0
    %537 = vmatpush1.bf16.msra.mxu0 0
    %538 = vmatprep.subr.bf16.mxu0 0
    %539 = vmatpush1.bf16.msra.mxu0 0
    %540 = vmatprep.subr.bf16.mxu0 0
    %541 = vmatpush1.bf16.msra.mxu0 0
    %542 = vmatprep.mubr.bf16.mxu0 0
    %543 = vmatmul.mubr.bf16.gmra.mrb[0].mxu0 %v121
    %v544 = vpop.f32.mrb[0].mxu0
    %v545 = vadd.f32 %v190, %v544
    %v546 = vpop.f32.mrb[0].mxu0
    %v547 = vadd.f32 %v194, %v546
    %v548 = vpop.f32.mrb[0].mxu0
    %v549 = vpop.f32.mrb[0].mxu0
    %550 = vdwg.mxu0
    %551 = vmatprep.subr.bf16.mxu0 %v401
    %552 = vmatpush1.bf16.msra.mxu0 %v400
    %553 = vmatprep.subr.bf16.mxu0 %v408
    %554 = vmatpush1.bf16.msra.mxu0 %v407
    %555 = vmatprep.subr.bf16.mxu0 %v415
    %556 = vmatpush1.bf16.msra.mxu0 %v414
    %557 = vmatprep.subr.bf16.mxu0 %v422
    %558 = vmatpush1.bf16.msra.mxu0 %v421
    %559 = vmatprep.subr.bf16.mxu0 %v429
    %560 = vmatpush1.bf16.msra.mxu0 %v428
    %561 = vmatprep.subr.bf16.mxu0 %v436
    %562 = vmatpush1.bf16.msra.mxu0 %v435
    %563 = vmatprep.subr.bf16.mxu0 %v443
    %564 = vmatpush1.bf16.msra.mxu0 %v442
    %565 = vmatprep.subr.bf16.mxu0 %v450
    %566 = vmatpush1.bf16.msra.mxu0 %v449
    %567 = vmatprep.subr.bf16.mxu0 0
    %568 = vmatpush1.bf16.msra.mxu0 0
    %569 = vmatprep.subr.bf16.mxu0 0
    %570 = vmatpush1.bf16.msra.mxu0 0
    %571 = vmatprep.subr.bf16.mxu0 0
    %572 = vmatpush1.bf16.msra.mxu0 0
    %573 = vmatprep.subr.bf16.mxu0 0
    %574 = vmatpush1.bf16.msra.mxu0 0
    %575 = vmatprep.subr.bf16.mxu0 0
    %576 = vmatpush1.bf16.msra.mxu0 0
    %577 = vmatprep.subr.bf16.mxu0 0
    %578 = vmatpush1.bf16.msra.mxu0 0
    %579 = vmatprep.subr.bf16.mxu0 0
    %580 = vmatpush1.bf16.msra.mxu0 0
    %581 = vmatprep.subr.bf16.mxu0 0
    %582 = vmatpush1.bf16.msra.mxu0 0
    %583 = vmatprep.mubr.bf16.mxu0 0
    %584 = vmatmul.mubr.bf16.gmra.mrb[0].mxu0 %v121
    %v585 = vpop.f32.mrb[0].mxu0
    %v586 = vadd.f32 %v198, %v585
    %v587 = vpop.f32.mrb[0].mxu0
    %v588 = vadd.f32 %v202, %v587
    %v589 = vpop.f32.mrb[0].mxu0
    %v590 = vpop.f32.mrb[0].mxu0
    %591 = vdwg.mxu0
    %592 = vmatprep.subr.bf16.mxu0 %v403
    %593 = vmatpush1.bf16.msra.mxu0 %v402
    %594 = vmatprep.subr.bf16.mxu0 %v410
    %595 = vmatpush1.bf16.msra.mxu0 %v409
    %596 = vmatprep.subr.bf16.mxu0 %v417
    %597 = vmatpush1.bf16.msra.mxu0 %v416
    %598 = vmatprep.subr.bf16.mxu0 %v424
    %599 = vmatpush1.bf16.msra.mxu0 %v423
    %600 = vmatprep.subr.bf16.mxu0 %v431
    %601 = vmatpush1.bf16.msra.mxu0 %v430
    %602 = vmatprep.subr.bf16.mxu0 %v438
    %603 = vmatpush1.bf16.msra.mxu0 %v437
    %604 = vmatprep.subr.bf16.mxu0 %v445
    %605 = vmatpush1.bf16.msra.mxu0 %v444
    %606 = vmatprep.subr.bf16.mxu0 %v452
    %607 = vmatpush1.bf16.msra.mxu0 %v451
    %608 = vmatprep.subr.bf16.mxu0 0
    %609 = vmatpush1.bf16.msra.mxu0 0
    %610 = vmatprep.subr.bf16.mxu0 0
    %611 = vmatpush1.bf16.msra.mxu0 0
    %612 = vmatprep.subr.bf16.mxu0 0
    %613 = vmatpush1.bf16.msra.mxu0 0
    %614 = vmatprep.subr.bf16.mxu0 0
    %615 = vmatpush1.bf16.msra.mxu0 0
    %616 = vmatprep.subr.bf16.mxu0 0
    %617 = vmatpush1.bf16.msra.mxu0 0
    %618 = vmatprep.subr.bf16.mxu0 0
    %619 = vmatpush1.bf16.msra.mxu0 0
    %620 = vmatprep.subr.bf16.mxu0 0
    %621 = vmatpush1.bf16.msra.mxu0 0
    %622 = vmatprep.subr.bf16.mxu0 0
    %623 = vmatpush1.bf16.msra.mxu0 0
    %624 = vmatprep.mubr.bf16.mxu0 0
    %625 = vmatmul.mubr.bf16.gmra.mrb[0].mxu0 %v121
    %v626 = vpop.f32.mrb[0].mxu0
    %v627 = vadd.f32 %v206, %v626
    %v628 = vpop.f32.mrb[0].mxu0
    %v629 = vadd.f32 %v210, %v628
    %v630 = vpop.f32.mrb[0].mxu0
    %v631 = vpop.f32.mrb[0].mxu0
    %632 = vdwg.mxu0
    %633 = vmatprep.subr.bf16.mxu0 0
    %634 = vmatpush1.bf16.msra.mxu0 %v404
    %635 = vmatprep.subr.bf16.mxu0 0
    %636 = vmatpush1.bf16.msra.mxu0 %v411
    %637 = vmatprep.subr.bf16.mxu0 0
    %638 = vmatpush1.bf16.msra.mxu0 %v418
    %639 = vmatprep.subr.bf16.mxu0 0
    %640 = vmatpush1.bf16.msra.mxu0 %v425
    %641 = vmatprep.subr.bf16.mxu0 0
    %642 = vmatpush1.bf16.msra.mxu0 %v432
    %643 = vmatprep.subr.bf16.mxu0 0
    %644 = vmatpush1.bf16.msra.mxu0 %v439
    %645 = vmatprep.subr.bf16.mxu0 0
    %646 = vmatpush1.bf16.msra.mxu0 %v446
    %647 = vmatprep.subr.bf16.mxu0 0
    %648 = vmatpush1.bf16.msra.mxu0 %v453
    %649 = vmatprep.subr.bf16.mxu0 0
    %650 = vmatpush1.bf16.msra.mxu0 0
    %651 = vmatprep.subr.bf16.mxu0 0
    %652 = vmatpush1.bf16.msra.mxu0 0
    %653 = vmatprep.subr.bf16.mxu0 0
    %654 = vmatpush1.bf16.msra.mxu0 0
    %655 = vmatprep.subr.bf16.mxu0 0
    %656 = vmatpush1.bf16.msra.mxu0 0
    %657 = vmatprep.subr.bf16.mxu0 0
    %658 = vmatpush1.bf16.msra.mxu0 0
    %659 = vmatprep.subr.bf16.mxu0 0
    %660 = vmatpush1.bf16.msra.mxu0 0
    %661 = vmatprep.subr.bf16.mxu0 0
    %662 = vmatpush1.bf16.msra.mxu0 0
    %663 = vmatprep.subr.bf16.mxu0 0
    %664 = vmatpush1.bf16.msra.mxu0 0
    %665 = vmatprep.mubr.bf16.mxu0 0
    %666 = vmatmul.mubr.bf16.gmra.mrb[0].mxu0 %v121
    %v667 = vpop.f32.mrb[0].mxu0
    %v668 = vadd.f32 %v214, %v667
    %v669 = vpop.f32.mrb[0].mxu0
    %v670 = vpop.f32.mrb[0].mxu0
    %v671 = vpop.f32.mrb[0].mxu0
    %672 = vdwg.mxu0
    %vm673 = vcmp.gt.f32.partialorder %v545, 0.0
    %vm674 = vcmp.gt.f32.partialorder %v547, 0.0
    %vm675 = vcmp.gt.f32.partialorder %v586, 0.0
    %vm676 = vcmp.gt.f32.partialorder %v588, 0.0
    %vm677 = vcmp.gt.f32.partialorder %v627, 0.0
    %vm678 = vcmp.gt.f32.partialorder %v629, 0.0
    %vm679 = vcmp.gt.f32.partialorder %v668, 0.0
    %v680 = vstv %s114
    %v681 = vmul.f32 %v680, %v545
    %v682 = vmul.f32 %v680, %v547
    %v683 = vmul.f32 %v680, %v586
    %v684 = vmul.f32 %v680, %v588
    %v685 = vmul.f32 %v680, %v627
    %v686 = vmul.f32 %v680, %v629
    %v687 = vmul.f32 %v680, %v668
    %v688 = vsel %vm673, %v545, %v681
    %v689 = vsel %vm674, %v547, %v682
    %v690 = vsel %vm675, %v586, %v683
    %v691 = vsel %vm676, %v588, %v684
    %v692 = vsel %vm677, %v627, %v685
    %v693 = vsel %vm678, %v629, %v686
    %v694 = vsel %vm679, %v668, %v687
    %v695 = vpack.c.bf16 %v688, %v688
    %v696 = vpack.c.bf16 %v689, %v689
    %v697 = vpack.c.bf16 %v690, %v690
    %v698 = vpack.c.bf16 %v691, %v691
    %v699 = vpack.c.bf16 %v692, %v692
    %v700 = vpack.c.bf16 %v693, %v693
    %v701 = vpack.c.bf16 %v694, %v694
    %v702 = vld [vmem:[#allocation9] sm:$0xff]
    %v703 = vld [vmem:[#allocation9 + $0x8] sm:$0xff]
    %v704 = vld [vmem:[#allocation9 + $0x10] sm:$0xff]
    %v705 = vld [vmem:[#allocation9 + $0x18] sm:$0xff]
    %v706 = vld [vmem:[#allocation9 + $0x20] sm:$0xff]
    %v707 = vld [vmem:[#allocation9 + $0x28] sm:$0xff]
    %v708 = vld [vmem:[#allocation9 + $0x30] sm:$0xff]
    %v709 = vld [vmem:[#allocation9 + $0x38] sm:$0xff]
    %v710 = vld [vmem:[#allocation9 + $0x40] sm:$0xff]
    %v711 = vld [vmem:[#allocation9 + $0x48] sm:$0xff]
    %v712 = vld [vmem:[#allocation9 + $0x50] sm:$0xff]
    %v713 = vld [vmem:[#allocation9 + $0x58] sm:$0xff]
    %v714 = vld [vmem:[#allocation9 + $0x60] sm:$0xff]
    %v715 = vld [vmem:[#allocation9 + $0x68] sm:$0xff]
    %v716 = vld [vmem:[#allocation9 + $0x70] sm:$0xff]
    %v717 = vld [vmem:[#allocation9 + $0x78] sm:$0xff]
    %v718 = vld [vmem:[#allocation9 + $0x80] sm:$0xff]
    %v719 = vld [vmem:[#allocation9 + $0x88] sm:$0xff]
    %v720 = vld [vmem:[#allocation9 + $0x90] sm:$0xff]
    %v721 = vld [vmem:[#allocation9 + $0x98] sm:$0xff]
    %v722 = vld [vmem:[#allocation9 + $0xa0] sm:$0xff]
    %v723 = vld [vmem:[#allocation9 + $0xa8] sm:$0xff]
    %v724 = vld [vmem:[#allocation9 + $0xb0] sm:$0xff]
    %v725 = vld [vmem:[#allocation9 + $0xb8] sm:$0xff]
    %v726 = vld [vmem:[#allocation9 + $0xc0] sm:$0xff]
    %v727 = vld [vmem:[#allocation9 + $0xc8] sm:$0xff]
    %v728 = vld [vmem:[#allocation9 + $0xd0] sm:$0xff]
    %v729 = vld [vmem:[#allocation9 + $0xd8] sm:$0xff]
    %v730 = vld [vmem:[#allocation9 + $0xe0] sm:$0xff]
    %v731 = vld [vmem:[#allocation9 + $0xe8] sm:$0xff]
    %v732 = vld [vmem:[#allocation9 + $0xf0] sm:$0xff]
    %v733 = vld [vmem:[#allocation9 + $0xf8] sm:$0xff]
    %v734 = vld [vmem:[#allocation9 + $0x100] sm:$0xff]
    %v735 = vld [vmem:[#allocation9 + $0x108] sm:$0xff]
    %v736 = vld [vmem:[#allocation9 + $0x110] sm:$0xff]
    %v737 = vld [vmem:[#allocation9 + $0x118] sm:$0xff]
    %v738 = vld [vmem:[#allocation9 + $0x120] sm:$0xff]
    %v739 = vld [vmem:[#allocation9 + $0x128] sm:$0xff]
    %v740 = vld [vmem:[#allocation9 + $0x130] sm:$0xff]
    %v741 = vld [vmem:[#allocation9 + $0x138] sm:$0xff]
    %v742 = vld [vmem:[#allocation9 + $0x140] sm:$0xff]
    %v743 = vld [vmem:[#allocation9 + $0x148] sm:$0xff]
    %v744 = vld [vmem:[#allocation9 + $0x150] sm:$0xff]
    %v745 = vld [vmem:[#allocation9 + $0x158] sm:$0xff]
    %v746 = vld [vmem:[#allocation9 + $0x160] sm:$0xff]
    %v747 = vld [vmem:[#allocation9 + $0x168] sm:$0xff]
    %v748 = vld [vmem:[#allocation9 + $0x170] sm:$0xff]
    %v749 = vld [vmem:[#allocation9 + $0x178] sm:$0xff]
    %v750 = vld [vmem:[#allocation9 + $0x180] sm:$0xff]
    %v751 = vld [vmem:[#allocation9 + $0x188] sm:$0xff]
    %v752 = vld [vmem:[#allocation9 + $0x190] sm:$0xff]
    %v753 = vld [vmem:[#allocation9 + $0x198] sm:$0xff]
    %v754 = vld [vmem:[#allocation9 + $0x1a0] sm:$0xff]
    %v755 = vld [vmem:[#allocation9 + $0x1a8] sm:$0xff]
    %v756 = vld [vmem:[#allocation9 + $0x1b0] sm:$0xff]
    %v757 = vld [vmem:[#allocation9 + $0x1b8] sm:$0xff]
    %v758 = vld [vmem:[#allocation9 + $0x1c0] sm:$0xff]
    %v759 = vld [vmem:[#allocation9 + $0x1c8] sm:$0xff]
    %v760 = vld [vmem:[#allocation9 + $0x1d0] sm:$0xff]
    %v761 = vld [vmem:[#allocation9 + $0x1d8] sm:$0xff]
    %v762 = vld [vmem:[#allocation9 + $0x1e0] sm:$0xff]
    %v763 = vld [vmem:[#allocation9 + $0x1e8] sm:$0xff]
    %v764 = vld [vmem:[#allocation9 + $0x1f0] sm:$0xff]
    %v765 = vld [vmem:[#allocation9 + $0x1f8] sm:$0xff]
    %v766 = vld [vmem:[#allocation9 + $0x200] sm:$0xff]
    %v767 = vld [vmem:[#allocation9 + $0x208] sm:$0xff]
    %v768 = vld [vmem:[#allocation9 + $0x210] sm:$0xff]
    %v769 = vld [vmem:[#allocation9 + $0x218] sm:$0xff]
    %v770 = vld [vmem:[#allocation9 + $0x220] sm:$0xff]
    %v771 = vld [vmem:[#allocation9 + $0x228] sm:$0xff]
    %v772 = vld [vmem:[#allocation9 + $0x230] sm:$0xff]
    %v773 = vld [vmem:[#allocation9 + $0x238] sm:$0xff]
    %v774 = vld [vmem:[#allocation9 + $0x240] sm:$0xff]
    %v775 = vld [vmem:[#allocation9 + $0x248] sm:$0xff]
    %v776 = vld [vmem:[#allocation9 + $0x250] sm:$0xff]
    %v777 = vld [vmem:[#allocation9 + $0x258] sm:$0xff]
    %v778 = vld [vmem:[#allocation9 + $0x260] sm:$0xff]
    %v779 = vld [vmem:[#allocation9 + $0x268] sm:$0xff]
    %v780 = vld [vmem:[#allocation9 + $0x270] sm:$0xff]
    %v781 = vld [vmem:[#allocation9 + $0x278] sm:$0xff]
    %v782 = vld [vmem:[#allocation9 + $0x280] sm:$0xff]
    %v783 = vld [vmem:[#allocation9 + $0x288] sm:$0xff]
    %v784 = vld [vmem:[#allocation9 + $0x290] sm:$0xff]
    %v785 = vld [vmem:[#allocation9 + $0x298] sm:$0xff]
    %v786 = vld [vmem:[#allocation9 + $0x2a0] sm:$0xff]
    %v787 = vld [vmem:[#allocation9 + $0x2a8] sm:$0xff]
    %v788 = vld [vmem:[#allocation9 + $0x2b0] sm:$0xff]
    %v789 = vld [vmem:[#allocation9 + $0x2b8] sm:$0xff]
    %v790 = vld [vmem:[#allocation9 + $0x2c0] sm:$0xff]
    %v791 = vld [vmem:[#allocation9 + $0x2c8] sm:$0xff]
    %v792 = vld [vmem:[#allocation9 + $0x2d0] sm:$0xff]
    %v793 = vld [vmem:[#allocation9 + $0x2d8] sm:$0xff]
    %v794 = vld [vmem:[#allocation9 + $0x2e0] sm:$0xff]
    %v795 = vld [vmem:[#allocation9 + $0x2e8] sm:$0xff]
    %v796 = vld [vmem:[#allocation9 + $0x2f0] sm:$0xff]
    %v797 = vld [vmem:[#allocation9 + $0x2f8] sm:$0xff]
    %v798 = vld [vmem:[#allocation9 + $0x300] sm:$0xff]
    %v799 = vld [vmem:[#allocation9 + $0x308] sm:$0xff]
    %v800 = vld [vmem:[#allocation9 + $0x310] sm:$0xff]
    %v801 = vld [vmem:[#allocation9 + $0x318] sm:$0xff]
    %v802 = vld [vmem:[#allocation9 + $0x320] sm:$0xff]
    %v803 = vld [vmem:[#allocation9 + $0x328] sm:$0xff]
    %v804 = vld [vmem:[#allocation9 + $0x330] sm:$0xff]
    %v805 = vld [vmem:[#allocation9 + $0x338] sm:$0xff]
    %v806 = vld [vmem:[#allocation9 + $0x340] sm:$0xff]
    %v807 = vld [vmem:[#allocation9 + $0x348] sm:$0xff]
    %v808 = vld [vmem:[#allocation9 + $0x350] sm:$0xff]
    %v809 = vld [vmem:[#allocation9 + $0x358] sm:$0xff]
    %v810 = vld [vmem:[#allocation9 + $0x360] sm:$0xff]
    %v811 = vld [vmem:[#allocation9 + $0x368] sm:$0xff]
    %v812 = vld [vmem:[#allocation9 + $0x370] sm:$0xff]
    %v813 = vld [vmem:[#allocation9 + $0x378] sm:$0xff]
    %v814 = vld [vmem:[#allocation9 + $0x380] sm:$0xff]
    %v815 = vld [vmem:[#allocation9 + $0x388] sm:$0xff]
    %v816 = vld [vmem:[#allocation9 + $0x390] sm:$0xff]
    %v817 = vld [vmem:[#allocation9 + $0x398] sm:$0xff]
    %v818 = vld [vmem:[#allocation9 + $0x3a0] sm:$0xff]
    %v819 = vld [vmem:[#allocation9 + $0x3a8] sm:$0xff]
    %v820 = vld [vmem:[#allocation9 + $0x3b0] sm:$0xff]
    %v821 = vld [vmem:[#allocation9 + $0x3b8] sm:$0xff]
    %v822 = vld [vmem:[#allocation9 + $0x3c0] sm:$0xff]
    %v823 = vld [vmem:[#allocation9 + $0x3c8] sm:$0xff]
    %v824 = vld [vmem:[#allocation9 + $0x3d0] sm:$0xff]
    %v825 = vld [vmem:[#allocation9 + $0x3d8] sm:$0xff]
    %v826 = vld [vmem:[#allocation9 + $0x3e0] sm:$0xff]
    %v827 = vld [vmem:[#allocation9 + $0x3e8] sm:$0xff]
    %v828 = vld [vmem:[#allocation9 + $0x3f0] sm:$0xff]
    %v829 = vld [vmem:[#allocation9 + $0x3f8] sm:$0xff]
    %v830 = vld [vmem:[#allocation9 + $0x400] sm:$0xff]
    %v831 = vld [vmem:[#allocation9 + $0x408] sm:$0xff]
    %v832 = vld [vmem:[#allocation9 + $0x410] sm:$0xff]
    %v833 = vld [vmem:[#allocation9 + $0x418] sm:$0xff]
    %v834 = vld [vmem:[#allocation9 + $0x420] sm:$0xff]
    %v835 = vld [vmem:[#allocation9 + $0x428] sm:$0xff]
    %v836 = vld [vmem:[#allocation9 + $0x430] sm:$0xff]
    %v837 = vld [vmem:[#allocation9 + $0x438] sm:$0xff]
    %v838 = vld [vmem:[#allocation9 + $0x440] sm:$0xff]
    %v839 = vld [vmem:[#allocation9 + $0x448] sm:$0xff]
    %v840 = vld [vmem:[#allocation9 + $0x450] sm:$0xff]
    %v841 = vld [vmem:[#allocation9 + $0x458] sm:$0xff]
    %v842 = vld [vmem:[#allocation9 + $0x460] sm:$0xff]
    %v843 = vld [vmem:[#allocation9 + $0x468] sm:$0xff]
    %v844 = vld [vmem:[#allocation9 + $0x470] sm:$0xff]
    %v845 = vld [vmem:[#allocation9 + $0x478] sm:$0xff]
    %v846 = vld [vmem:[#allocation9 + $0x480] sm:$0xff]
    %v847 = vld [vmem:[#allocation9 + $0x488] sm:$0xff]
    %v848 = vld [vmem:[#allocation9 + $0x490] sm:$0xff]
    %v849 = vld [vmem:[#allocation9 + $0x498] sm:$0xff]
    %v850 = vld [vmem:[#allocation9 + $0x4a0] sm:$0xff]
    %v851 = vld [vmem:[#allocation9 + $0x4a8] sm:$0xff]
    %v852 = vld [vmem:[#allocation9 + $0x4b0] sm:$0xff]
    %v853 = vld [vmem:[#allocation9 + $0x4b8] sm:$0xff]
    %v854 = vld [vmem:[#allocation9 + $0x4c0] sm:$0xff]
    %v855 = vld [vmem:[#allocation9 + $0x4c8] sm:$0xff]
    %v856 = vld [vmem:[#allocation9 + $0x4d0] sm:$0xff]
    %v857 = vld [vmem:[#allocation9 + $0x4d8] sm:$0xff]
    %v858 = vld [vmem:[#allocation9 + $0x4e0] sm:$0xff]
    %v859 = vld [vmem:[#allocation9 + $0x4e8] sm:$0xff]
    %v860 = vld [vmem:[#allocation9 + $0x4f0] sm:$0xff]
    %v861 = vld [vmem:[#allocation9 + $0x4f8] sm:$0xff]
    %v862 = vld [vmem:[#allocation9 + $0x500] sm:$0xff]
    %v863 = vld [vmem:[#allocation9 + $0x508] sm:$0xff]
    %v864 = vld [vmem:[#allocation9 + $0x510] sm:$0xff]
    %v865 = vld [vmem:[#allocation9 + $0x518] sm:$0xff]
    %v866 = vld [vmem:[#allocation9 + $0x520] sm:$0xff]
    %v867 = vld [vmem:[#allocation9 + $0x528] sm:$0xff]
    %v868 = vld [vmem:[#allocation9 + $0x530] sm:$0xff]
    %v869 = vld [vmem:[#allocation9 + $0x538] sm:$0xff]
    %v870 = vld [vmem:[#allocation9 + $0x540] sm:$0xff]
    %v871 = vld [vmem:[#allocation9 + $0x548] sm:$0xff]
    %v872 = vld [vmem:[#allocation9 + $0x550] sm:$0xff]
    %v873 = vld [vmem:[#allocation9 + $0x558] sm:$0xff]
    %v874 = vld [vmem:[#allocation9 + $0x560] sm:$0xff]
    %v875 = vld [vmem:[#allocation9 + $0x568] sm:$0xff]
    %v876 = vld [vmem:[#allocation9 + $0x570] sm:$0xff]
    %v877 = vld [vmem:[#allocation9 + $0x578] sm:$0xff]
    %v878 = vld [vmem:[#allocation9 + $0x580] sm:$0xff]
    %v879 = vld [vmem:[#allocation9 + $0x588] sm:$0xff]
    %v880 = vld [vmem:[#allocation9 + $0x590] sm:$0xff]
    %v881 = vld [vmem:[#allocation9 + $0x598] sm:$0xff]
    %v882 = vld [vmem:[#allocation9 + $0x5a0] sm:$0xff]
    %v883 = vld [vmem:[#allocation9 + $0x5a8] sm:$0xff]
    %v884 = vld [vmem:[#allocation9 + $0x5b0] sm:$0xff]
    %v885 = vld [vmem:[#allocation9 + $0x5b8] sm:$0xff]
    %v886 = vld [vmem:[#allocation9 + $0x5c0] sm:$0xff]
    %v887 = vld [vmem:[#allocation9 + $0x5c8] sm:$0xff]
    %v888 = vld [vmem:[#allocation9 + $0x5d0] sm:$0xff]
    %v889 = vld [vmem:[#allocation9 + $0x5d8] sm:$0xff]
    %v890 = vld [vmem:[#allocation9 + $0x5e0] sm:$0xff]
    %v891 = vld [vmem:[#allocation9 + $0x5e8] sm:$0xff]
    %v892 = vld [vmem:[#allocation9 + $0x5f0] sm:$0xff]
    %v893 = vld [vmem:[#allocation9 + $0x5f8] sm:$0xff]
    %v894 = vld [vmem:[#allocation9 + $0x600] sm:$0xff]
    %v895 = vld [vmem:[#allocation9 + $0x608] sm:$0xff]
    %v896 = vld [vmem:[#allocation9 + $0x610] sm:$0xff]
    %v897 = vld [vmem:[#allocation9 + $0x618] sm:$0xff]
    %v898 = vld [vmem:[#allocation9 + $0x620] sm:$0xff]
    %v899 = vld [vmem:[#allocation9 + $0x628] sm:$0xff]
    %v900 = vld [vmem:[#allocation9 + $0x630] sm:$0xff]
    %v901 = vld [vmem:[#allocation9 + $0x638] sm:$0xff]
    %v902 = vld [vmem:[#allocation9 + $0x640] sm:$0xff]
    %v903 = vld [vmem:[#allocation9 + $0x648] sm:$0xff]
    %v904 = vld [vmem:[#allocation9 + $0x650] sm:$0xff]
    %v905 = vld [vmem:[#allocation9 + $0x658] sm:$0xff]
    %v906 = vld [vmem:[#allocation9 + $0x660] sm:$0xff]
    %v907 = vld [vmem:[#allocation9 + $0x668] sm:$0xff]
    %v908 = vld [vmem:[#allocation9 + $0x670] sm:$0xff]
    %v909 = vld [vmem:[#allocation9 + $0x678] sm:$0xff]
    %v910 = vld [vmem:[#allocation9 + $0x680] sm:$0xff]
    %v911 = vld [vmem:[#allocation9 + $0x688] sm:$0xff]
    %v912 = vld [vmem:[#allocation9 + $0x690] sm:$0xff]
    %v913 = vld [vmem:[#allocation9 + $0x698] sm:$0xff]
    %v914 = vld [vmem:[#allocation9 + $0x6a0] sm:$0xff]
    %v915 = vld [vmem:[#allocation9 + $0x6a8] sm:$0xff]
    %v916 = vld [vmem:[#allocation9 + $0x6b0] sm:$0xff]
    %v917 = vld [vmem:[#allocation9 + $0x6b8] sm:$0xff]
    %v918 = vld [vmem:[#allocation9 + $0x6c0] sm:$0xff]
    %v919 = vld [vmem:[#allocation9 + $0x6c8] sm:$0xff]
    %v920 = vld [vmem:[#allocation9 + $0x6d0] sm:$0xff]
    %v921 = vld [vmem:[#allocation9 + $0x6d8] sm:$0xff]
    %v922 = vld [vmem:[#allocation9 + $0x6e0] sm:$0xff]
    %v923 = vld [vmem:[#allocation9 + $0x6e8] sm:$0xff]
    %v924 = vld [vmem:[#allocation9 + $0x6f0] sm:$0xff]
    %v925 = vld [vmem:[#allocation9 + $0x6f8] sm:$0xff]
    %v927 = vlaneseq
    %v928 = vshrl.u32 %v927, 7
    %v929 = vsub.s32 0, %v928
    %v930 = vrot.slane %v118, %v929
    %v931 = vlaneseq
    %v932 = vshrl.u32 %v931, 7
    %v933 = vsub.s32 1, %v932
    %v934 = vrot.slane %v118, %v933
    %v935 = vlaneseq
    %v936 = vshrl.u32 %v935, 7
    %v937 = vsub.s32 2, %v936
    %v938 = vrot.slane %v118, %v937
    %v939 = vlaneseq
    %v940 = vshrl.u32 %v939, 7
    %v941 = vsub.s32 3, %v940
    %v942 = vrot.slane %v118, %v941
    %v1171 = vunpack.c.l.b16 %v702
    %v1172 = vunpack.c.h.b16 %v702
    %v1173 = vunpack.c.l.b16 %v703
    %v1174 = vunpack.c.h.b16 %v703
    %v1175 = vunpack.c.l.b16 %v704
    %v1176 = vunpack.c.h.b16 %v704
    %v1177 = vunpack.c.l.b16 %v705
    %v1178 = vunpack.c.h.b16 %v705
    %v1179 = vunpack.c.l.b16 %v706
    %v1180 = vunpack.c.h.b16 %v706
    %v1181 = vunpack.c.l.b16 %v707
    %v1182 = vunpack.c.h.b16 %v707
    %v1183 = vunpack.c.l.b16 %v708
    %v1184 = vunpack.c.h.b16 %v708
    %v1185 = vunpack.c.l.b16 %v709
    %v1186 = vunpack.c.h.b16 %v709
    %v1187 = vunpack.c.l.b16 %v710
    %v1188 = vunpack.c.h.b16 %v710
    %v1189 = vunpack.c.l.b16 %v711
    %v1190 = vunpack.c.h.b16 %v711
    %v1191 = vunpack.c.l.b16 %v712
    %v1192 = vunpack.c.h.b16 %v712
    %v1193 = vunpack.c.l.b16 %v713
    %v1194 = vunpack.c.h.b16 %v713
    %v1195 = vunpack.c.l.b16 %v714
    %v1196 = vunpack.c.h.b16 %v714
    %v1197 = vunpack.c.l.b16 %v715
    %v1198 = vunpack.c.h.b16 %v715
    %v1199 = vunpack.c.l.b16 %v716
    %v1200 = vunpack.c.h.b16 %v716
    %v1201 = vunpack.c.l.b16 %v717
    %v1202 = vunpack.c.h.b16 %v717
    %v1203 = vunpack.c.l.b16 %v718
    %v1204 = vunpack.c.h.b16 %v718
    %v1205 = vunpack.c.l.b16 %v719
    %v1206 = vunpack.c.h.b16 %v719
    %v1207 = vunpack.c.l.b16 %v720
    %v1208 = vunpack.c.h.b16 %v720
    %v1209 = vunpack.c.l.b16 %v721
    %v1210 = vunpack.c.h.b16 %v721
    %v1211 = vunpack.c.l.b16 %v722
    %v1212 = vunpack.c.h.b16 %v722
    %v1213 = vunpack.c.l.b16 %v723
    %v1214 = vunpack.c.h.b16 %v723
    %v1215 = vunpack.c.l.b16 %v724
    %v1216 = vunpack.c.h.b16 %v724
    %v1217 = vunpack.c.l.b16 %v725
    %v1218 = vunpack.c.h.b16 %v725
    %v1219 = vunpack.c.l.b16 %v726
    %v1220 = vunpack.c.h.b16 %v726
    %v1221 = vunpack.c.l.b16 %v727
    %v1222 = vunpack.c.h.b16 %v727
    %v1223 = vunpack.c.l.b16 %v728
    %v1224 = vunpack.c.h.b16 %v728
    %v1225 = vunpack.c.l.b16 %v729
    %v1226 = vunpack.c.h.b16 %v729
    %v1227 = vunpack.c.l.b16 %v730
    %v1228 = vunpack.c.h.b16 %v730
    %v1229 = vunpack.c.l.b16 %v731
    %v1230 = vunpack.c.h.b16 %v731
    %v1231 = vunpack.c.l.b16 %v732
    %v1232 = vunpack.c.h.b16 %v732
    %v1233 = vunpack.c.l.b16 %v733
    %v1234 = vunpack.c.h.b16 %v733
    %v1235 = vunpack.c.l.b16 %v734
    %v1236 = vunpack.c.h.b16 %v734
    %v1237 = vunpack.c.l.b16 %v735
    %v1238 = vunpack.c.h.b16 %v735
    %v1239 = vunpack.c.l.b16 %v736
    %v1240 = vunpack.c.h.b16 %v736
    %v1241 = vunpack.c.l.b16 %v737
    %v1242 = vunpack.c.h.b16 %v737
    %v1243 = vunpack.c.l.b16 %v738
    %v1244 = vunpack.c.h.b16 %v738
    %v1245 = vunpack.c.l.b16 %v739
    %v1246 = vunpack.c.h.b16 %v739
    %v1247 = vunpack.c.l.b16 %v740
    %v1248 = vunpack.c.h.b16 %v740
    %v1249 = vunpack.c.l.b16 %v741
    %v1250 = vunpack.c.h.b16 %v741
    %v1251 = vunpack.c.l.b16 %v742
    %v1252 = vunpack.c.h.b16 %v742
    %v1253 = vunpack.c.l.b16 %v743
    %v1254 = vunpack.c.h.b16 %v743
    %v1255 = vunpack.c.l.b16 %v744
    %v1256 = vunpack.c.h.b16 %v744
    %v1257 = vunpack.c.l.b16 %v745
    %v1258 = vunpack.c.h.b16 %v745
    %v1259 = vunpack.c.l.b16 %v746
    %v1260 = vunpack.c.h.b16 %v746
    %v1261 = vunpack.c.l.b16 %v747
    %v1262 = vunpack.c.h.b16 %v747
    %v1263 = vunpack.c.l.b16 %v748
    %v1264 = vunpack.c.h.b16 %v748
    %v1265 = vunpack.c.l.b16 %v749
    %v1266 = vunpack.c.h.b16 %v749
    %v1267 = vunpack.c.l.b16 %v750
    %v1268 = vunpack.c.h.b16 %v750
    %v1269 = vunpack.c.l.b16 %v751
    %v1270 = vunpack.c.h.b16 %v751
    %v1271 = vunpack.c.l.b16 %v752
    %v1272 = vunpack.c.h.b16 %v752
    %v1273 = vunpack.c.l.b16 %v753
    %v1274 = vunpack.c.h.b16 %v753
    %v1275 = vunpack.c.l.b16 %v754
    %v1276 = vunpack.c.h.b16 %v754
    %v1277 = vunpack.c.l.b16 %v755
    %v1278 = vunpack.c.h.b16 %v755
    %v1279 = vunpack.c.l.b16 %v756
    %v1280 = vunpack.c.h.b16 %v756
    %v1281 = vunpack.c.l.b16 %v757
    %v1282 = vunpack.c.h.b16 %v757
    %v1283 = vunpack.c.l.b16 %v758
    %v1284 = vunpack.c.h.b16 %v758
    %v1285 = vunpack.c.l.b16 %v759
    %v1286 = vunpack.c.h.b16 %v759
    %v1287 = vunpack.c.l.b16 %v760
    %v1288 = vunpack.c.h.b16 %v760
    %v1289 = vunpack.c.l.b16 %v761
    %v1290 = vunpack.c.h.b16 %v761
    %v1291 = vunpack.c.l.b16 %v762
    %v1292 = vunpack.c.h.b16 %v762
    %v1293 = vunpack.c.l.b16 %v763
    %v1294 = vunpack.c.h.b16 %v763
    %v1295 = vunpack.c.l.b16 %v764
    %v1296 = vunpack.c.h.b16 %v764
    %v1297 = vunpack.c.l.b16 %v765
    %v1298 = vunpack.c.h.b16 %v765
    %v1299 = vunpack.c.l.b16 %v766
    %v1300 = vunpack.c.h.b16 %v766
    %v1301 = vunpack.c.l.b16 %v767
    %v1302 = vunpack.c.h.b16 %v767
    %v1303 = vunpack.c.l.b16 %v768
    %v1304 = vunpack.c.h.b16 %v768
    %v1305 = vunpack.c.l.b16 %v769
    %v1306 = vunpack.c.h.b16 %v769
    %v1307 = vunpack.c.l.b16 %v770
    %v1308 = vunpack.c.h.b16 %v770
    %v1309 = vunpack.c.l.b16 %v771
    %v1310 = vunpack.c.h.b16 %v771
    %v1311 = vunpack.c.l.b16 %v772
    %v1312 = vunpack.c.h.b16 %v772
    %v1313 = vunpack.c.l.b16 %v773
    %v1314 = vunpack.c.h.b16 %v773
    %v1315 = vunpack.c.l.b16 %v774
    %v1316 = vunpack.c.h.b16 %v774
    %v1317 = vunpack.c.l.b16 %v775
    %v1318 = vunpack.c.h.b16 %v775
    %v1319 = vunpack.c.l.b16 %v776
    %v1320 = vunpack.c.h.b16 %v776
    %v1321 = vunpack.c.l.b16 %v777
    %v1322 = vunpack.c.h.b16 %v777
    %v1323 = vunpack.c.l.b16 %v778
    %v1324 = vunpack.c.h.b16 %v778
    %v1325 = vunpack.c.l.b16 %v779
    %v1326 = vunpack.c.h.b16 %v779
    %v1327 = vunpack.c.l.b16 %v780
    %v1328 = vunpack.c.h.b16 %v780
    %v1329 = vunpack.c.l.b16 %v781
    %v1330 = vunpack.c.h.b16 %v781
    %v1331 = vunpack.c.l.b16 %v782
    %v1332 = vunpack.c.h.b16 %v782
    %v1333 = vunpack.c.l.b16 %v783
    %v1334 = vunpack.c.h.b16 %v783
    %v1335 = vunpack.c.l.b16 %v784
    %v1336 = vunpack.c.h.b16 %v784
    %v1337 = vunpack.c.l.b16 %v785
    %v1338 = vunpack.c.h.b16 %v785
    %v1339 = vunpack.c.l.b16 %v786
    %v1340 = vunpack.c.h.b16 %v786
    %v1341 = vunpack.c.l.b16 %v787
    %v1342 = vunpack.c.h.b16 %v787
    %v1343 = vunpack.c.l.b16 %v788
    %v1344 = vunpack.c.h.b16 %v788
    %v1345 = vunpack.c.l.b16 %v789
    %v1346 = vunpack.c.h.b16 %v789
    %v1347 = vunpack.c.l.b16 %v790
    %v1348 = vunpack.c.h.b16 %v790
    %v1349 = vunpack.c.l.b16 %v791
    %v1350 = vunpack.c.h.b16 %v791
    %v1351 = vunpack.c.l.b16 %v792
    %v1352 = vunpack.c.h.b16 %v792
    %v1353 = vunpack.c.l.b16 %v793
    %v1354 = vunpack.c.h.b16 %v793
    %v1355 = vunpack.c.l.b16 %v794
    %v1356 = vunpack.c.h.b16 %v794
    %v1357 = vunpack.c.l.b16 %v795
    %v1358 = vunpack.c.h.b16 %v795
    %v1359 = vunpack.c.l.b16 %v796
    %v1360 = vunpack.c.h.b16 %v796
    %v1361 = vunpack.c.l.b16 %v797
    %v1362 = vunpack.c.h.b16 %v797
    %v1363 = vunpack.c.l.b16 %v798
    %v1364 = vunpack.c.h.b16 %v798
    %v1365 = vunpack.c.l.b16 %v799
    %v1366 = vunpack.c.h.b16 %v799
    %v1367 = vunpack.c.l.b16 %v800
    %v1368 = vunpack.c.h.b16 %v800
    %v1369 = vunpack.c.l.b16 %v801
    %v1370 = vunpack.c.h.b16 %v801
    %v1371 = vunpack.c.l.b16 %v802
    %v1372 = vunpack.c.h.b16 %v802
    %v1373 = vunpack.c.l.b16 %v803
    %v1374 = vunpack.c.h.b16 %v803
    %v1375 = vunpack.c.l.b16 %v804
    %v1376 = vunpack.c.h.b16 %v804
    %v1377 = vunpack.c.l.b16 %v805
    %v1378 = vunpack.c.h.b16 %v805
    %v1379 = vunpack.c.l.b16 %v806
    %v1380 = vunpack.c.h.b16 %v806
    %v1381 = vunpack.c.l.b16 %v807
    %v1382 = vunpack.c.h.b16 %v807
    %v1383 = vunpack.c.l.b16 %v808
    %v1384 = vunpack.c.h.b16 %v808
    %v1385 = vunpack.c.l.b16 %v809
    %v1386 = vunpack.c.h.b16 %v809
    %v1387 = vunpack.c.l.b16 %v810
    %v1388 = vunpack.c.h.b16 %v810
    %v1389 = vunpack.c.l.b16 %v811
    %v1390 = vunpack.c.h.b16 %v811
    %v1391 = vunpack.c.l.b16 %v812
    %v1392 = vunpack.c.h.b16 %v812
    %v1393 = vunpack.c.l.b16 %v813
    %v1394 = vunpack.c.h.b16 %v813
    %v1395 = vunpack.c.l.b16 %v814
    %v1396 = vunpack.c.h.b16 %v814
    %v1397 = vunpack.c.l.b16 %v815
    %v1398 = vunpack.c.h.b16 %v815
    %v1399 = vunpack.c.l.b16 %v816
    %v1400 = vunpack.c.h.b16 %v816
    %v1401 = vunpack.c.l.b16 %v817
    %v1402 = vunpack.c.h.b16 %v817
    %v1403 = vunpack.c.l.b16 %v818
    %v1404 = vunpack.c.h.b16 %v818
    %v1405 = vunpack.c.l.b16 %v819
    %v1406 = vunpack.c.h.b16 %v819
    %v1407 = vunpack.c.l.b16 %v820
    %v1408 = vunpack.c.h.b16 %v820
    %v1409 = vunpack.c.l.b16 %v821
    %v1410 = vunpack.c.h.b16 %v821
    %v1411 = vunpack.c.l.b16 %v822
    %v1412 = vunpack.c.h.b16 %v822
    %v1413 = vunpack.c.l.b16 %v823
    %v1414 = vunpack.c.h.b16 %v823
    %v1415 = vunpack.c.l.b16 %v824
    %v1416 = vunpack.c.h.b16 %v824
    %v1417 = vunpack.c.l.b16 %v825
    %v1418 = vunpack.c.h.b16 %v825
    %v1419 = vunpack.c.l.b16 %v826
    %v1420 = vunpack.c.h.b16 %v826
    %v1421 = vunpack.c.l.b16 %v827
    %v1422 = vunpack.c.h.b16 %v827
    %v1423 = vunpack.c.l.b16 %v828
    %v1424 = vunpack.c.h.b16 %v828
    %v1425 = vunpack.c.l.b16 %v829
    %v1426 = vunpack.c.h.b16 %v829
    %v1427 = vunpack.c.l.b16 %v830
    %v1428 = vunpack.c.h.b16 %v830
    %v1429 = vunpack.c.l.b16 %v831
    %v1430 = vunpack.c.h.b16 %v831
    %v1431 = vunpack.c.l.b16 %v832
    %v1432 = vunpack.c.h.b16 %v832
    %v1433 = vunpack.c.l.b16 %v833
    %v1434 = vunpack.c.h.b16 %v833
    %v1435 = vunpack.c.l.b16 %v834
    %v1436 = vunpack.c.h.b16 %v834
    %v1437 = vunpack.c.l.b16 %v835
    %v1438 = vunpack.c.h.b16 %v835
    %v1439 = vunpack.c.l.b16 %v836
    %v1440 = vunpack.c.h.b16 %v836
    %v1441 = vunpack.c.l.b16 %v837
    %v1442 = vunpack.c.h.b16 %v837
    %v1443 = vunpack.c.l.b16 %v838
    %v1444 = vunpack.c.h.b16 %v838
    %v1445 = vunpack.c.l.b16 %v839
    %v1446 = vunpack.c.h.b16 %v839
    %v1447 = vunpack.c.l.b16 %v840
    %v1448 = vunpack.c.h.b16 %v840
    %v1449 = vunpack.c.l.b16 %v841
    %v1450 = vunpack.c.h.b16 %v841
    %v1451 = vunpack.c.l.b16 %v842
    %v1452 = vunpack.c.h.b16 %v842
    %v1453 = vunpack.c.l.b16 %v843
    %v1454 = vunpack.c.h.b16 %v843
    %v1455 = vunpack.c.l.b16 %v844
    %v1456 = vunpack.c.h.b16 %v844
    %v1457 = vunpack.c.l.b16 %v845
    %v1458 = vunpack.c.h.b16 %v845
    %v1459 = vunpack.c.l.b16 %v846
    %v1460 = vunpack.c.h.b16 %v846
    %v1461 = vunpack.c.l.b16 %v847
    %v1462 = vunpack.c.h.b16 %v847
    %v1463 = vunpack.c.l.b16 %v848
    %v1464 = vunpack.c.h.b16 %v848
    %v1465 = vunpack.c.l.b16 %v849
    %v1466 = vunpack.c.h.b16 %v849
    %v1467 = vunpack.c.l.b16 %v850
    %v1468 = vunpack.c.h.b16 %v850
    %v1469 = vunpack.c.l.b16 %v851
    %v1470 = vunpack.c.h.b16 %v851
    %v1471 = vunpack.c.l.b16 %v852
    %v1472 = vunpack.c.h.b16 %v852
    %v1473 = vunpack.c.l.b16 %v853
    %v1474 = vunpack.c.h.b16 %v853
    %v1475 = vunpack.c.l.b16 %v854
    %v1476 = vunpack.c.h.b16 %v854
    %v1477 = vunpack.c.l.b16 %v855
    %v1478 = vunpack.c.h.b16 %v855
    %v1479 = vunpack.c.l.b16 %v856
    %v1480 = vunpack.c.h.b16 %v856
    %v1481 = vunpack.c.l.b16 %v857
    %v1482 = vunpack.c.h.b16 %v857
    %v1483 = vunpack.c.l.b16 %v858
    %v1484 = vunpack.c.h.b16 %v858
    %v1485 = vunpack.c.l.b16 %v859
    %v1486 = vunpack.c.h.b16 %v859
    %v1487 = vunpack.c.l.b16 %v860
    %v1488 = vunpack.c.h.b16 %v860
    %v1489 = vunpack.c.l.b16 %v861
    %v1490 = vunpack.c.h.b16 %v861
    %v1491 = vunpack.c.l.b16 %v862
    %v1492 = vunpack.c.h.b16 %v862
    %v1493 = vunpack.c.l.b16 %v863
    %v1494 = vunpack.c.h.b16 %v863
    %v1495 = vunpack.c.l.b16 %v864
    %v1496 = vunpack.c.h.b16 %v864
    %v1497 = vunpack.c.l.b16 %v865
    %v1498 = vunpack.c.h.b16 %v865
    %v1499 = vunpack.c.l.b16 %v866
    %v1500 = vunpack.c.h.b16 %v866
    %v1501 = vunpack.c.l.b16 %v867
    %v1502 = vunpack.c.h.b16 %v867
    %v1503 = vunpack.c.l.b16 %v868
    %v1504 = vunpack.c.h.b16 %v868
    %v1505 = vunpack.c.l.b16 %v869
    %v1506 = vunpack.c.h.b16 %v869
    %v1507 = vunpack.c.l.b16 %v870
    %v1508 = vunpack.c.h.b16 %v870
    %v1509 = vunpack.c.l.b16 %v871
    %v1510 = vunpack.c.h.b16 %v871
    %v1511 = vunpack.c.l.b16 %v872
    %v1512 = vunpack.c.h.b16 %v872
    %v1513 = vunpack.c.l.b16 %v873
    %v1514 = vunpack.c.h.b16 %v873
    %v1515 = vunpack.c.l.b16 %v874
    %v1516 = vunpack.c.h.b16 %v874
    %v1517 = vunpack.c.l.b16 %v875
    %v1518 = vunpack.c.h.b16 %v875
    %v1519 = vunpack.c.l.b16 %v876
    %v1520 = vunpack.c.h.b16 %v876
    %v1521 = vunpack.c.l.b16 %v877
    %v1522 = vunpack.c.h.b16 %v877
    %v1523 = vunpack.c.l.b16 %v878
    %v1524 = vunpack.c.h.b16 %v878
    %v1525 = vunpack.c.l.b16 %v879
    %v1526 = vunpack.c.h.b16 %v879
    %v1527 = vunpack.c.l.b16 %v880
    %v1528 = vunpack.c.h.b16 %v880
    %v1529 = vunpack.c.l.b16 %v881
    %v1530 = vunpack.c.h.b16 %v881
    %v1531 = vunpack.c.l.b16 %v882
    %v1532 = vunpack.c.h.b16 %v882
    %v1533 = vunpack.c.l.b16 %v883
    %v1534 = vunpack.c.h.b16 %v883
    %v1535 = vunpack.c.l.b16 %v884
    %v1536 = vunpack.c.h.b16 %v884
    %v1537 = vunpack.c.l.b16 %v885
    %v1538 = vunpack.c.h.b16 %v885
    %v1539 = vunpack.c.l.b16 %v886
    %v1540 = vunpack.c.h.b16 %v886
    %v1541 = vunpack.c.l.b16 %v887
    %v1542 = vunpack.c.h.b16 %v887
    %v1543 = vunpack.c.l.b16 %v888
    %v1544 = vunpack.c.h.b16 %v888
    %v1545 = vunpack.c.l.b16 %v889
    %v1546 = vunpack.c.h.b16 %v889
    %v1547 = vunpack.c.l.b16 %v890
    %v1548 = vunpack.c.h.b16 %v890
    %v1549 = vunpack.c.l.b16 %v891
    %v1550 = vunpack.c.h.b16 %v891
    %v1551 = vunpack.c.l.b16 %v892
    %v1552 = vunpack.c.h.b16 %v892
    %v1553 = vunpack.c.l.b16 %v893
    %v1554 = vunpack.c.h.b16 %v893
    %v1555 = vunpack.c.l.b16 %v894
    %v1556 = vunpack.c.h.b16 %v894
    %v1557 = vunpack.c.l.b16 %v895
    %v1558 = vunpack.c.h.b16 %v895
    %v1559 = vunpack.c.l.b16 %v896
    %v1560 = vunpack.c.h.b16 %v896
    %v1561 = vunpack.c.l.b16 %v897
    %v1562 = vunpack.c.h.b16 %v897
    %v1563 = vunpack.c.l.b16 %v898
    %v1564 = vunpack.c.h.b16 %v898
    %v1565 = vunpack.c.l.b16 %v899
    %v1566 = vunpack.c.h.b16 %v899
    %v1567 = vunpack.c.l.b16 %v900
    %v1568 = vunpack.c.h.b16 %v900
    %v1569 = vunpack.c.l.b16 %v901
    %v1570 = vunpack.c.h.b16 %v901
    %v1571 = vunpack.c.l.b16 %v902
    %v1572 = vunpack.c.h.b16 %v902
    %v1573 = vunpack.c.l.b16 %v903
    %v1574 = vunpack.c.h.b16 %v903
    %v1575 = vunpack.c.l.b16 %v904
    %v1576 = vunpack.c.h.b16 %v904
    %v1577 = vunpack.c.l.b16 %v905
    %v1578 = vunpack.c.h.b16 %v905
    %v1579 = vunpack.c.l.b16 %v906
    %v1580 = vunpack.c.h.b16 %v906
    %v1581 = vunpack.c.l.b16 %v907
    %v1582 = vunpack.c.h.b16 %v907
    %v1583 = vunpack.c.l.b16 %v908
    %v1584 = vunpack.c.h.b16 %v908
    %v1585 = vunpack.c.l.b16 %v909
    %v1586 = vunpack.c.h.b16 %v909
    %v1587 = vunpack.c.l.b16 %v910
    %v1588 = vunpack.c.h.b16 %v910
    %v1589 = vunpack.c.l.b16 %v911
    %v1590 = vunpack.c.h.b16 %v911
    %v1591 = vunpack.c.l.b16 %v912
    %v1592 = vunpack.c.h.b16 %v912
    %v1593 = vunpack.c.l.b16 %v913
    %v1594 = vunpack.c.h.b16 %v913
    %v1595 = vunpack.c.l.b16 %v914
    %v1596 = vunpack.c.h.b16 %v914
    %v1597 = vunpack.c.l.b16 %v915
    %v1598 = vunpack.c.h.b16 %v915
    %v1599 = vunpack.c.l.b16 %v916
    %v1600 = vunpack.c.h.b16 %v916
    %v1601 = vunpack.c.l.b16 %v917
    %v1602 = vunpack.c.h.b16 %v917
    %v1603 = vunpack.c.l.b16 %v918
    %v1604 = vunpack.c.h.b16 %v918
    %v1605 = vunpack.c.l.b16 %v919
    %v1606 = vunpack.c.h.b16 %v919
    %v1607 = vunpack.c.l.b16 %v920
    %v1608 = vunpack.c.h.b16 %v920
    %v1609 = vunpack.c.l.b16 %v921
    %v1610 = vunpack.c.h.b16 %v921
    %v1611 = vunpack.c.l.b16 %v922
    %v1612 = vunpack.c.h.b16 %v922
    %v1613 = vunpack.c.l.b16 %v923
    %v1614 = vunpack.c.h.b16 %v923
    %v1615 = vunpack.c.l.b16 %v924
    %v1616 = vunpack.c.h.b16 %v924
    %v1617 = vunpack.c.l.b16 %v925
    %v1618 = vunpack.c.h.b16 %v925
    %v1619 = vpack.c.b16 %v1175, %v1171
    %v1620 = vpack.c.b16 %v1176, %v1172
    %v1621 = vpack.c.b16 %v1177, %v1173
    %v1622 = vpack.c.b16 %v1178, %v1174
    %v1623 = vpack.c.b16 %v1183, %v1179
    %v1624 = vpack.c.b16 %v1184, %v1180
    %v1625 = vpack.c.b16 %v1185, %v1181
    %v1626 = vpack.c.b16 %v1186, %v1182
    %v1627 = vpack.c.b16 %v1191, %v1187
    %v1628 = vpack.c.b16 %v1192, %v1188
    %v1629 = vpack.c.b16 %v1193, %v1189
    %v1630 = vpack.c.b16 %v1194, %v1190
    %v1631 = vpack.c.b16 %v1199, %v1195
    %v1632 = vpack.c.b16 %v1200, %v1196
    %v1633 = vpack.c.b16 %v1201, %v1197
    %v1634 = vpack.c.b16 %v1202, %v1198
    %v1635 = vpack.c.b16 %v1207, %v1203
    %v1636 = vpack.c.b16 %v1208, %v1204
    %v1637 = vpack.c.b16 %v1209, %v1205
    %v1638 = vpack.c.b16 %v1210, %v1206
    %v1639 = vpack.c.b16 %v1215, %v1211
    %v1640 = vpack.c.b16 %v1216, %v1212
    %v1641 = vpack.c.b16 %v1217, %v1213
    %v1642 = vpack.c.b16 %v1218, %v1214
    %v1643 = vpack.c.b16 %v1223, %v1219
    %v1644 = vpack.c.b16 %v1224, %v1220
    %v1645 = vpack.c.b16 %v1225, %v1221
    %v1646 = vpack.c.b16 %v1226, %v1222
    %v1647 = vpack.c.b16 %v1231, %v1227
    %v1648 = vpack.c.b16 %v1232, %v1228
    %v1649 = vpack.c.b16 %v1233, %v1229
    %v1650 = vpack.c.b16 %v1234, %v1230
    %v1651 = vpack.c.b16 %v1239, %v1235
    %v1652 = vpack.c.b16 %v1240, %v1236
    %v1653 = vpack.c.b16 %v1241, %v1237
    %v1654 = vpack.c.b16 %v1242, %v1238
    %v1655 = vpack.c.b16 %v1247, %v1243
    %v1656 = vpack.c.b16 %v1248, %v1244
    %v1657 = vpack.c.b16 %v1249, %v1245
    %v1658 = vpack.c.b16 %v1250, %v1246
    %v1659 = vpack.c.b16 %v1255, %v1251
    %v1660 = vpack.c.b16 %v1256, %v1252
    %v1661 = vpack.c.b16 %v1257, %v1253
    %v1662 = vpack.c.b16 %v1258, %v1254
    %v1663 = vpack.c.b16 %v1263, %v1259
    %v1664 = vpack.c.b16 %v1264, %v1260
    %v1665 = vpack.c.b16 %v1265, %v1261
    %v1666 = vpack.c.b16 %v1266, %v1262
    %v1667 = vpack.c.b16 %v1271, %v1267
    %v1668 = vpack.c.b16 %v1272, %v1268
    %v1669 = vpack.c.b16 %v1273, %v1269
    %v1670 = vpack.c.b16 %v1274, %v1270
    %v1671 = vpack.c.b16 %v1279, %v1275
    %v1672 = vpack.c.b16 %v1280, %v1276
    %v1673 = vpack.c.b16 %v1281, %v1277
    %v1674 = vpack.c.b16 %v1282, %v1278
    %v1675 = vpack.c.b16 %v1287, %v1283
    %v1676 = vpack.c.b16 %v1288, %v1284
    %v1677 = vpack.c.b16 %v1289, %v1285
    %v1678 = vpack.c.b16 %v1290, %v1286
    %v1679 = vpack.c.b16 %v1295, %v1291
    %v1680 = vpack.c.b16 %v1296, %v1292
    %v1681 = vpack.c.b16 %v1297, %v1293
    %v1682 = vpack.c.b16 %v1298, %v1294
    %v1683 = vpack.c.b16 %v1303, %v1299
    %v1684 = vpack.c.b16 %v1304, %v1300
    %v1685 = vpack.c.b16 %v1305, %v1301
    %v1686 = vpack.c.b16 %v1306, %v1302
    %v1687 = vpack.c.b16 %v1311, %v1307
    %v1688 = vpack.c.b16 %v1312, %v1308
    %v1689 = vpack.c.b16 %v1313, %v1309
    %v1690 = vpack.c.b16 %v1314, %v1310
    %v1691 = vpack.c.b16 %v1319, %v1315
    %v1692 = vpack.c.b16 %v1320, %v1316
    %v1693 = vpack.c.b16 %v1321, %v1317
    %v1694 = vpack.c.b16 %v1322, %v1318
    %v1695 = vpack.c.b16 %v1327, %v1323
    %v1696 = vpack.c.b16 %v1328, %v1324
    %v1697 = vpack.c.b16 %v1329, %v1325
    %v1698 = vpack.c.b16 %v1330, %v1326
    %v1699 = vpack.c.b16 %v1335, %v1331
    %v1700 = vpack.c.b16 %v1336, %v1332
    %v1701 = vpack.c.b16 %v1337, %v1333
    %v1702 = vpack.c.b16 %v1338, %v1334
    %v1703 = vpack.c.b16 %v1343, %v1339
    %v1704 = vpack.c.b16 %v1344, %v1340
    %v1705 = vpack.c.b16 %v1345, %v1341
    %v1706 = vpack.c.b16 %v1346, %v1342
    %v1707 = vpack.c.b16 %v1351, %v1347
    %v1708 = vpack.c.b16 %v1352, %v1348
    %v1709 = vpack.c.b16 %v1353, %v1349
    %v1710 = vpack.c.b16 %v1354, %v1350
    %v1711 = vpack.c.b16 %v1359, %v1355
    %v1712 = vpack.c.b16 %v1360, %v1356
    %v1713 = vpack.c.b16 %v1361, %v1357
    %v1714 = vpack.c.b16 %v1362, %v1358
    %v1715 = vpack.c.b16 %v1367, %v1363
    %v1716 = vpack.c.b16 %v1368, %v1364
    %v1717 = vpack.c.b16 %v1369, %v1365
    %v1718 = vpack.c.b16 %v1370, %v1366
    %v1719 = vpack.c.b16 %v1375, %v1371
    %v1720 = vpack.c.b16 %v1376, %v1372
    %v1721 = vpack.c.b16 %v1377, %v1373
    %v1722 = vpack.c.b16 %v1378, %v1374
    %v1723 = vpack.c.b16 %v1383, %v1379
    %v1724 = vpack.c.b16 %v1384, %v1380
    %v1725 = vpack.c.b16 %v1385, %v1381
    %v1726 = vpack.c.b16 %v1386, %v1382
    %v1727 = vpack.c.b16 %v1391, %v1387
    %v1728 = vpack.c.b16 %v1392, %v1388
    %v1729 = vpack.c.b16 %v1393, %v1389
    %v1730 = vpack.c.b16 %v1394, %v1390
    %v1731 = vpack.c.b16 %v1399, %v1395
    %v1732 = vpack.c.b16 %v1400, %v1396
    %v1733 = vpack.c.b16 %v1401, %v1397
    %v1734 = vpack.c.b16 %v1402, %v1398
    %v1735 = vpack.c.b16 %v1407, %v1403
    %v1736 = vpack.c.b16 %v1408, %v1404
    %v1737 = vpack.c.b16 %v1409, %v1405
    %v1738 = vpack.c.b16 %v1410, %v1406
    %v1739 = vpack.c.b16 %v1415, %v1411
    %v1740 = vpack.c.b16 %v1416, %v1412
    %v1741 = vpack.c.b16 %v1417, %v1413
    %v1742 = vpack.c.b16 %v1418, %v1414
    %v1743 = vpack.c.b16 %v1423, %v1419
    %v1744 = vpack.c.b16 %v1424, %v1420
    %v1745 = vpack.c.b16 %v1425, %v1421
    %v1746 = vpack.c.b16 %v1426, %v1422
    %v1747 = vpack.c.b16 %v1431, %v1427
    %v1748 = vpack.c.b16 %v1432, %v1428
    %v1749 = vpack.c.b16 %v1433, %v1429
    %v1750 = vpack.c.b16 %v1434, %v1430
    %v1751 = vpack.c.b16 %v1439, %v1435
    %v1752 = vpack.c.b16 %v1440, %v1436
    %v1753 = vpack.c.b16 %v1441, %v1437
    %v1754 = vpack.c.b16 %v1442, %v1438
    %v1755 = vpack.c.b16 %v1447, %v1443
    %v1756 = vpack.c.b16 %v1448, %v1444
    %v1757 = vpack.c.b16 %v1449, %v1445
    %v1758 = vpack.c.b16 %v1450, %v1446
    %v1759 = vpack.c.b16 %v1455, %v1451
    %v1760 = vpack.c.b16 %v1456, %v1452
    %v1761 = vpack.c.b16 %v1457, %v1453
    %v1762 = vpack.c.b16 %v1458, %v1454
    %v1763 = vpack.c.b16 %v1463, %v1459
    %v1764 = vpack.c.b16 %v1464, %v1460
    %v1765 = vpack.c.b16 %v1465, %v1461
    %v1766 = vpack.c.b16 %v1466, %v1462
    %v1767 = vpack.c.b16 %v1471, %v1467
    %v1768 = vpack.c.b16 %v1472, %v1468
    %v1769 = vpack.c.b16 %v1473, %v1469
    %v1770 = vpack.c.b16 %v1474, %v1470
    %v1771 = vpack.c.b16 %v1479, %v1475
    %v1772 = vpack.c.b16 %v1480, %v1476
    %v1773 = vpack.c.b16 %v1481, %v1477
    %v1774 = vpack.c.b16 %v1482, %v1478
    %v1775 = vpack.c.b16 %v1487, %v1483
    %v1776 = vpack.c.b16 %v1488, %v1484
    %v1777 = vpack.c.b16 %v1489, %v1485
    %v1778 = vpack.c.b16 %v1490, %v1486
    %v1779 = vpack.c.b16 %v1495, %v1491
    %v1780 = vpack.c.b16 %v1496, %v1492
    %v1781 = vpack.c.b16 %v1497, %v1493
    %v1782 = vpack.c.b16 %v1498, %v1494
    %v1783 = vpack.c.b16 %v1503, %v1499
    %v1784 = vpack.c.b16 %v1504, %v1500
    %v1785 = vpack.c.b16 %v1505, %v1501
    %v1786 = vpack.c.b16 %v1506, %v1502
    %v1787 = vpack.c.b16 %v1511, %v1507
    %v1788 = vpack.c.b16 %v1512, %v1508
    %v1789 = vpack.c.b16 %v1513, %v1509
    %v1790 = vpack.c.b16 %v1514, %v1510
    %v1791 = vpack.c.b16 %v1519, %v1515
    %v1792 = vpack.c.b16 %v1520, %v1516
    %v1793 = vpack.c.b16 %v1521, %v1517
    %v1794 = vpack.c.b16 %v1522, %v1518
    %v1795 = vpack.c.b16 %v1527, %v1523
    %v1796 = vpack.c.b16 %v1528, %v1524
    %v1797 = vpack.c.b16 %v1529, %v1525
    %v1798 = vpack.c.b16 %v1530, %v1526
    %v1799 = vpack.c.b16 %v1535, %v1531
    %v1800 = vpack.c.b16 %v1536, %v1532
    %v1801 = vpack.c.b16 %v1537, %v1533
    %v1802 = vpack.c.b16 %v1538, %v1534
    %v1803 = vpack.c.b16 %v1543, %v1539
    %v1804 = vpack.c.b16 %v1544, %v1540
    %v1805 = vpack.c.b16 %v1545, %v1541
    %v1806 = vpack.c.b16 %v1546, %v1542
    %v1807 = vpack.c.b16 %v1551, %v1547
    %v1808 = vpack.c.b16 %v1552, %v1548
    %v1809 = vpack.c.b16 %v1553, %v1549
    %v1810 = vpack.c.b16 %v1554, %v1550
    %v1811 = vpack.c.b16 %v1559, %v1555
    %v1812 = vpack.c.b16 %v1560, %v1556
    %v1813 = vpack.c.b16 %v1561, %v1557
    %v1814 = vpack.c.b16 %v1562, %v1558
    %v1815 = vpack.c.b16 %v1567, %v1563
    %v1816 = vpack.c.b16 %v1568, %v1564
    %v1817 = vpack.c.b16 %v1569, %v1565
    %v1818 = vpack.c.b16 %v1570, %v1566
    %v1819 = vpack.c.b16 %v1575, %v1571
    %v1820 = vpack.c.b16 %v1576, %v1572
    %v1821 = vpack.c.b16 %v1577, %v1573
    %v1822 = vpack.c.b16 %v1578, %v1574
    %v1823 = vpack.c.b16 %v1583, %v1579
    %v1824 = vpack.c.b16 %v1584, %v1580
    %v1825 = vpack.c.b16 %v1585, %v1581
    %v1826 = vpack.c.b16 %v1586, %v1582
    %v1827 = vpack.c.b16 %v1591, %v1587
    %v1828 = vpack.c.b16 %v1592, %v1588
    %v1829 = vpack.c.b16 %v1593, %v1589
    %v1830 = vpack.c.b16 %v1594, %v1590
    %v1831 = vpack.c.b16 %v1599, %v1595
    %v1832 = vpack.c.b16 %v1600, %v1596
    %v1833 = vpack.c.b16 %v1601, %v1597
    %v1834 = vpack.c.b16 %v1602, %v1598
    %v1835 = vpack.c.b16 %v1607, %v1603
    %v1836 = vpack.c.b16 %v1608, %v1604
    %v1837 = vpack.c.b16 %v1609, %v1605
    %v1838 = vpack.c.b16 %v1610, %v1606
    %v1839 = vpack.c.b16 %v1615, %v1611
    %v1840 = vpack.c.b16 %v1616, %v1612
    %v1841 = vpack.c.b16 %v1617, %v1613
    %v1842 = vpack.c.b16 %v1618, %v1614
    %2067 = vmatprep.subr.bf16.mxu0 %v1620
    %2068 = vmatpush1.bf16.msra.mxu0 %v1619
    %2069 = vmatprep.subr.bf16.mxu0 %v1624
    %2070 = vmatpush1.bf16.msra.mxu0 %v1623
    %2071 = vmatprep.subr.bf16.mxu0 %v1628
    %2072 = vmatpush1.bf16.msra.mxu0 %v1627
    %2073 = vmatprep.subr.bf16.mxu0 %v1632
    %2074 = vmatpush1.bf16.msra.mxu0 %v1631
    %2075 = vmatprep.subr.bf16.mxu0 %v1636
    %2076 = vmatpush1.bf16.msra.mxu0 %v1635
    %2077 = vmatprep.subr.bf16.mxu0 %v1640
    %2078 = vmatpush1.bf16.msra.mxu0 %v1639
    %2079 = vmatprep.subr.bf16.mxu0 %v1644
    %2080 = vmatpush1.bf16.msra.mxu0 %v1643
    %2081 = vmatprep.subr.bf16.mxu0 %v1648
    %2082 = vmatpush1.bf16.msra.mxu0 %v1647
    %2083 = vmatprep.subr.bf16.mxu0 %v1652
    %2084 = vmatpush1.bf16.msra.mxu0 %v1651
    %2085 = vmatprep.subr.bf16.mxu0 %v1656
    %2086 = vmatpush1.bf16.msra.mxu0 %v1655
    %2087 = vmatprep.subr.bf16.mxu0 %v1660
    %2088 = vmatpush1.bf16.msra.mxu0 %v1659
    %2089 = vmatprep.subr.bf16.mxu0 %v1664
    %2090 = vmatpush1.bf16.msra.mxu0 %v1663
    %2091 = vmatprep.subr.bf16.mxu0 %v1668
    %2092 = vmatpush1.bf16.msra.mxu0 %v1667
    %2093 = vmatprep.subr.bf16.mxu0 %v1672
    %2094 = vmatpush1.bf16.msra.mxu0 %v1671
    %2095 = vmatprep.subr.bf16.mxu0 %v1676
    %2096 = vmatpush1.bf16.msra.mxu0 %v1675
    %2097 = vmatprep.subr.bf16.mxu0 %v1680
    %2098 = vmatpush1.bf16.msra.mxu0 %v1679
    %2099 = vmatprep.mubr.bf16.mxu0 %v696
    %2100 = vmatmul.mubr.bf16.gmra.mrb[0].mxu0 %v695
    %v2101 = vpop.f32.mrb[0].mxu0
    %v2102 = vadd.f32 %v930, %v2101
    %v2103 = vpop.f32.mrb[0].mxu0
    %v2104 = vadd.f32 %v934, %v2103
    %v2105 = vpop.f32.mrb[0].mxu0
    %v2106 = vpop.f32.mrb[0].mxu0
    %2107 = vdwg.mxu0
    %2108 = vmatprep.subr.bf16.mxu0 %v1684
    %2109 = vmatpush1.bf16.msra.mxu0 %v1683
    %2110 = vmatprep.subr.bf16.mxu0 %v1688
    %2111 = vmatpush1.bf16.msra.mxu0 %v1687
    %2112 = vmatprep.subr.bf16.mxu0 %v1692
    %2113 = vmatpush1.bf16.msra.mxu0 %v1691
    %2114 = vmatprep.subr.bf16.mxu0 %v1696
    %2115 = vmatpush1.bf16.msra.mxu0 %v1695
    %2116 = vmatprep.subr.bf16.mxu0 %v1700
    %2117 = vmatpush1.bf16.msra.mxu0 %v1699
    %2118 = vmatprep.subr.bf16.mxu0 %v1704
    %2119 = vmatpush1.bf16.msra.mxu0 %v1703
    %2120 = vmatprep.subr.bf16.mxu0 %v1708
    %2121 = vmatpush1.bf16.msra.mxu0 %v1707
    %2122 = vmatprep.subr.bf16.mxu0 %v1712
    %2123 = vmatpush1.bf16.msra.mxu0 %v1711
    %2124 = vmatprep.subr.bf16.mxu0 %v1716
    %2125 = vmatpush1.bf16.msra.mxu0 %v1715
    %2126 = vmatprep.subr.bf16.mxu0 %v1720
    %2127 = vmatpush1.bf16.msra.mxu0 %v1719
    %2128 = vmatprep.subr.bf16.mxu0 %v1724
    %2129 = vmatpush1.bf16.msra.mxu0 %v1723
    %2130 = vmatprep.subr.bf16.mxu0 %v1728
    %2131 = vmatpush1.bf16.msra.mxu0 %v1727
    %2132 = vmatprep.subr.bf16.mxu0 %v1732
    %2133 = vmatpush1.bf16.msra.mxu0 %v1731
    %2134 = vmatprep.subr.bf16.mxu0 %v1736
    %2135 = vmatpush1.bf16.msra.mxu0 %v1735
    %2136 = vmatprep.subr.bf16.mxu0 %v1740
    %2137 = vmatpush1.bf16.msra.mxu0 %v1739
    %2138 = vmatprep.subr.bf16.mxu0 %v1744
    %2139 = vmatpush1.bf16.msra.mxu0 %v1743
    %2140 = vmatprep.mubr.bf16.mxu0 %v698
    %2141 = vmatmul.mubr.bf16.gmra.mrb[0].mxu0 %v697
    %v2142 = vpop.f32.mrb[0].mxu0
    %v2143 = vadd.f32 %v2102, %v2142
    %v2144 = vpop.f32.mrb[0].mxu0
    %v2145 = vadd.f32 %v2104, %v2144
    %v2146 = vpop.f32.mrb[0].mxu0
    %v2147 = vpop.f32.mrb[0].mxu0
    %2148 = vdwg.mxu0
    %2149 = vmatprep.subr.bf16.mxu0 %v1748
    %2150 = vmatpush1.bf16.msra.mxu0 %v1747
    %2151 = vmatprep.subr.bf16.mxu0 %v1752
    %2152 = vmatpush1.bf16.msra.mxu0 %v1751
    %2153 = vmatprep.subr.bf16.mxu0 %v1756
    %2154 = vmatpush1.bf16.msra.mxu0 %v1755
    %2155 = vmatprep.subr.bf16.mxu0 %v1760
    %2156 = vmatpush1.bf16.msra.mxu0 %v1759
    %2157 = vmatprep.subr.bf16.mxu0 %v1764
    %2158 = vmatpush1.bf16.msra.mxu0 %v1763
    %2159 = vmatprep.subr.bf16.mxu0 %v1768
    %2160 = vmatpush1.bf16.msra.mxu0 %v1767
    %2161 = vmatprep.subr.bf16.mxu0 %v1772
    %2162 = vmatpush1.bf16.msra.mxu0 %v1771
    %2163 = vmatprep.subr.bf16.mxu0 %v1776
    %2164 = vmatpush1.bf16.msra.mxu0 %v1775
    %2165 = vmatprep.subr.bf16.mxu0 %v1780
    %2166 = vmatpush1.bf16.msra.mxu0 %v1779
    %2167 = vmatprep.subr.bf16.mxu0 %v1784
    %2168 = vmatpush1.bf16.msra.mxu0 %v1783
    %2169 = vmatprep.subr.bf16.mxu0 %v1788
    %2170 = vmatpush1.bf16.msra.mxu0 %v1787
    %2171 = vmatprep.subr.bf16.mxu0 %v1792
    %2172 = vmatpush1.bf16.msra.mxu0 %v1791
    %2173 = vmatprep.subr.bf16.mxu0 %v1796
    %2174 = vmatpush1.bf16.msra.mxu0 %v1795
    %2175 = vmatprep.subr.bf16.mxu0 %v1800
    %2176 = vmatpush1.bf16.msra.mxu0 %v1799
    %2177 = vmatprep.subr.bf16.mxu0 %v1804
    %2178 = vmatpush1.bf16.msra.mxu0 %v1803
    %2179 = vmatprep.subr.bf16.mxu0 %v1808
    %2180 = vmatpush1.bf16.msra.mxu0 %v1807
    %2181 = vmatprep.mubr.bf16.mxu0 %v700
    %2182 = vmatmul.mubr.bf16.gmra.mrb[0].mxu0 %v699
    %v2183 = vpop.f32.mrb[0].mxu0
    %v2184 = vadd.f32 %v2143, %v2183
    %v2185 = vpop.f32.mrb[0].mxu0
    %v2186 = vadd.f32 %v2145, %v2185
    %v2187 = vpop.f32.mrb[0].mxu0
    %v2188 = vpop.f32.mrb[0].mxu0
    %2189 = vdwg.mxu0
    %2190 = vmatprep.subr.bf16.mxu0 %v1812
    %2191 = vmatpush1.bf16.msra.mxu0 %v1811
    %2192 = vmatprep.subr.bf16.mxu0 %v1816
    %2193 = vmatpush1.bf16.msra.mxu0 %v1815
    %2194 = vmatprep.subr.bf16.mxu0 %v1820
    %2195 = vmatpush1.bf16.msra.mxu0 %v1819
    %2196 = vmatprep.subr.bf16.mxu0 %v1824
    %2197 = vmatpush1.bf16.msra.mxu0 %v1823
    %2198 = vmatprep.subr.bf16.mxu0 %v1828
    %2199 = vmatpush1.bf16.msra.mxu0 %v1827
    %2200 = vmatprep.subr.bf16.mxu0 %v1832
    %2201 = vmatpush1.bf16.msra.mxu0 %v1831
    %2202 = vmatprep.subr.bf16.mxu0 %v1836
    %2203 = vmatpush1.bf16.msra.mxu0 %v1835
    %2204 = vmatprep.subr.bf16.mxu0 %v1840
    %2205 = vmatpush1.bf16.msra.mxu0 %v1839
    %2206 = vmatprep.subr.bf16.mxu0 0
    %2207 = vmatpush1.bf16.msra.mxu0 0
    %2208 = vmatprep.subr.bf16.mxu0 0
    %2209 = vmatpush1.bf16.msra.mxu0 0
    %2210 = vmatprep.subr.bf16.mxu0 0
    %2211 = vmatpush1.bf16.msra.mxu0 0
    %2212 = vmatprep.subr.bf16.mxu0 0
    %2213 = vmatpush1.bf16.msra.mxu0 0
    %2214 = vmatprep.subr.bf16.mxu0 0
    %2215 = vmatpush1.bf16.msra.mxu0 0
    %2216 = vmatprep.subr.bf16.mxu0 0
    %2217 = vmatpush1.bf16.msra.mxu0 0
    %2218 = vmatprep.subr.bf16.mxu0 0
    %2219 = vmatpush1.bf16.msra.mxu0 0
    %2220 = vmatprep.subr.bf16.mxu0 0
    %2221 = vmatpush1.bf16.msra.mxu0 0
    %2222 = vmatprep.mubr.bf16.mxu0 0
    %2223 = vmatmul.mubr.bf16.gmra.mrb[0].mxu0 %v701
    %v2224 = vpop.f32.mrb[0].mxu0
    %v2225 = vadd.f32 %v2184, %v2224
    %v2226 = vpop.f32.mrb[0].mxu0
    %v2227 = vadd.f32 %v2186, %v2226
    %v2228 = vpop.f32.mrb[0].mxu0
    %v2229 = vpop.f32.mrb[0].mxu0
    %2230 = vdwg.mxu0
    %2231 = vmatprep.subr.bf16.mxu0 %v1622
    %2232 = vmatpush1.bf16.msra.mxu0 %v1621
    %2233 = vmatprep.subr.bf16.mxu0 %v1626
    %2234 = vmatpush1.bf16.msra.mxu0 %v1625
    %2235 = vmatprep.subr.bf16.mxu0 %v1630
    %2236 = vmatpush1.bf16.msra.mxu0 %v1629
    %2237 = vmatprep.subr.bf16.mxu0 %v1634
    %2238 = vmatpush1.bf16.msra.mxu0 %v1633
    %2239 = vmatprep.subr.bf16.mxu0 %v1638
    %2240 = vmatpush1.bf16.msra.mxu0 %v1637
    %2241 = vmatprep.subr.bf16.mxu0 %v1642
    %2242 = vmatpush1.bf16.msra.mxu0 %v1641
    %2243 = vmatprep.subr.bf16.mxu0 %v1646
    %2244 = vmatpush1.bf16.msra.mxu0 %v1645
    %2245 = vmatprep.subr.bf16.mxu0 %v1650
    %2246 = vmatpush1.bf16.msra.mxu0 %v1649
    %2247 = vmatprep.subr.bf16.mxu0 %v1654
    %2248 = vmatpush1.bf16.msra.mxu0 %v1653
    %2249 = vmatprep.subr.bf16.mxu0 %v1658
    %2250 = vmatpush1.bf16.msra.mxu0 %v1657
    %2251 = vmatprep.subr.bf16.mxu0 %v1662
    %2252 = vmatpush1.bf16.msra.mxu0 %v1661
    %2253 = vmatprep.subr.bf16.mxu0 %v1666
    %2254 = vmatpush1.bf16.msra.mxu0 %v1665
    %2255 = vmatprep.subr.bf16.mxu0 %v1670
    %2256 = vmatpush1.bf16.msra.mxu0 %v1669
    %2257 = vmatprep.subr.bf16.mxu0 %v1674
    %2258 = vmatpush1.bf16.msra.mxu0 %v1673
    %2259 = vmatprep.subr.bf16.mxu0 %v1678
    %2260 = vmatpush1.bf16.msra.mxu0 %v1677
    %2261 = vmatprep.subr.bf16.mxu0 %v1682
    %2262 = vmatpush1.bf16.msra.mxu0 %v1681
    %2263 = vmatprep.mubr.bf16.mxu0 %v696
    %2264 = vmatmul.mubr.bf16.gmra.mrb[0].mxu0 %v695
    %v2265 = vpop.f32.mrb[0].mxu0
    %v2266 = vadd.f32 %v938, %v2265
    %v2267 = vpop.f32.mrb[0].mxu0
    %v2268 = vadd.f32 %v942, %v2267
    %v2269 = vpop.f32.mrb[0].mxu0
    %v2270 = vpop.f32.mrb[0].mxu0
    %2271 = vdwg.mxu0
    %2272 = vmatprep.subr.bf16.mxu0 %v1686
    %2273 = vmatpush1.bf16.msra.mxu0 %v1685
    %2274 = vmatprep.subr.bf16.mxu0 %v1690
    %2275 = vmatpush1.bf16.msra.mxu0 %v1689
    %2276 = vmatprep.subr.bf16.mxu0 %v1694
    %2277 = vmatpush1.bf16.msra.mxu0 %v1693
    %2278 = vmatprep.subr.bf16.mxu0 %v1698
    %2279 = vmatpush1.bf16.msra.mxu0 %v1697
    %2280 = vmatprep.subr.bf16.mxu0 %v1702
    %2281 = vmatpush1.bf16.msra.mxu0 %v1701
    %2282 = vmatprep.subr.bf16.mxu0 %v1706
    %2283 = vmatpush1.bf16.msra.mxu0 %v1705
    %2284 = vmatprep.subr.bf16.mxu0 %v1710
    %2285 = vmatpush1.bf16.msra.mxu0 %v1709
    %2286 = vmatprep.subr.bf16.mxu0 %v1714
    %2287 = vmatpush1.bf16.msra.mxu0 %v1713
    %2288 = vmatprep.subr.bf16.mxu0 %v1718
    %2289 = vmatpush1.bf16.msra.mxu0 %v1717
    %2290 = vmatprep.subr.bf16.mxu0 %v1722
    %2291 = vmatpush1.bf16.msra.mxu0 %v1721
    %2292 = vmatprep.subr.bf16.mxu0 %v1726
    %2293 = vmatpush1.bf16.msra.mxu0 %v1725
    %2294 = vmatprep.subr.bf16.mxu0 %v1730
    %2295 = vmatpush1.bf16.msra.mxu0 %v1729
    %2296 = vmatprep.subr.bf16.mxu0 %v1734
    %2297 = vmatpush1.bf16.msra.mxu0 %v1733
    %2298 = vmatprep.subr.bf16.mxu0 %v1738
    %2299 = vmatpush1.bf16.msra.mxu0 %v1737
    %2300 = vmatprep.subr.bf16.mxu0 %v1742
    %2301 = vmatpush1.bf16.msra.mxu0 %v1741
    %2302 = vmatprep.subr.bf16.mxu0 %v1746
    %2303 = vmatpush1.bf16.msra.mxu0 %v1745
    %2304 = vmatprep.mubr.bf16.mxu0 %v698
    %2305 = vmatmul.mubr.bf16.gmra.mrb[0].mxu0 %v697
    %v2306 = vpop.f32.mrb[0].mxu0
    %v2307 = vadd.f32 %v2266, %v2306
    %v2308 = vpop.f32.mrb[0].mxu0
    %v2309 = vadd.f32 %v2268, %v2308
    %v2310 = vpop.f32.mrb[0].mxu0
    %v2311 = vpop.f32.mrb[0].mxu0
    %2312 = vdwg.mxu0
    %2313 = vmatprep.subr.bf16.mxu0 %v1750
    %2314 = vmatpush1.bf16.msra.mxu0 %v1749
    %2315 = vmatprep.subr.bf16.mxu0 %v1754
    %2316 = vmatpush1.bf16.msra.mxu0 %v1753
    %2317 = vmatprep.subr.bf16.mxu0 %v1758
    %2318 = vmatpush1.bf16.msra.mxu0 %v1757
    %2319 = vmatprep.subr.bf16.mxu0 %v1762
    %2320 = vmatpush1.bf16.msra.mxu0 %v1761
    %2321 = vmatprep.subr.bf16.mxu0 %v1766
    %2322 = vmatpush1.bf16.msra.mxu0 %v1765
    %2323 = vmatprep.subr.bf16.mxu0 %v1770
    %2324 = vmatpush1.bf16.msra.mxu0 %v1769
    %2325 = vmatprep.subr.bf16.mxu0 %v1774
    %2326 = vmatpush1.bf16.msra.mxu0 %v1773
    %2327 = vmatprep.subr.bf16.mxu0 %v1778
    %2328 = vmatpush1.bf16.msra.mxu0 %v1777
    %2329 = vmatprep.subr.bf16.mxu0 %v1782
    %2330 = vmatpush1.bf16.msra.mxu0 %v1781
    %2331 = vmatprep.subr.bf16.mxu0 %v1786
    %2332 = vmatpush1.bf16.msra.mxu0 %v1785
    %2333 = vmatprep.subr.bf16.mxu0 %v1790
    %2334 = vmatpush1.bf16.msra.mxu0 %v1789
    %2335 = vmatprep.subr.bf16.mxu0 %v1794
    %2336 = vmatpush1.bf16.msra.mxu0 %v1793
    %2337 = vmatprep.subr.bf16.mxu0 %v1798
    %2338 = vmatpush1.bf16.msra.mxu0 %v1797
    %2339 = vmatprep.subr.bf16.mxu0 %v1802
    %2340 = vmatpush1.bf16.msra.mxu0 %v1801
    %2341 = vmatprep.subr.bf16.mxu0 %v1806
    %2342 = vmatpush1.bf16.msra.mxu0 %v1805
    %2343 = vmatprep.subr.bf16.mxu0 %v1810
    %2344 = vmatpush1.bf16.msra.mxu0 %v1809
    %2345 = vmatprep.mubr.bf16.mxu0 %v700
    %2346 = vmatmul.mubr.bf16.gmra.mrb[0].mxu0 %v699
    %v2347 = vpop.f32.mrb[0].mxu0
    %v2348 = vadd.f32 %v2307, %v2347
    %v2349 = vpop.f32.mrb[0].mxu0
    %v2350 = vadd.f32 %v2309, %v2349
    %v2351 = vpop.f32.mrb[0].mxu0
    %v2352 = vpop.f32.mrb[0].mxu0
    %2353 = vdwg.mxu0
    %2354 = vmatprep.subr.bf16.mxu0 %v1814
    %2355 = vmatpush1.bf16.msra.mxu0 %v1813
    %2356 = vmatprep.subr.bf16.mxu0 %v1818
    %2357 = vmatpush1.bf16.msra.mxu0 %v1817
    %2358 = vmatprep.subr.bf16.mxu0 %v1822
    %2359 = vmatpush1.bf16.msra.mxu0 %v1821
    %2360 = vmatprep.subr.bf16.mxu0 %v1826
    %2361 = vmatpush1.bf16.msra.mxu0 %v1825
    %2362 = vmatprep.subr.bf16.mxu0 %v1830
    %2363 = vmatpush1.bf16.msra.mxu0 %v1829
    %2364 = vmatprep.subr.bf16.mxu0 %v1834
    %2365 = vmatpush1.bf16.msra.mxu0 %v1833
    %2366 = vmatprep.subr.bf16.mxu0 %v1838
    %2367 = vmatpush1.bf16.msra.mxu0 %v1837
    %2368 = vmatprep.subr.bf16.mxu0 %v1842
    %2369 = vmatpush1.bf16.msra.mxu0 %v1841
    %2370 = vmatprep.subr.bf16.mxu0 0
    %2371 = vmatpush1.bf16.msra.mxu0 0
    %2372 = vmatprep.subr.bf16.mxu0 0
    %2373 = vmatpush1.bf16.msra.mxu0 0
    %2374 = vmatprep.subr.bf16.mxu0 0
    %2375 = vmatpush1.bf16.msra.mxu0 0
    %2376 = vmatprep.subr.bf16.mxu0 0
    %2377 = vmatpush1.bf16.msra.mxu0 0
    %2378 = vmatprep.subr.bf16.mxu0 0
    %2379 = vmatpush1.bf16.msra.mxu0 0
    %2380 = vmatprep.subr.bf16.mxu0 0
    %2381 = vmatpush1.bf16.msra.mxu0 0
    %2382 = vmatprep.subr.bf16.mxu0 0
    %2383 = vmatpush1.bf16.msra.mxu0 0
    %2384 = vmatprep.subr.bf16.mxu0 0
    %2385 = vmatpush1.bf16.msra.mxu0 0
    %2386 = vmatprep.mubr.bf16.mxu0 0
    %2387 = vmatmul.mubr.bf16.gmra.mrb[0].mxu0 %v701
    %v2388 = vpop.f32.mrb[0].mxu0
    %v2389 = vadd.f32 %v2348, %v2388
    %v2390 = vpop.f32.mrb[0].mxu0
    %v2391 = vadd.f32 %v2350, %v2390
    %v2392 = vpop.f32.mrb[0].mxu0
    %v2393 = vpop.f32.mrb[0].mxu0
    %2394 = vdwg.mxu0
    %vm2395 = vcmp.gt.f32.partialorder %v2225, 0.0
    %vm2396 = vcmp.gt.f32.partialorder %v2227, 0.0
    %vm2397 = vcmp.gt.f32.partialorder %v2389, 0.0
    %vm2398 = vcmp.gt.f32.partialorder %v2391, 0.0
    %v2399 = vstv %s115
    %v2400 = vmul.f32 %v2399, %v2225
    %v2401 = vmul.f32 %v2399, %v2227
    %v2402 = vmul.f32 %v2399, %v2389
    %v2403 = vmul.f32 %v2399, %v2391
    %v2404 = vsel %vm2395, %v2225, %v2400
    %v2405 = vsel %vm2396, %v2227, %v2401
    %v2406 = vsel %vm2397, %v2389, %v2402
    %v2407 = vsel %vm2398, %v2391, %v2403
    %v2408 = vpack.c.bf16 %v2404, %v2404
    %v2409 = vpack.c.bf16 %v2405, %v2405
    %v2410 = vpack.c.bf16 %v2406, %v2406
    %v2411 = vpack.c.bf16 %v2407, %v2407
    %v2412 = vld [vmem:[#allocation10] sm:$0xff]
    %v2413 = vld [vmem:[#allocation10 + $0x8] sm:$0xff]
    %v2414 = vld [vmem:[#allocation10 + $0x10] sm:$0xff]
    %v2415 = vld [vmem:[#allocation10 + $0x18] sm:$0xff]
    %v2416 = vld [vmem:[#allocation10 + $0x20] sm:$0xff]
    %v2417 = vld [vmem:[#allocation10 + $0x28] sm:$0xff]
    %v2418 = vld [vmem:[#allocation10 + $0x30] sm:$0xff]
    %v2419 = vld [vmem:[#allocation10 + $0x38] sm:$0xff]
    %v2420 = vld [vmem:[#allocation10 + $0x40] sm:$0xff]
    %v2421 = vld [vmem:[#allocation10 + $0x48] sm:$0xff]
    %v2422 = vld [vmem:[#allocation10 + $0x50] sm:$0xff]
    %v2423 = vld [vmem:[#allocation10 + $0x58] sm:$0xff]
    %v2424 = vld [vmem:[#allocation10 + $0x60] sm:$0xff]
    %v2425 = vld [vmem:[#allocation10 + $0x68] sm:$0xff]
    %v2426 = vld [vmem:[#allocation10 + $0x70] sm:$0xff]
    %v2427 = vld [vmem:[#allocation10 + $0x78] sm:$0xff]
    %v2428 = vld [vmem:[#allocation10 + $0x80] sm:$0xff]
    %v2429 = vld [vmem:[#allocation10 + $0x88] sm:$0xff]
    %v2430 = vld [vmem:[#allocation10 + $0x90] sm:$0xff]
    %v2431 = vld [vmem:[#allocation10 + $0x98] sm:$0xff]
    %v2432 = vld [vmem:[#allocation10 + $0xa0] sm:$0xff]
    %v2433 = vld [vmem:[#allocation10 + $0xa8] sm:$0xff]
    %v2434 = vld [vmem:[#allocation10 + $0xb0] sm:$0xff]
    %v2435 = vld [vmem:[#allocation10 + $0xb8] sm:$0xff]
    %v2436 = vld [vmem:[#allocation10 + $0xc0] sm:$0xff]
    %v2437 = vld [vmem:[#allocation10 + $0xc8] sm:$0xff]
    %v2438 = vld [vmem:[#allocation10 + $0xd0] sm:$0xff]
    %v2439 = vld [vmem:[#allocation10 + $0xd8] sm:$0xff]
    %v2440 = vld [vmem:[#allocation10 + $0xe0] sm:$0xff]
    %v2441 = vld [vmem:[#allocation10 + $0xe8] sm:$0xff]
    %v2442 = vld [vmem:[#allocation10 + $0xf0] sm:$0xff]
    %v2443 = vld [vmem:[#allocation10 + $0xf8] sm:$0xff]
    %v2444 = vld [vmem:[#allocation10 + $0x100] sm:$0xff]
    %v2445 = vld [vmem:[#allocation10 + $0x108] sm:$0xff]
    %v2446 = vld [vmem:[#allocation10 + $0x110] sm:$0xff]
    %v2447 = vld [vmem:[#allocation10 + $0x118] sm:$0xff]
    %v2448 = vld [vmem:[#allocation10 + $0x120] sm:$0xff]
    %v2449 = vld [vmem:[#allocation10 + $0x128] sm:$0xff]
    %v2450 = vld [vmem:[#allocation10 + $0x130] sm:$0xff]
    %v2451 = vld [vmem:[#allocation10 + $0x138] sm:$0xff]
    %v2452 = vld [vmem:[#allocation10 + $0x140] sm:$0xff]
    %v2453 = vld [vmem:[#allocation10 + $0x148] sm:$0xff]
    %v2454 = vld [vmem:[#allocation10 + $0x150] sm:$0xff]
    %v2455 = vld [vmem:[#allocation10 + $0x158] sm:$0xff]
    %v2456 = vld [vmem:[#allocation10 + $0x160] sm:$0xff]
    %v2457 = vld [vmem:[#allocation10 + $0x168] sm:$0xff]
    %v2458 = vld [vmem:[#allocation10 + $0x170] sm:$0xff]
    %v2459 = vld [vmem:[#allocation10 + $0x178] sm:$0xff]
    %v2460 = vld [vmem:[#allocation10 + $0x180] sm:$0xff]
    %v2461 = vld [vmem:[#allocation10 + $0x188] sm:$0xff]
    %v2462 = vld [vmem:[#allocation10 + $0x190] sm:$0xff]
    %v2463 = vld [vmem:[#allocation10 + $0x198] sm:$0xff]
    %v2464 = vld [vmem:[#allocation10 + $0x1a0] sm:$0xff]
    %v2465 = vld [vmem:[#allocation10 + $0x1a8] sm:$0xff]
    %v2466 = vld [vmem:[#allocation10 + $0x1b0] sm:$0xff]
    %v2467 = vld [vmem:[#allocation10 + $0x1b8] sm:$0xff]
    %v2468 = vld [vmem:[#allocation10 + $0x1c0] sm:$0xff]
    %v2469 = vld [vmem:[#allocation10 + $0x1c8] sm:$0xff]
    %v2470 = vld [vmem:[#allocation10 + $0x1d0] sm:$0xff]
    %v2471 = vld [vmem:[#allocation10 + $0x1d8] sm:$0xff]
    %v2472 = vld [vmem:[#allocation10 + $0x1e0] sm:$0xff]
    %v2473 = vld [vmem:[#allocation10 + $0x1e8] sm:$0xff]
    %v2474 = vld [vmem:[#allocation10 + $0x1f0] sm:$0xff]
    %v2475 = vld [vmem:[#allocation10 + $0x1f8] sm:$0xff]
    %v2477 = vlaneseq
    %v2478 = vshrl.u32 %v2477, 7
    %v2479 = vsub.s32 0, %v2478
    %v2480 = vrot.slane %v119, %v2479
    %v2481 = vlaneseq
    %v2482 = vshrl.u32 %v2481, 7
    %v2483 = vsub.s32 1, %v2482
    %v2484 = vrot.slane %v119, %v2483
    %v2551 = vunpack.c.l.b16 %v2412
    %v2552 = vunpack.c.h.b16 %v2412
    %v2553 = vunpack.c.l.b16 %v2413
    %v2554 = vunpack.c.h.b16 %v2413
    %v2555 = vunpack.c.l.b16 %v2414
    %v2556 = vunpack.c.h.b16 %v2414
    %v2557 = vunpack.c.l.b16 %v2415
    %v2558 = vunpack.c.h.b16 %v2415
    %v2559 = vunpack.c.l.b16 %v2416
    %v2560 = vunpack.c.h.b16 %v2416
    %v2561 = vunpack.c.l.b16 %v2417
    %v2562 = vunpack.c.h.b16 %v2417
    %v2563 = vunpack.c.l.b16 %v2418
    %v2564 = vunpack.c.h.b16 %v2418
    %v2565 = vunpack.c.l.b16 %v2419
    %v2566 = vunpack.c.h.b16 %v2419
    %v2567 = vunpack.c.l.b16 %v2420
    %v2568 = vunpack.c.h.b16 %v2420
    %v2569 = vunpack.c.l.b16 %v2421
    %v2570 = vunpack.c.h.b16 %v2421
    %v2571 = vunpack.c.l.b16 %v2422
    %v2572 = vunpack.c.h.b16 %v2422
    %v2573 = vunpack.c.l.b16 %v2423
    %v2574 = vunpack.c.h.b16 %v2423
    %v2575 = vunpack.c.l.b16 %v2424
    %v2576 = vunpack.c.h.b16 %v2424
    %v2577 = vunpack.c.l.b16 %v2425
    %v2578 = vunpack.c.h.b16 %v2425
    %v2579 = vunpack.c.l.b16 %v2426
    %v2580 = vunpack.c.h.b16 %v2426
    %v2581 = vunpack.c.l.b16 %v2427
    %v2582 = vunpack.c.h.b16 %v2427
    %v2583 = vunpack.c.l.b16 %v2428
    %v2584 = vunpack.c.h.b16 %v2428
    %v2585 = vunpack.c.l.b16 %v2429
    %v2586 = vunpack.c.h.b16 %v2429
    %v2587 = vunpack.c.l.b16 %v2430
    %v2588 = vunpack.c.h.b16 %v2430
    %v2589 = vunpack.c.l.b16 %v2431
    %v2590 = vunpack.c.h.b16 %v2431
    %v2591 = vunpack.c.l.b16 %v2432
    %v2592 = vunpack.c.h.b16 %v2432
    %v2593 = vunpack.c.l.b16 %v2433
    %v2594 = vunpack.c.h.b16 %v2433
    %v2595 = vunpack.c.l.b16 %v2434
    %v2596 = vunpack.c.h.b16 %v2434
    %v2597 = vunpack.c.l.b16 %v2435
    %v2598 = vunpack.c.h.b16 %v2435
    %v2599 = vunpack.c.l.b16 %v2436
    %v2600 = vunpack.c.h.b16 %v2436
    %v2601 = vunpack.c.l.b16 %v2437
    %v2602 = vunpack.c.h.b16 %v2437
    %v2603 = vunpack.c.l.b16 %v2438
    %v2604 = vunpack.c.h.b16 %v2438
    %v2605 = vunpack.c.l.b16 %v2439
    %v2606 = vunpack.c.h.b16 %v2439
    %v2607 = vunpack.c.l.b16 %v2440
    %v2608 = vunpack.c.h.b16 %v2440
    %v2609 = vunpack.c.l.b16 %v2441
    %v2610 = vunpack.c.h.b16 %v2441
    %v2611 = vunpack.c.l.b16 %v2442
    %v2612 = vunpack.c.h.b16 %v2442
    %v2613 = vunpack.c.l.b16 %v2443
    %v2614 = vunpack.c.h.b16 %v2443
    %v2615 = vunpack.c.l.b16 %v2444
    %v2616 = vunpack.c.h.b16 %v2444
    %v2617 = vunpack.c.l.b16 %v2445
    %v2618 = vunpack.c.h.b16 %v2445
    %v2619 = vunpack.c.l.b16 %v2446
    %v2620 = vunpack.c.h.b16 %v2446
    %v2621 = vunpack.c.l.b16 %v2447
    %v2622 = vunpack.c.h.b16 %v2447
    %v2623 = vunpack.c.l.b16 %v2448
    %v2624 = vunpack.c.h.b16 %v2448
    %v2625 = vunpack.c.l.b16 %v2449
    %v2626 = vunpack.c.h.b16 %v2449
    %v2627 = vunpack.c.l.b16 %v2450
    %v2628 = vunpack.c.h.b16 %v2450
    %v2629 = vunpack.c.l.b16 %v2451
    %v2630 = vunpack.c.h.b16 %v2451
    %v2631 = vunpack.c.l.b16 %v2452
    %v2632 = vunpack.c.h.b16 %v2452
    %v2633 = vunpack.c.l.b16 %v2453
    %v2634 = vunpack.c.h.b16 %v2453
    %v2635 = vunpack.c.l.b16 %v2454
    %v2636 = vunpack.c.h.b16 %v2454
    %v2637 = vunpack.c.l.b16 %v2455
    %v2638 = vunpack.c.h.b16 %v2455
    %v2639 = vunpack.c.l.b16 %v2456
    %v2640 = vunpack.c.h.b16 %v2456
    %v2641 = vunpack.c.l.b16 %v2457
    %v2642 = vunpack.c.h.b16 %v2457
    %v2643 = vunpack.c.l.b16 %v2458
    %v2644 = vunpack.c.h.b16 %v2458
    %v2645 = vunpack.c.l.b16 %v2459
    %v2646 = vunpack.c.h.b16 %v2459
    %v2647 = vunpack.c.l.b16 %v2460
    %v2648 = vunpack.c.h.b16 %v2460
    %v2649 = vunpack.c.l.b16 %v2461
    %v2650 = vunpack.c.h.b16 %v2461
    %v2651 = vunpack.c.l.b16 %v2462
    %v2652 = vunpack.c.h.b16 %v2462
    %v2653 = vunpack.c.l.b16 %v2463
    %v2654 = vunpack.c.h.b16 %v2463
    %v2655 = vunpack.c.l.b16 %v2464
    %v2656 = vunpack.c.h.b16 %v2464
    %v2657 = vunpack.c.l.b16 %v2465
    %v2658 = vunpack.c.h.b16 %v2465
    %v2659 = vunpack.c.l.b16 %v2466
    %v2660 = vunpack.c.h.b16 %v2466
    %v2661 = vunpack.c.l.b16 %v2467
    %v2662 = vunpack.c.h.b16 %v2467
    %v2663 = vunpack.c.l.b16 %v2468
    %v2664 = vunpack.c.h.b16 %v2468
    %v2665 = vunpack.c.l.b16 %v2469
    %v2666 = vunpack.c.h.b16 %v2469
    %v2667 = vunpack.c.l.b16 %v2470
    %v2668 = vunpack.c.h.b16 %v2470
    %v2669 = vunpack.c.l.b16 %v2471
    %v2670 = vunpack.c.h.b16 %v2471
    %v2671 = vunpack.c.l.b16 %v2472
    %v2672 = vunpack.c.h.b16 %v2472
    %v2673 = vunpack.c.l.b16 %v2473
    %v2674 = vunpack.c.h.b16 %v2473
    %v2675 = vunpack.c.l.b16 %v2474
    %v2676 = vunpack.c.h.b16 %v2474
    %v2677 = vunpack.c.l.b16 %v2475
    %v2678 = vunpack.c.h.b16 %v2475
    %v2679 = vpack.c.b16 %v2553, %v2551
    %v2680 = vpack.c.b16 %v2554, %v2552
    %v2681 = vpack.c.b16 %v2557, %v2555
    %v2682 = vpack.c.b16 %v2558, %v2556
    %v2683 = vpack.c.b16 %v2561, %v2559
    %v2684 = vpack.c.b16 %v2562, %v2560
    %v2685 = vpack.c.b16 %v2565, %v2563
    %v2686 = vpack.c.b16 %v2566, %v2564
    %v2687 = vpack.c.b16 %v2569, %v2567
    %v2688 = vpack.c.b16 %v2570, %v2568
    %v2689 = vpack.c.b16 %v2573, %v2571
    %v2690 = vpack.c.b16 %v2574, %v2572
    %v2691 = vpack.c.b16 %v2577, %v2575
    %v2692 = vpack.c.b16 %v2578, %v2576
    %v2693 = vpack.c.b16 %v2581, %v2579
    %v2694 = vpack.c.b16 %v2582, %v2580
    %v2695 = vpack.c.b16 %v2585, %v2583
    %v2696 = vpack.c.b16 %v2586, %v2584
    %v2697 = vpack.c.b16 %v2589, %v2587
    %v2698 = vpack.c.b16 %v2590, %v2588
    %v2699 = vpack.c.b16 %v2593, %v2591
    %v2700 = vpack.c.b16 %v2594, %v2592
    %v2701 = vpack.c.b16 %v2597, %v2595
    %v2702 = vpack.c.b16 %v2598, %v2596
    %v2703 = vpack.c.b16 %v2601, %v2599
    %v2704 = vpack.c.b16 %v2602, %v2600
    %v2705 = vpack.c.b16 %v2605, %v2603
    %v2706 = vpack.c.b16 %v2606, %v2604
    %v2707 = vpack.c.b16 %v2609, %v2607
    %v2708 = vpack.c.b16 %v2610, %v2608
    %v2709 = vpack.c.b16 %v2613, %v2611
    %v2710 = vpack.c.b16 %v2614, %v2612
    %v2711 = vpack.c.b16 %v2617, %v2615
    %v2712 = vpack.c.b16 %v2618, %v2616
    %v2713 = vpack.c.b16 %v2621, %v2619
    %v2714 = vpack.c.b16 %v2622, %v2620
    %v2715 = vpack.c.b16 %v2625, %v2623
    %v2716 = vpack.c.b16 %v2626, %v2624
    %v2717 = vpack.c.b16 %v2629, %v2627
    %v2718 = vpack.c.b16 %v2630, %v2628
    %v2719 = vpack.c.b16 %v2633, %v2631
    %v2720 = vpack.c.b16 %v2634, %v2632
    %v2721 = vpack.c.b16 %v2637, %v2635
    %v2722 = vpack.c.b16 %v2638, %v2636
    %v2723 = vpack.c.b16 %v2641, %v2639
    %v2724 = vpack.c.b16 %v2642, %v2640
    %v2725 = vpack.c.b16 %v2645, %v2643
    %v2726 = vpack.c.b16 %v2646, %v2644
    %v2727 = vpack.c.b16 %v2649, %v2647
    %v2728 = vpack.c.b16 %v2650, %v2648
    %v2729 = vpack.c.b16 %v2653, %v2651
    %v2730 = vpack.c.b16 %v2654, %v2652
    %v2731 = vpack.c.b16 %v2657, %v2655
    %v2732 = vpack.c.b16 %v2658, %v2656
    %v2733 = vpack.c.b16 %v2661, %v2659
    %v2734 = vpack.c.b16 %v2662, %v2660
    %v2735 = vpack.c.b16 %v2665, %v2663
    %v2736 = vpack.c.b16 %v2666, %v2664
    %v2737 = vpack.c.b16 %v2669, %v2667
    %v2738 = vpack.c.b16 %v2670, %v2668
    %v2739 = vpack.c.b16 %v2673, %v2671
    %v2740 = vpack.c.b16 %v2674, %v2672
    %v2741 = vpack.c.b16 %v2677, %v2675
    %v2742 = vpack.c.b16 %v2678, %v2676
    %2807 = vmatprep.subr.bf16.mxu0 %v2680
    %2808 = vmatpush1.bf16.msra.mxu0 %v2679
    %2809 = vmatprep.subr.bf16.mxu0 %v2682
    %2810 = vmatpush1.bf16.msra.mxu0 %v2681
    %2811 = vmatprep.subr.bf16.mxu0 %v2684
    %2812 = vmatpush1.bf16.msra.mxu0 %v2683
    %2813 = vmatprep.subr.bf16.mxu0 %v2686
    %2814 = vmatpush1.bf16.msra.mxu0 %v2685
    %2815 = vmatprep.subr.bf16.mxu0 %v2688
    %2816 = vmatpush1.bf16.msra.mxu0 %v2687
    %2817 = vmatprep.subr.bf16.mxu0 %v2690
    %2818 = vmatpush1.bf16.msra.mxu0 %v2689
    %2819 = vmatprep.subr.bf16.mxu0 %v2692
    %2820 = vmatpush1.bf16.msra.mxu0 %v2691
    %2821 = vmatprep.subr.bf16.mxu0 %v2694
    %2822 = vmatpush1.bf16.msra.mxu0 %v2693
    %2823 = vmatprep.subr.bf16.mxu0 %v2696
    %2824 = vmatpush1.bf16.msra.mxu0 %v2695
    %2825 = vmatprep.subr.bf16.mxu0 %v2698
    %2826 = vmatpush1.bf16.msra.mxu0 %v2697
    %2827 = vmatprep.subr.bf16.mxu0 %v2700
    %2828 = vmatpush1.bf16.msra.mxu0 %v2699
    %2829 = vmatprep.subr.bf16.mxu0 %v2702
    %2830 = vmatpush1.bf16.msra.mxu0 %v2701
    %2831 = vmatprep.subr.bf16.mxu0 %v2704
    %2832 = vmatpush1.bf16.msra.mxu0 %v2703
    %2833 = vmatprep.subr.bf16.mxu0 %v2706
    %2834 = vmatpush1.bf16.msra.mxu0 %v2705
    %2835 = vmatprep.subr.bf16.mxu0 %v2708
    %2836 = vmatpush1.bf16.msra.mxu0 %v2707
    %2837 = vmatprep.subr.bf16.mxu0 %v2710
    %2838 = vmatpush1.bf16.msra.mxu0 %v2709
    %2839 = vmatprep.mubr.bf16.mxu0 %v2409
    %2840 = vmatmul.mubr.bf16.gmra.mrb[0].mxu0 %v2408
    %v2841 = vpop.f32.mrb[0].mxu0
    %v2842 = vadd.f32 %v2480, %v2841
    %v2843 = vpop.f32.mrb[0].mxu0
    %v2844 = vadd.f32 %v2484, %v2843
    %v2845 = vpop.f32.mrb[0].mxu0
    %v2846 = vpop.f32.mrb[0].mxu0
    %2847 = vdwg.mxu0
    %2848 = vmatprep.subr.bf16.mxu0 %v2712
    %2849 = vmatpush1.bf16.msra.mxu0 %v2711
    %2850 = vmatprep.subr.bf16.mxu0 %v2714
    %2851 = vmatpush1.bf16.msra.mxu0 %v2713
    %2852 = vmatprep.subr.bf16.mxu0 %v2716
    %2853 = vmatpush1.bf16.msra.mxu0 %v2715
    %2854 = vmatprep.subr.bf16.mxu0 %v2718
    %2855 = vmatpush1.bf16.msra.mxu0 %v2717
    %2856 = vmatprep.subr.bf16.mxu0 %v2720
    %2857 = vmatpush1.bf16.msra.mxu0 %v2719
    %2858 = vmatprep.subr.bf16.mxu0 %v2722
    %2859 = vmatpush1.bf16.msra.mxu0 %v2721
    %2860 = vmatprep.subr.bf16.mxu0 %v2724
    %2861 = vmatpush1.bf16.msra.mxu0 %v2723
    %2862 = vmatprep.subr.bf16.mxu0 %v2726
    %2863 = vmatpush1.bf16.msra.mxu0 %v2725
    %2864 = vmatprep.subr.bf16.mxu0 %v2728
    %2865 = vmatpush1.bf16.msra.mxu0 %v2727
    %2866 = vmatprep.subr.bf16.mxu0 %v2730
    %2867 = vmatpush1.bf16.msra.mxu0 %v2729
    %2868 = vmatprep.subr.bf16.mxu0 %v2732
    %2869 = vmatpush1.bf16.msra.mxu0 %v2731
    %2870 = vmatprep.subr.bf16.mxu0 %v2734
    %2871 = vmatpush1.bf16.msra.mxu0 %v2733
    %2872 = vmatprep.subr.bf16.mxu0 %v2736
    %2873 = vmatpush1.bf16.msra.mxu0 %v2735
    %2874 = vmatprep.subr.bf16.mxu0 %v2738
    %2875 = vmatpush1.bf16.msra.mxu0 %v2737
    %2876 = vmatprep.subr.bf16.mxu0 %v2740
    %2877 = vmatpush1.bf16.msra.mxu0 %v2739
    %2878 = vmatprep.subr.bf16.mxu0 %v2742
    %2879 = vmatpush1.bf16.msra.mxu0 %v2741
    %2880 = vmatprep.mubr.bf16.mxu0 %v2411
    %2881 = vmatmul.mubr.bf16.gmra.mrb[0].mxu0 %v2410
    %v2882 = vpop.f32.mrb[0].mxu0
    %v2883 = vadd.f32 %v2842, %v2882
    %v2884 = vpop.f32.mrb[0].mxu0
    %v2885 = vadd.f32 %v2844, %v2884
    %v2886 = vpop.f32.mrb[0].mxu0
    %v2887 = vpop.f32.mrb[0].mxu0
    %2888 = vdwg.mxu0
    %vm2889 = vcmp.gt.f32.partialorder %v2883, 0.0
    %vm2890 = vcmp.gt.f32.partialorder %v2885, 0.0
    %v2891 = vstv %s116
    %v2892 = vmul.f32 %v2891, %v2883
    %v2893 = vmul.f32 %v2891, %v2885
    %v2894 = vsel %vm2889, %v2883, %v2892
    %v2895 = vsel %vm2890, %v2885, %v2893
    %v2896 = vpack.c.bf16 %v2894, %v2894
    %v2897 = vpack.c.bf16 %v2895, %v2895
    %v2898 = vld [vmem:[#allocation12] sm:$0xf]
    %v2899 = vld [vmem:[#allocation12 + $0x4] sm:$0xf]
    %v2900 = vld [vmem:[#allocation12 + $0x8] sm:$0xf]
    %v2901 = vld [vmem:[#allocation12 + $0xc] sm:$0xf]
    %v2902 = vld [vmem:[#allocation12 + $0x10] sm:$0xf]
    %v2903 = vld [vmem:[#allocation12 + $0x14] sm:$0xf]
    %v2904 = vld [vmem:[#allocation12 + $0x18] sm:$0xf]
    %v2905 = vld [vmem:[#allocation12 + $0x1c] sm:$0xf]
    %v2906 = vld [vmem:[#allocation12 + $0x20] sm:$0xf]
    %v2907 = vld [vmem:[#allocation12 + $0x24] sm:$0xf]
    %v2908 = vld [vmem:[#allocation12 + $0x28] sm:$0xf]
    %v2909 = vld [vmem:[#allocation12 + $0x2c] sm:$0xf]
    %v2910 = vld [vmem:[#allocation12 + $0x30] sm:$0xf]
    %v2911 = vld [vmem:[#allocation12 + $0x34] sm:$0xf]
    %v2912 = vld [vmem:[#allocation12 + $0x38] sm:$0xf]
    %v2913 = vld [vmem:[#allocation12 + $0x3c] sm:$0xf]
    %v2914 = vld [vmem:[#allocation12 + $0x40] sm:$0xf]
    %v2915 = vld [vmem:[#allocation12 + $0x44] sm:$0xf]
    %v2916 = vld [vmem:[#allocation12 + $0x48] sm:$0xf]
    %v2917 = vld [vmem:[#allocation12 + $0x4c] sm:$0xf]
    %v2918 = vld [vmem:[#allocation12 + $0x50] sm:$0xf]
    %v2919 = vld [vmem:[#allocation12 + $0x54] sm:$0xf]
    %v2920 = vld [vmem:[#allocation12 + $0x58] sm:$0xf]
    %v2921 = vld [vmem:[#allocation12 + $0x5c] sm:$0xf]
    %v2922 = vld [vmem:[#allocation12 + $0x60] sm:$0xf]
    %v2923 = vld [vmem:[#allocation12 + $0x64] sm:$0xf]
    %v2924 = vld [vmem:[#allocation12 + $0x68] sm:$0xf]
    %v2925 = vld [vmem:[#allocation12 + $0x6c] sm:$0xf]
    %v2926 = vld [vmem:[#allocation12 + $0x70] sm:$0xf]
    %v2927 = vld [vmem:[#allocation12 + $0x74] sm:$0xf]
    %v2928 = vld [vmem:[#allocation12 + $0x78] sm:$0xf]
    %v2929 = vld [vmem:[#allocation12 + $0x7c] sm:$0xf]
    %v2931 = vlaneseq
    %v2932 = vshrl.u32 %v2931, 7
    %v2933 = vsub.s32 0, %v2932
    %v2934 = vrot.slane %v120, %v2933
    %v2968 = vunpack.c.l.b16 %v2898
    %v2969 = vunpack.c.l.b16 %v2899
    %v2970 = vunpack.c.l.b16 %v2900
    %v2971 = vunpack.c.l.b16 %v2901
    %v2972 = vunpack.c.l.b16 %v2902
    %v2973 = vunpack.c.l.b16 %v2903
    %v2974 = vunpack.c.l.b16 %v2904
    %v2975 = vunpack.c.l.b16 %v2905
    %v2976 = vunpack.c.l.b16 %v2906
    %v2977 = vunpack.c.l.b16 %v2907
    %v2978 = vunpack.c.l.b16 %v2908
    %v2979 = vunpack.c.l.b16 %v2909
    %v2980 = vunpack.c.l.b16 %v2910
    %v2981 = vunpack.c.l.b16 %v2911
    %v2982 = vunpack.c.l.b16 %v2912
    %v2983 = vunpack.c.l.b16 %v2913
    %v2984 = vunpack.c.l.b16 %v2914
    %v2985 = vunpack.c.l.b16 %v2915
    %v2986 = vunpack.c.l.b16 %v2916
    %v2987 = vunpack.c.l.b16 %v2917
    %v2988 = vunpack.c.l.b16 %v2918
    %v2989 = vunpack.c.l.b16 %v2919
    %v2990 = vunpack.c.l.b16 %v2920
    %v2991 = vunpack.c.l.b16 %v2921
    %v2992 = vunpack.c.l.b16 %v2922
    %v2993 = vunpack.c.l.b16 %v2923
    %v2994 = vunpack.c.l.b16 %v2924
    %v2995 = vunpack.c.l.b16 %v2925
    %v2996 = vunpack.c.l.b16 %v2926
    %v2997 = vunpack.c.l.b16 %v2927
    %v2998 = vunpack.c.l.b16 %v2928
    %v2999 = vunpack.c.l.b16 %v2929
    %v3000 = vpack.c.b16 %v2969, %v2968
    %v3001 = vpack.c.b16 %v2971, %v2970
    %v3002 = vpack.c.b16 %v2973, %v2972
    %v3003 = vpack.c.b16 %v2975, %v2974
    %v3004 = vpack.c.b16 %v2977, %v2976
    %v3005 = vpack.c.b16 %v2979, %v2978
    %v3006 = vpack.c.b16 %v2981, %v2980
    %v3007 = vpack.c.b16 %v2983, %v2982
    %v3008 = vpack.c.b16 %v2985, %v2984
    %v3009 = vpack.c.b16 %v2987, %v2986
    %v3010 = vpack.c.b16 %v2989, %v2988
    %v3011 = vpack.c.b16 %v2991, %v2990
    %v3012 = vpack.c.b16 %v2993, %v2992
    %v3013 = vpack.c.b16 %v2995, %v2994
    %v3014 = vpack.c.b16 %v2997, %v2996
    %v3015 = vpack.c.b16 %v2999, %v2998
    %3032 = vmatprep.subr.bf16.mxu0 0
    %3033 = vmatpush1.bf16.msra.mxu0 %v3000
    %3034 = vmatprep.subr.bf16.mxu0 0
    %3035 = vmatpush1.bf16.msra.mxu0 %v3001
    %3036 = vmatprep.subr.bf16.mxu0 0
    %3037 = vmatpush1.bf16.msra.mxu0 %v3002
    %3038 = vmatprep.subr.bf16.mxu0 0
    %3039 = vmatpush1.bf16.msra.mxu0 %v3003
    %3040 = vmatprep.subr.bf16.mxu0 0
    %3041 = vmatpush1.bf16.msra.mxu0 %v3004
    %3042 = vmatprep.subr.bf16.mxu0 0
    %3043 = vmatpush1.bf16.msra.mxu0 %v3005
    %3044 = vmatprep.subr.bf16.mxu0 0
    %3045 = vmatpush1.bf16.msra.mxu0 %v3006
    %3046 = vmatprep.subr.bf16.mxu0 0
    %3047 = vmatpush1.bf16.msra.mxu0 %v3007
    %3048 = vmatprep.subr.bf16.mxu0 0
    %3049 = vmatpush1.bf16.msra.mxu0 %v3008
    %3050 = vmatprep.subr.bf16.mxu0 0
    %3051 = vmatpush1.bf16.msra.mxu0 %v3009
    %3052 = vmatprep.subr.bf16.mxu0 0
    %3053 = vmatpush1.bf16.msra.mxu0 %v3010
    %3054 = vmatprep.subr.bf16.mxu0 0
    %3055 = vmatpush1.bf16.msra.mxu0 %v3011
    %3056 = vmatprep.subr.bf16.mxu0 0
    %3057 = vmatpush1.bf16.msra.mxu0 %v3012
    %3058 = vmatprep.subr.bf16.mxu0 0
    %3059 = vmatpush1.bf16.msra.mxu0 %v3013
    %3060 = vmatprep.subr.bf16.mxu0 0
    %3061 = vmatpush1.bf16.msra.mxu0 %v3014
    %3062 = vmatprep.subr.bf16.mxu0 0
    %3063 = vmatpush1.bf16.msra.mxu0 %v3015
    %3064 = vmatprep.mubr.bf16.mxu0 %v2897
    %3065 = vmatmul.mubr.bf16.gmra.mrb[0].mxu0 %v2896
    %v3066 = vpop.f32.mrb[0].mxu0
    %v3067 = vadd.f32 %v2934, %v3066
    %v3068 = vpop.f32.mrb[0].mxu0
    %v3069 = vpop.f32.mrb[0].mxu0
    %v3070 = vpop.f32.mrb[0].mxu0
    %3071 = vdwg.mxu0
    %3072 = vst [vmem:[#allocation13] sm:$0xff] %v3067
    // Predicated region
    $region66: #{tpu_custom_call.1} parent=1 // pred_check
      _
    $region67: #{tpu_custom_call.1} parent=1 // pred_check_branch
      %3074 = sbr.rel (0) target = $region69
    $region68: #{tpu_custom_call.1} parent=1 // pred_region
      %s3076 = ssub.s32 128, 128
      %3077 = vsyncadd [#allocation4], %s3076
      %s3079 = sshll.u32 [#allocation13], 4
      %s3080 = int_to_ptr.vmem [resolvable:$true] %s3079
      %3082 = dma.vmem_to_hbm [thread:$0]  %s3080, 128, %s10, [#allocation4]
    $region69: #{tpu_custom_call.1} parent=1 // pred_fallthru
      _
    // Predicated region
    $region70: #{tpu_custom_call.1} parent=1 // pred_check
      _
    $region71: #{tpu_custom_call.1} parent=1 // pred_check_branch
      %3084 = sbr.rel (0) target = $region73
    $region72: #{tpu_custom_call.1} parent=1 // pred_region
      %3085 = dma.done [#allocation4], 128
    $region73: #{tpu_custom_call.1} parent=1 // pred_fallthru
      _
    %3086 = vsyncpa [#allocation3], 1
    %3087 = vsyncpa [#allocation8], 1
    %3088 = vsyncpa [#allocation11], 1
    %3089 = vsyncpa [#allocation4], 1
    %3090 = vsyncpa [#allocation5], 1

</llo_original>
